<compile_context>
chip_gen: v6e
topology: v6e:2x2x1
jax: 0.10.0
libtpu: 0.0.40
codegen_flags: <defaults>
</compile_context>

<pallas_src>
import functools

import jax
import jax.numpy as jnp
from jax import lax
from jax.experimental import pallas as pl
from jax.experimental.pallas import tpu as pltpu

# ----------------------------- config (small synthetic BERT) -----------------
VOCAB = 128
HIDDEN = 32
N_LAYERS = 2
N_HEADS = 4
HEAD_DIM = HIDDEN // N_HEADS
INTERMEDIATE = 64
MAX_POS = 16
LN_EPS = 1e-12

# Row layout of the packed per-layer "small" parameter slab (L, 6, H):
#   0: attention output bias (bo)    1: ln1 gamma   2: ln1 beta
#   3: FFN output bias (b2)          4: ln2 gamma   5: ln2 beta


def _layernorm(x, gamma, beta):
    mean = jnp.mean(x, axis=-1, keepdims=True)
    var = jnp.mean((x - mean) ** 2, axis=-1, keepdims=True)
    return (x - mean) * lax.rsqrt(var + LN_EPS) * gamma + beta


# ----------------------------- fused Pallas kernel ----------------------------
def bert_encoder_kernel(ids_ref, kb_ref, we_ref, et_ref, wqkv_ref, bqkv_ref,
                        wo_ref, w1_ref, b1_ref, w2_ref, small_ref, out_ref, *, S):
    """One sequence per grid step: embeddings + N_LAYERS encoder layers + CLS."""
    f32 = jnp.float32
    NH = N_HEADS

    # ---- embeddings: one-hot gather (MXU) + precomputed (pos+tok) table + LN
    ids = ids_ref[...]                                                # (S, 1) int32
    onehot = (lax.broadcasted_iota(jnp.int32, (S, VOCAB), 1) == ids).astype(f32)
    x = jnp.dot(onehot, we_ref[...], preferred_element_type=f32)      # (S, H)
    x = x + et_ref[0:S, :]                                            # pos + tok emb
    x = _layernorm(x, et_ref[S:S + 1, :], et_ref[S + 1:S + 2, :])     # emb LN

    kb = kb_ref[...]                                                  # (1, 1, S) additive key bias

    # ---- encoder layers (weights stacked on a leading N_LAYERS axis)
    for li in range(N_LAYERS):
        last = li == N_LAYERS - 1
        sp = small_ref[li]                                            # (6, H)

        # Fused Q/K/V: one batched contraction over g = (qkv, head) = 3*NH.
        # NOTE: 1/sqrt(HEAD_DIM) is already folded into the Wq slice.
        xb = jnp.broadcast_to(x, (3 * NH, S, HIDDEN))                 # (3NH, S, H)
        qkv = jnp.einsum('gsh,ghd->gsd', xb, wqkv_ref[li],
                         preferred_element_type=f32) + bqkv_ref[li]   # (3NH, S, DH)
        q3 = qkv[0:NH]                                                # (NH, S, DH)
        k3 = qkv[NH:2 * NH]
        v3 = qkv[2 * NH:3 * NH]
        if last:
            q3 = q3[:, 0:1, :]        # only the CLS query row feeds the output

        s = jnp.einsum('nqd,nkd->nqk', q3, k3,
                       preferred_element_type=f32) + kb               # (NH, q, S)
        s = s - jnp.max(s, axis=-1, keepdims=True)
        p = jnp.exp(s)
        p = p * pl.reciprocal(jnp.sum(p, axis=-1, keepdims=True), approx=True)
        ctx = jnp.einsum('nqk,nkd->nqd', p, v3,
                         preferred_element_type=f32)                  # (NH, q, DH)
        attn = jnp.sum(jnp.einsum('nqd,ndh->nqh', ctx, wo_ref[li],
                                  preferred_element_type=f32), axis=0) + sp[0:1]

        xq = x[0:1, :] if last else x
        h1 = _layernorm(xq + attn, sp[1:2], sp[2:3])

        ff = jnp.dot(h1, w1_ref[li], preferred_element_type=f32) + b1_ref[li]
        # TODO(synk): HF BERT uses exact (erf) GELU; tanh approximation kept for
        # robust Mosaic lowering (matches the in-file reference).
        ff = jax.nn.gelu(ff, approximate=True)
        ff = jnp.dot(ff, w2_ref[li], preferred_element_type=f32) + sp[3:4]

        x = _layernorm(h1 + ff, sp[4:5], sp[5:6])

    # ---- CLS token (row 0) for this sequence.
    out_ref[...] = x[0:1, :].reshape(1, 1, HIDDEN)


# ----------------------------- pallas_call wrapper ----------------------------
def _const_spec(shape):
    nd = len(shape)
    return pl.BlockSpec(shape, lambda b, _nd=nd: (0,) * _nd)


def bioclinicalbert_ft_forward(input_ids, attention_mask, params):
    """Returns the CLS token embedding, shape (B, HIDDEN)."""
    B, S = input_ids.shape

    ids2d = input_ids.astype(jnp.int32).reshape(B * S, 1)
    # HF-style additive key-padding bias, precomputed outside the kernel.
    kbias = ((1.0 - attention_mask.astype(jnp.float32)) * (-1e9)).reshape(B, 1, S)
    # pos + token-type embeddings (rows 0..S-1) and embedding-LN gamma/beta
    # (rows S, S+1) packed into one lane-dense table.
    embtab = jnp.concatenate(
        [params["pos_emb"][:S] + params["tok_emb"],
         params["emb_ln_g"], params["emb_ln_b"]], axis=0)             # (S+2, H)

    ordered = [
        ids2d, kbias, params["word_emb"], embtab,
        params["wqkv"], params["bqkv"], params["wo"],
        params["w1"], params["b1"], params["w2"], params["small"],
    ]

    in_specs = [
        pl.BlockSpec((S, 1), lambda b: (b, 0)),          # ids for sequence b
        pl.BlockSpec((1, 1, S), lambda b: (b, 0, 0)),    # key bias for sequence b
    ] + [_const_spec(a.shape) for a in ordered[2:]]      # weights: VMEM-resident

    kernel = functools.partial(bert_encoder_kernel, S=S)
    out = pl.pallas_call(
        kernel,
        out_shape=jax.ShapeDtypeStruct((B, 1, HIDDEN), jnp.float32),
        grid=(B,),                                       # one sequence per step
        in_specs=in_specs,
        out_specs=pl.BlockSpec((1, 1, HIDDEN), lambda b: (b, 0, 0)),
        compiler_params=pltpu.CompilerParams(dimension_semantics=("parallel",)),
    )(*ordered)
    return out.reshape(B, HIDDEN)


# ----------------------------- parameter init (deterministic) -----------------
def init_params(key):
    def nrm(k, shape):
        return jax.random.normal(k, shape, jnp.float32) * 0.02

    L, H, NH, DH, I = N_LAYERS, HIDDEN, N_HEADS, HEAD_DIM, INTERMEDIATE
    scale = 1.0 / (DH ** 0.5)
    keys = jax.random.split(key, 4 + L)

    def split_heads(w):                 # (H, H) -> (NH, H, DH)
        return w.reshape(H, NH, DH).transpose(1, 0, 2)

    wqkv_l, wo_l, w1_l, w2_l = [], [], [], []
    for li in range(L):
        ks = jax.random.split(keys[4 + li], 6)
        wq = nrm(ks[0], (H, H)) * scale          # attention scale folded into Wq
        wk = nrm(ks[1], (H, H))
        wv = nrm(ks[2], (H, H))
        wqkv_l.append(jnp.concatenate(
            [split_heads(wq), split_heads(wk), split_heads(wv)], axis=0))  # (3NH,H,DH)
        wo_l.append(nrm(ks[3], (H, H)).reshape(NH, DH, H))
        w1_l.append(nrm(ks[4], (H, I)))
        w2_l.append(nrm(ks[5], (I, H)))

    ones_h, zeros_h = jnp.ones((H,), jnp.float32), jnp.zeros((H,), jnp.float32)
    small = jnp.stack(
        [jnp.stack([zeros_h, ones_h, zeros_h, zeros_h, ones_h, zeros_h])
         for _ in range(L)])                                           # (L, 6, H)

    return {
        "word_emb": nrm(keys[0], (VOCAB, H)),
        "pos_emb": nrm(keys[1], (MAX_POS, H)),
        "tok_emb": nrm(keys[2], (1, H)),             # token_type_ids assumed all zero
        "emb_ln_g": jnp.ones((1, H), jnp.float32),
        "emb_ln_b": jnp.zeros((1, H), jnp.float32),
        "wqkv": jnp.stack(wqkv_l),                                     # (L, 3NH, H, DH)
        "bqkv": jnp.zeros((L, 3 * NH, 1, DH), jnp.float32),            # bq*scale == 0
        "wo": jnp.stack(wo_l),                                         # (L, NH, DH, H)
        "w1": jnp.stack(w1_l),                                         # (L, H, I)
        "b1": jnp.zeros((L, 1, I), jnp.float32),
        "w2": jnp.stack(w2_l),                                         # (L, I, H)
        "small": small,                                                # (L, 6, H)
    }


# ----------------------------- pure-JAX reference (for sanity check) ----------
def reference_forward(input_ids, attention_mask, params):
    B, S = input_ids.shape
    hp = lax.Precision.HIGHEST
    NH = N_HEADS
    x = jnp.take(params["word_emb"], input_ids, axis=0)                # (B,S,H)
    x = x + params["pos_emb"][:S][None] + params["tok_emb"][None]
    x = _layernorm(x, params["emb_ln_g"], params["emb_ln_b"])
    mask_bias = (1.0 - attention_mask.astype(jnp.float32))[:, None, None, :] * (-1e9)
    for li in range(N_LAYERS):
        wqkv, bqkv = params["wqkv"][li], params["bqkv"][li]
        sp = params["small"][li]
        q = jnp.einsum('bsh,nhd->bnsd', x, wqkv[0:NH], precision=hp) + bqkv[0:NH][None]
        k = jnp.einsum('bsh,nhd->bnsd', x, wqkv[NH:2 * NH], precision=hp) + bqkv[NH:2 * NH][None]
        v = jnp.einsum('bsh,nhd->bnsd', x, wqkv[2 * NH:], precision=hp) + bqkv[2 * NH:][None]
        s = jnp.einsum('bnqd,bnkd->bnqk', q, k, precision=hp) + mask_bias
        p = jax.nn.softmax(s, axis=-1)
        ctx = jnp.einsum('bnqk,bnkd->bnqd', p, v, precision=hp)
        attn = jnp.einsum('bnqd,ndh->bqh', ctx, params["wo"][li], precision=hp) + sp[0]
        h1 = _layernorm(x + attn, sp[1], sp[2])
        ff = jnp.dot(h1, params["w1"][li], precision=hp) + params["b1"][li][0]
        ff = jax.nn.gelu(ff, approximate=True)
        ff = jnp.dot(ff, params["w2"][li], precision=hp) + sp[3]
        x = _layernorm(h1 + ff, sp[4], sp[5])
    return x[:, 0, :]


# ----------------------------- main -------------------------------------------
if __name__ == "__main__":
    B, S = 2, 8
    key = jax.random.PRNGKey(0)
    k_ids, k_params = jax.random.split(key)

    input_ids = jax.random.randint(k_ids, (B, S), 0, VOCAB, dtype=jnp.int32)
    attention_mask = jnp.array(
        [[1, 1, 1, 1, 1, 1, 1, 1],
         [1, 1, 1, 1, 1, 1, 0, 0]], dtype=jnp.float32)

    params = init_params(k_params)

    cls = bioclinicalbert_ft_forward(input_ids, attention_mask, params)
    cls = jax.block_until_ready(cls)

    assert cls.shape == (B, HIDDEN) and cls.dtype == jnp.float32
    ref = reference_forward(input_ids, attention_mask, params)
    assert bool(jnp.all(jnp.isfinite(cls)))
    assert bool(jnp.allclose(cls, ref, atol=2e-2, rtol=2e-2))
    print("KERNEL_OK")
</pallas_src>

<mosaic_0001>
module attributes {stable_mosaic.version = 11 : i64} {
  func.func @bert_encoder_kernel(%arg0: i32, %arg1: memref<8x1xi32, #tpu.memory_space<vmem>>, %arg2: memref<1x1x8xf32, #tpu.memory_space<vmem>>, %arg3: memref<128x32xf32, #tpu.memory_space<vmem>>, %arg4: memref<10x32xf32, #tpu.memory_space<vmem>>, %arg5: memref<2x12x32x8xf32, #tpu.memory_space<vmem>>, %arg6: memref<2x12x1x8xf32, #tpu.memory_space<vmem>>, %arg7: memref<2x4x8x32xf32, #tpu.memory_space<vmem>>, %arg8: memref<2x32x64xf32, #tpu.memory_space<vmem>>, %arg9: memref<2x1x64xf32, #tpu.memory_space<vmem>>, %arg10: memref<2x64x32xf32, #tpu.memory_space<vmem>>, %arg11: memref<2x6x32xf32, #tpu.memory_space<vmem>>, %arg12: memref<1x1x32xf32, #tpu.memory_space<vmem>>) attributes {dimension_semantics = [#tpu.dimension_semantics<parallel>], iteration_bounds = array<i64: 2>, scalar_prefetch = 0 : i64, scratch_operands = 0 : i64, tpu.core_type = #tpu.core_type<tc>, window_params = [{transform_indices = @transform_0, window_bounds = array<i64: 8, 1>}, {transform_indices = @transform_1, window_bounds = array<i64: 1, 1, 8>}, {pipeline_mode = #tpu.pipeline_mode<synchronous>, transform_indices = @transform_2, window_bounds = array<i64: 128, 32>}, {pipeline_mode = #tpu.pipeline_mode<synchronous>, transform_indices = @transform_3, window_bounds = array<i64: 10, 32>}, {pipeline_mode = #tpu.pipeline_mode<synchronous>, transform_indices = @transform_4, window_bounds = array<i64: 2, 12, 32, 8>}, {pipeline_mode = #tpu.pipeline_mode<synchronous>, transform_indices = @transform_5, window_bounds = array<i64: 2, 12, 1, 8>}, {pipeline_mode = #tpu.pipeline_mode<synchronous>, transform_indices = @transform_6, window_bounds = array<i64: 2, 4, 8, 32>}, {pipeline_mode = #tpu.pipeline_mode<synchronous>, transform_indices = @transform_7, window_bounds = array<i64: 2, 32, 64>}, {pipeline_mode = #tpu.pipeline_mode<synchronous>, transform_indices = @transform_8, window_bounds = array<i64: 2, 1, 64>}, {pipeline_mode = #tpu.pipeline_mode<synchronous>, transform_indices = @transform_9, window_bounds = array<i64: 2, 64, 32>}, {pipeline_mode = #tpu.pipeline_mode<synchronous>, transform_indices = @transform_10, window_bounds = array<i64: 2, 6, 32>}, {transform_indices = @transform_11, window_bounds = array<i64: 1, 1, 32>}]} {
    %c0 = arith.constant 0 : index
    %c0_0 = arith.constant 0 : index
    %0 = vector.load %arg1[%c0, %c0_0] : memref<8x1xi32, #tpu.memory_space<vmem>>, vector<8x1xi32>
    %1 = tpu.iota {dimensions = array<i32: 1>} : vector<8x128xi32>
    %2 = vector.broadcast %0 : vector<8x1xi32> to vector<8x128xi32>
    %3 = arith.cmpi eq, %1, %2 : vector<8x128xi32>
    %4 = arith.extui %3 : vector<8x128xi1> to vector<8x128xi32>
    %5 = arith.sitofp %4 : vector<8x128xi32> to vector<8x128xf32>
    %c0_1 = arith.constant 0 : index
    %c0_2 = arith.constant 0 : index
    %6 = vector.load %arg3[%c0_1, %c0_2] : memref<128x32xf32, #tpu.memory_space<vmem>>, vector<128x32xf32>
    %cst = arith.constant dense<0.000000e+00> : vector<8x32xf32>
    %7 = tpu.matmul %5, %6, %cst {dimension_numbers = #tpu.dot_dimension_numbers<[1], [0], [0], [1], [0, 0, 1, 1], [], []>} : vector<8x128xf32>, vector<128x32xf32>, vector<8x32xf32> -> vector<8x32xf32>
    %c0_3 = arith.constant 0 : index
    %c0_4 = arith.constant 0 : index
    %8 = vector.load %arg4[%c0_3, %c0_4] : memref<10x32xf32, #tpu.memory_space<vmem>>, vector<8x32xf32>
    %9 = arith.addf %7, %8 : vector<8x32xf32>
    %c8 = arith.constant 8 : index
    %c0_5 = arith.constant 0 : index
    %10 = vector.load %arg4[%c8, %c0_5] : memref<10x32xf32, #tpu.memory_space<vmem>>, vector<1x32xf32>
    %c9 = arith.constant 9 : index
    %c0_6 = arith.constant 0 : index
    %11 = vector.load %arg4[%c9, %c0_6] : memref<10x32xf32, #tpu.memory_space<vmem>>, vector<1x32xf32>
    %cst_7 = arith.constant dense<0.000000e+00> : vector<8xf32>
    %12 = vector.multi_reduction <add>, %9, %cst_7 [1] : vector<8x32xf32> to vector<8xf32>
    %13 = vector.shape_cast %12 : vector<8xf32> to vector<8x1xf32>
    %cst_8 = arith.constant 3.200000e+01 : f32
    %14 = vector.broadcast %cst_8 : f32 to vector<8x1xf32>
    %15 = arith.divf %13, %14 : vector<8x1xf32>
    %16 = vector.broadcast %15 : vector<8x1xf32> to vector<8x32xf32>
    %17 = arith.subf %9, %16 : vector<8x32xf32>
    %18 = arith.mulf %17, %17 : vector<8x32xf32>
    %cst_9 = arith.constant dense<0.000000e+00> : vector<8xf32>
    %19 = vector.multi_reduction <add>, %18, %cst_9 [1] : vector<8x32xf32> to vector<8xf32>
    %20 = vector.shape_cast %19 : vector<8xf32> to vector<8x1xf32>
    %cst_10 = arith.constant 3.200000e+01 : f32
    %21 = vector.broadcast %cst_10 : f32 to vector<8x1xf32>
    %22 = arith.divf %20, %21 : vector<8x1xf32>
    %23 = vector.broadcast %15 : vector<8x1xf32> to vector<8x32xf32>
    %24 = arith.subf %9, %23 : vector<8x32xf32>
    %cst_11 = arith.constant 9.99999996E-13 : f32
    %25 = vector.broadcast %cst_11 : f32 to vector<8x1xf32>
    %26 = arith.addf %22, %25 : vector<8x1xf32>
    %27 = math.rsqrt %26 : vector<8x1xf32>
    %28 = vector.broadcast %27 : vector<8x1xf32> to vector<8x32xf32>
    %29 = arith.mulf %24, %28 : vector<8x32xf32>
    %30 = vector.broadcast %10 : vector<1x32xf32> to vector<8x32xf32>
    %31 = arith.mulf %29, %30 : vector<8x32xf32>
    %32 = vector.broadcast %11 : vector<1x32xf32> to vector<8x32xf32>
    %33 = arith.addf %31, %32 : vector<8x32xf32>
    %c0_12 = arith.constant 0 : index
    %c0_13 = arith.constant 0 : index
    %c0_14 = arith.constant 0 : index
    %34 = vector.load %arg2[%c0_12, %c0_13, %c0_14] : memref<1x1x8xf32, #tpu.memory_space<vmem>>, vector<1x1x8xf32>
    %c0_15 = arith.constant 0 : index
    %c0_16 = arith.constant 0 : index
    %c0_17 = arith.constant 0 : index
    %35 = vector.load %arg11[%c0_15, %c0_16, %c0_17] : memref<2x6x32xf32, #tpu.memory_space<vmem>>, vector<1x6x32xf32>
    %36 = vector.shape_cast %35 : vector<1x6x32xf32> to vector<6x32xf32>
    %37 = vector.shape_cast %33 : vector<8x32xf32> to vector<1x8x32xf32>
    %38 = vector.broadcast %37 : vector<1x8x32xf32> to vector<12x8x32xf32>
    %c0_18 = arith.constant 0 : index
    %c0_19 = arith.constant 0 : index
    %c0_20 = arith.constant 0 : index
    %c0_21 = arith.constant 0 : index
    %39 = vector.load %arg5[%c0_18, %c0_19, %c0_20, %c0_21] : memref<2x12x32x8xf32, #tpu.memory_space<vmem>>, vector<1x12x32x8xf32>
    %40 = vector.shape_cast %39 : vector<1x12x32x8xf32> to vector<12x32x8xf32>
    "tpu.trace_start"() <{level = 10 : i32, message = "gsh,ghd->gsd"}> : () -> ()
    %cst_22 = arith.constant dense<0.000000e+00> : vector<12x8x8xf32>
    %41 = tpu.matmul %38, %40, %cst_22 {dimension_numbers = #tpu.dot_dimension_numbers<[2], [1], [1], [2], [0, 0, 0, 1, 1, 2], [0], [0]>} : vector<12x8x32xf32>, vector<12x32x8xf32>, vector<12x8x8xf32> -> vector<12x8x8xf32>
    "tpu.trace_stop"() : () -> ()
    %c0_23 = arith.constant 0 : index
    %c0_24 = arith.constant 0 : index
    %c0_25 = arith.constant 0 : index
    %c0_26 = arith.constant 0 : index
    %42 = vector.load %arg6[%c0_23, %c0_24, %c0_25, %c0_26] : memref<2x12x1x8xf32, #tpu.memory_space<vmem>>, vector<1x12x1x8xf32>
    %43 = vector.shape_cast %42 : vector<1x12x1x8xf32> to vector<12x1x8xf32>
    %44 = vector.broadcast %43 : vector<12x1x8xf32> to vector<12x8x8xf32>
    %45 = arith.addf %41, %44 : vector<12x8x8xf32>
    %46 = vector.extract_strided_slice %45 {offsets = [0, 0, 0], sizes = [4, 8, 8], strides = [1, 1, 1]} : vector<12x8x8xf32> to vector<4x8x8xf32>
    %47 = vector.extract_strided_slice %45 {offsets = [4, 0, 0], sizes = [4, 8, 8], strides = [1, 1, 1]} : vector<12x8x8xf32> to vector<4x8x8xf32>
    %48 = vector.extract_strided_slice %45 {offsets = [8, 0, 0], sizes = [4, 8, 8], strides = [1, 1, 1]} : vector<12x8x8xf32> to vector<4x8x8xf32>
    "tpu.trace_start"() <{level = 10 : i32, message = "nqd,nkd->nqk"}> : () -> ()
    %cst_27 = arith.constant dense<0.000000e+00> : vector<4x8x8xf32>
    %49 = tpu.matmul %46, %47, %cst_27 {dimension_numbers = #tpu.dot_dimension_numbers<[2], [2], [1], [1], [0, 0, 0, 1, 1, 1], [0], [0]>} : vector<4x8x8xf32>, vector<4x8x8xf32>, vector<4x8x8xf32> -> vector<4x8x8xf32>
    "tpu.trace_stop"() : () -> ()
    %50 = vector.broadcast %34 : vector<1x1x8xf32> to vector<4x8x8xf32>
    %51 = arith.addf %49, %50 : vector<4x8x8xf32>
    %cst_28 = arith.constant dense<0xFF800000> : vector<4x8xf32>
    %52 = vector.multi_reduction <maximumf>, %51, %cst_28 [2] : vector<4x8x8xf32> to vector<4x8xf32>
    %53 = vector.shape_cast %52 : vector<4x8xf32> to vector<4x8x1xf32>
    %54 = vector.broadcast %53 : vector<4x8x1xf32> to vector<4x8x8xf32>
    %55 = arith.subf %51, %54 : vector<4x8x8xf32>
    %56 = math.exp %55 : vector<4x8x8xf32>
    %cst_29 = arith.constant dense<0.000000e+00> : vector<4x8xf32>
    %57 = vector.multi_reduction <add>, %56, %cst_29 [2] : vector<4x8x8xf32> to vector<4x8xf32>
    %58 = vector.shape_cast %57 : vector<4x8xf32> to vector<4x8x1xf32>
    %59 = tpu.reciprocal %58 {approx = true} : vector<4x8x1xf32> -> vector<4x8x1xf32>
    %60 = vector.broadcast %59 : vector<4x8x1xf32> to vector<4x8x8xf32>
    %61 = arith.mulf %56, %60 : vector<4x8x8xf32>
    "tpu.trace_start"() <{level = 10 : i32, message = "nqk,nkd->nqd"}> : () -> ()
    %cst_30 = arith.constant dense<0.000000e+00> : vector<4x8x8xf32>
    %62 = tpu.matmul %61, %48, %cst_30 {dimension_numbers = #tpu.dot_dimension_numbers<[2], [1], [1], [2], [0, 0, 0, 1, 1, 2], [0], [0]>} : vector<4x8x8xf32>, vector<4x8x8xf32>, vector<4x8x8xf32> -> vector<4x8x8xf32>
    "tpu.trace_stop"() : () -> ()
    %c0_31 = arith.constant 0 : index
    %c0_32 = arith.constant 0 : index
    %c0_33 = arith.constant 0 : index
    %c0_34 = arith.constant 0 : index
    %63 = vector.load %arg7[%c0_31, %c0_32, %c0_33, %c0_34] : memref<2x4x8x32xf32, #tpu.memory_space<vmem>>, vector<1x4x8x32xf32>
    %64 = vector.shape_cast %63 : vector<1x4x8x32xf32> to vector<4x8x32xf32>
    "tpu.trace_start"() <{level = 10 : i32, message = "nqd,ndh->nqh"}> : () -> ()
    %cst_35 = arith.constant dense<0.000000e+00> : vector<4x8x32xf32>
    %65 = tpu.matmul %62, %64, %cst_35 {dimension_numbers = #tpu.dot_dimension_numbers<[2], [1], [1], [2], [0, 0, 0, 1, 1, 2], [0], [0]>} : vector<4x8x8xf32>, vector<4x8x32xf32>, vector<4x8x32xf32> -> vector<4x8x32xf32>
    "tpu.trace_stop"() : () -> ()
    %cst_36 = arith.constant dense<0.000000e+00> : vector<8x32xf32>
    %66 = vector.multi_reduction <add>, %65, %cst_36 [0] : vector<4x8x32xf32> to vector<8x32xf32>
    %67 = vector.extract_strided_slice %36 {offsets = [0, 0], sizes = [1, 32], strides = [1, 1]} : vector<6x32xf32> to vector<1x32xf32>
    %68 = vector.broadcast %67 : vector<1x32xf32> to vector<8x32xf32>
    %69 = arith.addf %66, %68 : vector<8x32xf32>
    %70 = arith.addf %33, %69 : vector<8x32xf32>
    %71 = vector.extract_strided_slice %36 {offsets = [1, 0], sizes = [1, 32], strides = [1, 1]} : vector<6x32xf32> to vector<1x32xf32>
    %72 = vector.extract_strided_slice %36 {offsets = [2, 0], sizes = [1, 32], strides = [1, 1]} : vector<6x32xf32> to vector<1x32xf32>
    %cst_37 = arith.constant dense<0.000000e+00> : vector<8xf32>
    %73 = vector.multi_reduction <add>, %70, %cst_37 [1] : vector<8x32xf32> to vector<8xf32>
    %74 = vector.shape_cast %73 : vector<8xf32> to vector<8x1xf32>
    %cst_38 = arith.constant 3.200000e+01 : f32
    %75 = vector.broadcast %cst_38 : f32 to vector<8x1xf32>
    %76 = arith.divf %74, %75 : vector<8x1xf32>
    %77 = vector.broadcast %76 : vector<8x1xf32> to vector<8x32xf32>
    %78 = arith.subf %70, %77 : vector<8x32xf32>
    %79 = arith.mulf %78, %78 : vector<8x32xf32>
    %cst_39 = arith.constant dense<0.000000e+00> : vector<8xf32>
    %80 = vector.multi_reduction <add>, %79, %cst_39 [1] : vector<8x32xf32> to vector<8xf32>
    %81 = vector.shape_cast %80 : vector<8xf32> to vector<8x1xf32>
    %cst_40 = arith.constant 3.200000e+01 : f32
    %82 = vector.broadcast %cst_40 : f32 to vector<8x1xf32>
    %83 = arith.divf %81, %82 : vector<8x1xf32>
    %84 = vector.broadcast %76 : vector<8x1xf32> to vector<8x32xf32>
    %85 = arith.subf %70, %84 : vector<8x32xf32>
    %cst_41 = arith.constant 9.99999996E-13 : f32
    %86 = vector.broadcast %cst_41 : f32 to vector<8x1xf32>
    %87 = arith.addf %83, %86 : vector<8x1xf32>
    %88 = math.rsqrt %87 : vector<8x1xf32>
    %89 = vector.broadcast %88 : vector<8x1xf32> to vector<8x32xf32>
    %90 = arith.mulf %85, %89 : vector<8x32xf32>
    %91 = vector.broadcast %71 : vector<1x32xf32> to vector<8x32xf32>
    %92 = arith.mulf %90, %91 : vector<8x32xf32>
    %93 = vector.broadcast %72 : vector<1x32xf32> to vector<8x32xf32>
    %94 = arith.addf %92, %93 : vector<8x32xf32>
    %c0_42 = arith.constant 0 : index
    %c0_43 = arith.constant 0 : index
    %c0_44 = arith.constant 0 : index
    %95 = vector.load %arg8[%c0_42, %c0_43, %c0_44] : memref<2x32x64xf32, #tpu.memory_space<vmem>>, vector<1x32x64xf32>
    %96 = vector.shape_cast %95 : vector<1x32x64xf32> to vector<32x64xf32>
    %cst_45 = arith.constant dense<0.000000e+00> : vector<8x64xf32>
    %97 = tpu.matmul %94, %96, %cst_45 {dimension_numbers = #tpu.dot_dimension_numbers<[1], [0], [0], [1], [0, 0, 1, 1], [], []>} : vector<8x32xf32>, vector<32x64xf32>, vector<8x64xf32> -> vector<8x64xf32>
    %c0_46 = arith.constant 0 : index
    %c0_47 = arith.constant 0 : index
    %c0_48 = arith.constant 0 : index
    %98 = vector.load %arg9[%c0_46, %c0_47, %c0_48] : memref<2x1x64xf32, #tpu.memory_space<vmem>>, vector<1x1x64xf32>
    %99 = vector.shape_cast %98 : vector<1x1x64xf32> to vector<1x64xf32>
    %100 = vector.broadcast %99 : vector<1x64xf32> to vector<8x64xf32>
    %101 = arith.addf %97, %100 : vector<8x64xf32>
    %102 = arith.mulf %101, %101 : vector<8x64xf32>
    %103 = arith.mulf %101, %102 : vector<8x64xf32>
    %cst_49 = arith.constant 4.471500e-02 : f32
    %104 = vector.broadcast %cst_49 : f32 to vector<8x64xf32>
    %105 = arith.mulf %104, %103 : vector<8x64xf32>
    %106 = arith.addf %101, %105 : vector<8x64xf32>
    %cst_50 = arith.constant 0.797884583 : f32
    %107 = vector.broadcast %cst_50 : f32 to vector<8x64xf32>
    %108 = arith.mulf %107, %106 : vector<8x64xf32>
    %109 = math.tanh %108 : vector<8x64xf32>
    %cst_51 = arith.constant 1.000000e+00 : f32
    %110 = vector.broadcast %cst_51 : f32 to vector<8x64xf32>
    %111 = arith.addf %110, %109 : vector<8x64xf32>
    %cst_52 = arith.constant 5.000000e-01 : f32
    %112 = vector.broadcast %cst_52 : f32 to vector<8x64xf32>
    %113 = arith.mulf %112, %111 : vector<8x64xf32>
    %114 = arith.mulf %101, %113 : vector<8x64xf32>
    %c0_53 = arith.constant 0 : index
    %c0_54 = arith.constant 0 : index
    %c0_55 = arith.constant 0 : index
    %115 = vector.load %arg10[%c0_53, %c0_54, %c0_55] : memref<2x64x32xf32, #tpu.memory_space<vmem>>, vector<1x64x32xf32>
    %116 = vector.shape_cast %115 : vector<1x64x32xf32> to vector<64x32xf32>
    %cst_56 = arith.constant dense<0.000000e+00> : vector<8x32xf32>
    %117 = tpu.matmul %114, %116, %cst_56 {dimension_numbers = #tpu.dot_dimension_numbers<[1], [0], [0], [1], [0, 0, 1, 1], [], []>} : vector<8x64xf32>, vector<64x32xf32>, vector<8x32xf32> -> vector<8x32xf32>
    %118 = vector.extract_strided_slice %36 {offsets = [3, 0], sizes = [1, 32], strides = [1, 1]} : vector<6x32xf32> to vector<1x32xf32>
    %119 = vector.broadcast %118 : vector<1x32xf32> to vector<8x32xf32>
    %120 = arith.addf %117, %119 : vector<8x32xf32>
    %121 = arith.addf %94, %120 : vector<8x32xf32>
    %122 = vector.extract_strided_slice %36 {offsets = [4, 0], sizes = [1, 32], strides = [1, 1]} : vector<6x32xf32> to vector<1x32xf32>
    %123 = vector.extract_strided_slice %36 {offsets = [5, 0], sizes = [1, 32], strides = [1, 1]} : vector<6x32xf32> to vector<1x32xf32>
    %cst_57 = arith.constant dense<0.000000e+00> : vector<8xf32>
    %124 = vector.multi_reduction <add>, %121, %cst_57 [1] : vector<8x32xf32> to vector<8xf32>
    %125 = vector.shape_cast %124 : vector<8xf32> to vector<8x1xf32>
    %cst_58 = arith.constant 3.200000e+01 : f32
    %126 = vector.broadcast %cst_58 : f32 to vector<8x1xf32>
    %127 = arith.divf %125, %126 : vector<8x1xf32>
    %128 = vector.broadcast %127 : vector<8x1xf32> to vector<8x32xf32>
    %129 = arith.subf %121, %128 : vector<8x32xf32>
    %130 = arith.mulf %129, %129 : vector<8x32xf32>
    %cst_59 = arith.constant dense<0.000000e+00> : vector<8xf32>
    %131 = vector.multi_reduction <add>, %130, %cst_59 [1] : vector<8x32xf32> to vector<8xf32>
    %132 = vector.shape_cast %131 : vector<8xf32> to vector<8x1xf32>
    %cst_60 = arith.constant 3.200000e+01 : f32
    %133 = vector.broadcast %cst_60 : f32 to vector<8x1xf32>
    %134 = arith.divf %132, %133 : vector<8x1xf32>
    %135 = vector.broadcast %127 : vector<8x1xf32> to vector<8x32xf32>
    %136 = arith.subf %121, %135 : vector<8x32xf32>
    %cst_61 = arith.constant 9.99999996E-13 : f32
    %137 = vector.broadcast %cst_61 : f32 to vector<8x1xf32>
    %138 = arith.addf %134, %137 : vector<8x1xf32>
    %139 = math.rsqrt %138 : vector<8x1xf32>
    %140 = vector.broadcast %139 : vector<8x1xf32> to vector<8x32xf32>
    %141 = arith.mulf %136, %140 : vector<8x32xf32>
    %142 = vector.broadcast %122 : vector<1x32xf32> to vector<8x32xf32>
    %143 = arith.mulf %141, %142 : vector<8x32xf32>
    %144 = vector.broadcast %123 : vector<1x32xf32> to vector<8x32xf32>
    %145 = arith.addf %143, %144 : vector<8x32xf32>
    %c1 = arith.constant 1 : index
    %c0_62 = arith.constant 0 : index
    %c0_63 = arith.constant 0 : index
    %146 = vector.load %arg11[%c1, %c0_62, %c0_63] : memref<2x6x32xf32, #tpu.memory_space<vmem>>, vector<1x6x32xf32>
    %147 = vector.shape_cast %146 : vector<1x6x32xf32> to vector<6x32xf32>
    %148 = vector.shape_cast %145 : vector<8x32xf32> to vector<1x8x32xf32>
    %149 = vector.broadcast %148 : vector<1x8x32xf32> to vector<12x8x32xf32>
    %c1_64 = arith.constant 1 : index
    %c0_65 = arith.constant 0 : index
    %c0_66 = arith.constant 0 : index
    %c0_67 = arith.constant 0 : index
    %150 = vector.load %arg5[%c1_64, %c0_65, %c0_66, %c0_67] : memref<2x12x32x8xf32, #tpu.memory_space<vmem>>, vector<1x12x32x8xf32>
    %151 = vector.shape_cast %150 : vector<1x12x32x8xf32> to vector<12x32x8xf32>
    "tpu.trace_start"() <{level = 10 : i32, message = "gsh,ghd->gsd"}> : () -> ()
    %cst_68 = arith.constant dense<0.000000e+00> : vector<12x8x8xf32>
    %152 = tpu.matmul %149, %151, %cst_68 {dimension_numbers = #tpu.dot_dimension_numbers<[2], [1], [1], [2], [0, 0, 0, 1, 1, 2], [0], [0]>} : vector<12x8x32xf32>, vector<12x32x8xf32>, vector<12x8x8xf32> -> vector<12x8x8xf32>
    "tpu.trace_stop"() : () -> ()
    %c1_69 = arith.constant 1 : index
    %c0_70 = arith.constant 0 : index
    %c0_71 = arith.constant 0 : index
    %c0_72 = arith.constant 0 : index
    %153 = vector.load %arg6[%c1_69, %c0_70, %c0_71, %c0_72] : memref<2x12x1x8xf32, #tpu.memory_space<vmem>>, vector<1x12x1x8xf32>
    %154 = vector.shape_cast %153 : vector<1x12x1x8xf32> to vector<12x1x8xf32>
    %155 = vector.broadcast %154 : vector<12x1x8xf32> to vector<12x8x8xf32>
    %156 = arith.addf %152, %155 : vector<12x8x8xf32>
    %157 = vector.extract_strided_slice %156 {offsets = [0, 0, 0], sizes = [4, 8, 8], strides = [1, 1, 1]} : vector<12x8x8xf32> to vector<4x8x8xf32>
    %158 = vector.extract_strided_slice %156 {offsets = [4, 0, 0], sizes = [4, 8, 8], strides = [1, 1, 1]} : vector<12x8x8xf32> to vector<4x8x8xf32>
    %159 = vector.extract_strided_slice %156 {offsets = [8, 0, 0], sizes = [4, 8, 8], strides = [1, 1, 1]} : vector<12x8x8xf32> to vector<4x8x8xf32>
    %160 = vector.extract_strided_slice %157 {offsets = [0, 0, 0], sizes = [4, 1, 8], strides = [1, 1, 1]} : vector<4x8x8xf32> to vector<4x1x8xf32>
    "tpu.trace_start"() <{level = 10 : i32, message = "nqd,nkd->nqk"}> : () -> ()
    %cst_73 = arith.constant dense<0.000000e+00> : vector<4x1x8xf32>
    %161 = tpu.matmul %160, %158, %cst_73 {dimension_numbers = #tpu.dot_dimension_numbers<[2], [2], [1], [1], [0, 0, 0, 1, 1, 1], [0], [0]>} : vector<4x1x8xf32>, vector<4x8x8xf32>, vector<4x1x8xf32> -> vector<4x1x8xf32>
    "tpu.trace_stop"() : () -> ()
    %162 = vector.broadcast %34 : vector<1x1x8xf32> to vector<4x1x8xf32>
    %163 = arith.addf %161, %162 : vector<4x1x8xf32>
    %cst_74 = arith.constant dense<0xFF800000> : vector<4x1xf32>
    %164 = vector.multi_reduction <maximumf>, %163, %cst_74 [2] : vector<4x1x8xf32> to vector<4x1xf32>
    %165 = vector.shape_cast %164 : vector<4x1xf32> to vector<4x1x1xf32>
    %166 = vector.broadcast %165 : vector<4x1x1xf32> to vector<4x1x8xf32>
    %167 = arith.subf %163, %166 : vector<4x1x8xf32>
    %168 = math.exp %167 : vector<4x1x8xf32>
    %cst_75 = arith.constant dense<0.000000e+00> : vector<4x1xf32>
    %169 = vector.multi_reduction <add>, %168, %cst_75 [2] : vector<4x1x8xf32> to vector<4x1xf32>
    %170 = vector.shape_cast %169 : vector<4x1xf32> to vector<4x1x1xf32>
    %171 = tpu.reciprocal %170 {approx = true} : vector<4x1x1xf32> -> vector<4x1x1xf32>
    %172 = vector.broadcast %171 : vector<4x1x1xf32> to vector<4x1x8xf32>
    %173 = arith.mulf %168, %172 : vector<4x1x8xf32>
    "tpu.trace_start"() <{level = 10 : i32, message = "nqk,nkd->nqd"}> : () -> ()
    %cst_76 = arith.constant dense<0.000000e+00> : vector<4x1x8xf32>
    %174 = tpu.matmul %173, %159, %cst_76 {dimension_numbers = #tpu.dot_dimension_numbers<[2], [1], [1], [2], [0, 0, 0, 1, 1, 2], [0], [0]>} : vector<4x1x8xf32>, vector<4x8x8xf32>, vector<4x1x8xf32> -> vector<4x1x8xf32>
    "tpu.trace_stop"() : () -> ()
    %c1_77 = arith.constant 1 : index
    %c0_78 = arith.constant 0 : index
    %c0_79 = arith.constant 0 : index
    %c0_80 = arith.constant 0 : index
    %175 = vector.load %arg7[%c1_77, %c0_78, %c0_79, %c0_80] : memref<2x4x8x32xf32, #tpu.memory_space<vmem>>, vector<1x4x8x32xf32>
    %176 = vector.shape_cast %175 : vector<1x4x8x32xf32> to vector<4x8x32xf32>
    "tpu.trace_start"() <{level = 10 : i32, message = "nqd,ndh->nqh"}> : () -> ()
    %cst_81 = arith.constant dense<0.000000e+00> : vector<4x1x32xf32>
    %177 = tpu.matmul %174, %176, %cst_81 {dimension_numbers = #tpu.dot_dimension_numbers<[2], [1], [1], [2], [0, 0, 0, 1, 1, 2], [0], [0]>} : vector<4x1x8xf32>, vector<4x8x32xf32>, vector<4x1x32xf32> -> vector<4x1x32xf32>
    "tpu.trace_stop"() : () -> ()
    %cst_82 = arith.constant dense<0.000000e+00> : vector<1x32xf32>
    %178 = vector.multi_reduction <add>, %177, %cst_82 [0] : vector<4x1x32xf32> to vector<1x32xf32>
    %179 = vector.extract_strided_slice %147 {offsets = [0, 0], sizes = [1, 32], strides = [1, 1]} : vector<6x32xf32> to vector<1x32xf32>
    %180 = arith.addf %178, %179 : vector<1x32xf32>
    %181 = vector.extract_strided_slice %145 {offsets = [0, 0], sizes = [1, 32], strides = [1, 1]} : vector<8x32xf32> to vector<1x32xf32>
    %182 = arith.addf %181, %180 : vector<1x32xf32>
    %183 = vector.extract_strided_slice %147 {offsets = [1, 0], sizes = [1, 32], strides = [1, 1]} : vector<6x32xf32> to vector<1x32xf32>
    %184 = vector.extract_strided_slice %147 {offsets = [2, 0], sizes = [1, 32], strides = [1, 1]} : vector<6x32xf32> to vector<1x32xf32>
    %cst_83 = arith.constant dense<0.000000e+00> : vector<1xf32>
    %185 = vector.multi_reduction <add>, %182, %cst_83 [1] : vector<1x32xf32> to vector<1xf32>
    %186 = vector.shape_cast %185 : vector<1xf32> to vector<1x1xf32>
    %cst_84 = arith.constant 3.200000e+01 : f32
    %187 = vector.broadcast %cst_84 : f32 to vector<1x1xf32>
    %188 = arith.divf %186, %187 : vector<1x1xf32>
    %189 = vector.broadcast %188 : vector<1x1xf32> to vector<1x32xf32>
    %190 = arith.subf %182, %189 : vector<1x32xf32>
    %191 = arith.mulf %190, %190 : vector<1x32xf32>
    %cst_85 = arith.constant dense<0.000000e+00> : vector<1xf32>
    %192 = vector.multi_reduction <add>, %191, %cst_85 [1] : vector<1x32xf32> to vector<1xf32>
    %193 = vector.shape_cast %192 : vector<1xf32> to vector<1x1xf32>
    %cst_86 = arith.constant 3.200000e+01 : f32
    %194 = vector.broadcast %cst_86 : f32 to vector<1x1xf32>
    %195 = arith.divf %193, %194 : vector<1x1xf32>
    %196 = vector.broadcast %188 : vector<1x1xf32> to vector<1x32xf32>
    %197 = arith.subf %182, %196 : vector<1x32xf32>
    %cst_87 = arith.constant 9.99999996E-13 : f32
    %198 = vector.broadcast %cst_87 : f32 to vector<1x1xf32>
    %199 = arith.addf %195, %198 : vector<1x1xf32>
    %200 = math.rsqrt %199 : vector<1x1xf32>
    %201 = vector.broadcast %200 : vector<1x1xf32> to vector<1x32xf32>
    %202 = arith.mulf %197, %201 : vector<1x32xf32>
    %203 = arith.mulf %202, %183 : vector<1x32xf32>
    %204 = arith.addf %203, %184 : vector<1x32xf32>
    %c1_88 = arith.constant 1 : index
    %c0_89 = arith.constant 0 : index
    %c0_90 = arith.constant 0 : index
    %205 = vector.load %arg8[%c1_88, %c0_89, %c0_90] : memref<2x32x64xf32, #tpu.memory_space<vmem>>, vector<1x32x64xf32>
    %206 = vector.shape_cast %205 : vector<1x32x64xf32> to vector<32x64xf32>
    %cst_91 = arith.constant dense<0.000000e+00> : vector<1x64xf32>
    %207 = tpu.matmul %204, %206, %cst_91 {dimension_numbers = #tpu.dot_dimension_numbers<[1], [0], [0], [1], [0, 0, 1, 1], [], []>} : vector<1x32xf32>, vector<32x64xf32>, vector<1x64xf32> -> vector<1x64xf32>
    %c1_92 = arith.constant 1 : index
    %c0_93 = arith.constant 0 : index
    %c0_94 = arith.constant 0 : index
    %208 = vector.load %arg9[%c1_92, %c0_93, %c0_94] : memref<2x1x64xf32, #tpu.memory_space<vmem>>, vector<1x1x64xf32>
    %209 = vector.shape_cast %208 : vector<1x1x64xf32> to vector<1x64xf32>
    %210 = arith.addf %207, %209 : vector<1x64xf32>
    %211 = arith.mulf %210, %210 : vector<1x64xf32>
    %212 = arith.mulf %210, %211 : vector<1x64xf32>
    %cst_95 = arith.constant 4.471500e-02 : f32
    %213 = vector.broadcast %cst_95 : f32 to vector<1x64xf32>
    %214 = arith.mulf %213, %212 : vector<1x64xf32>
    %215 = arith.addf %210, %214 : vector<1x64xf32>
    %cst_96 = arith.constant 0.797884583 : f32
    %216 = vector.broadcast %cst_96 : f32 to vector<1x64xf32>
    %217 = arith.mulf %216, %215 : vector<1x64xf32>
    %218 = math.tanh %217 : vector<1x64xf32>
    %cst_97 = arith.constant 1.000000e+00 : f32
    %219 = vector.broadcast %cst_97 : f32 to vector<1x64xf32>
    %220 = arith.addf %219, %218 : vector<1x64xf32>
    %cst_98 = arith.constant 5.000000e-01 : f32
    %221 = vector.broadcast %cst_98 : f32 to vector<1x64xf32>
    %222 = arith.mulf %221, %220 : vector<1x64xf32>
    %223 = arith.mulf %210, %222 : vector<1x64xf32>
    %c1_99 = arith.constant 1 : index
    %c0_100 = arith.constant 0 : index
    %c0_101 = arith.constant 0 : index
    %224 = vector.load %arg10[%c1_99, %c0_100, %c0_101] : memref<2x64x32xf32, #tpu.memory_space<vmem>>, vector<1x64x32xf32>
    %225 = vector.shape_cast %224 : vector<1x64x32xf32> to vector<64x32xf32>
    %cst_102 = arith.constant dense<0.000000e+00> : vector<1x32xf32>
    %226 = tpu.matmul %223, %225, %cst_102 {dimension_numbers = #tpu.dot_dimension_numbers<[1], [0], [0], [1], [0, 0, 1, 1], [], []>} : vector<1x64xf32>, vector<64x32xf32>, vector<1x32xf32> -> vector<1x32xf32>
    %227 = vector.extract_strided_slice %147 {offsets = [3, 0], sizes = [1, 32], strides = [1, 1]} : vector<6x32xf32> to vector<1x32xf32>
    %228 = arith.addf %226, %227 : vector<1x32xf32>
    %229 = arith.addf %204, %228 : vector<1x32xf32>
    %230 = vector.extract_strided_slice %147 {offsets = [4, 0], sizes = [1, 32], strides = [1, 1]} : vector<6x32xf32> to vector<1x32xf32>
    %231 = vector.extract_strided_slice %147 {offsets = [5, 0], sizes = [1, 32], strides = [1, 1]} : vector<6x32xf32> to vector<1x32xf32>
    %cst_103 = arith.constant dense<0.000000e+00> : vector<1xf32>
    %232 = vector.multi_reduction <add>, %229, %cst_103 [1] : vector<1x32xf32> to vector<1xf32>
    %233 = vector.shape_cast %232 : vector<1xf32> to vector<1x1xf32>
    %cst_104 = arith.constant 3.200000e+01 : f32
    %234 = vector.broadcast %cst_104 : f32 to vector<1x1xf32>
    %235 = arith.divf %233, %234 : vector<1x1xf32>
    %236 = vector.broadcast %235 : vector<1x1xf32> to vector<1x32xf32>
    %237 = arith.subf %229, %236 : vector<1x32xf32>
    %238 = arith.mulf %237, %237 : vector<1x32xf32>
    %cst_105 = arith.constant dense<0.000000e+00> : vector<1xf32>
    %239 = vector.multi_reduction <add>, %238, %cst_105 [1] : vector<1x32xf32> to vector<1xf32>
    %240 = vector.shape_cast %239 : vector<1xf32> to vector<1x1xf32>
    %cst_106 = arith.constant 3.200000e+01 : f32
    %241 = vector.broadcast %cst_106 : f32 to vector<1x1xf32>
    %242 = arith.divf %240, %241 : vector<1x1xf32>
    %243 = vector.broadcast %235 : vector<1x1xf32> to vector<1x32xf32>
    %244 = arith.subf %229, %243 : vector<1x32xf32>
    %cst_107 = arith.constant 9.99999996E-13 : f32
    %245 = vector.broadcast %cst_107 : f32 to vector<1x1xf32>
    %246 = arith.addf %242, %245 : vector<1x1xf32>
    %247 = math.rsqrt %246 : vector<1x1xf32>
    %248 = vector.broadcast %247 : vector<1x1xf32> to vector<1x32xf32>
    %249 = arith.mulf %244, %248 : vector<1x32xf32>
    %250 = arith.mulf %249, %230 : vector<1x32xf32>
    %251 = arith.addf %250, %231 : vector<1x32xf32>
    %252 = vector.shape_cast %251 : vector<1x32xf32> to vector<1x1x32xf32>
    %c0_108 = arith.constant 0 : index
    %c0_109 = arith.constant 0 : index
    %c0_110 = arith.constant 0 : index
    %253 = vector.load %arg12[%c0_108, %c0_109, %c0_110] : memref<1x1x32xf32, #tpu.memory_space<vmem>>, vector<1x1x32xf32>
    tpu.vector_store %arg12[%c0_108, %c0_109, %c0_110], %252 {strides = array<i32>} : memref<1x1x32xf32, #tpu.memory_space<vmem>>, vector<1x1x32xf32>,
    return
  }
  func.func @transform_0(%arg0: i32) -> (i32, i32) {
    %c0_i32 = arith.constant 0 : i32
    %c0_i32_0 = arith.constant 0 : i32
    return %arg0, %c0_i32 : i32, i32
  }
  func.func @transform_1(%arg0: i32) -> (i32, i32, i32) {
    %c0_i32 = arith.constant 0 : i32
    %c0_i32_0 = arith.constant 0 : i32
    %c0_i32_1 = arith.constant 0 : i32
    return %arg0, %c0_i32, %c0_i32_0 : i32, i32, i32
  }
  func.func @transform_2(%arg0: i32) -> (i32, i32) {
    %c0_i32 = arith.constant 0 : i32
    %c0_i32_0 = arith.constant 0 : i32
    %c0_i32_1 = arith.constant 0 : i32
    return %c0_i32, %c0_i32_0 : i32, i32
  }
  func.func @transform_3(%arg0: i32) -> (i32, i32) {
    %c0_i32 = arith.constant 0 : i32
    %c0_i32_0 = arith.constant 0 : i32
    %c0_i32_1 = arith.constant 0 : i32
    return %c0_i32, %c0_i32_0 : i32, i32
  }
  func.func @transform_4(%arg0: i32) -> (i32, i32, i32, i32) {
    %c0_i32 = arith.constant 0 : i32
    %c0_i32_0 = arith.constant 0 : i32
    %c0_i32_1 = arith.constant 0 : i32
    %c0_i32_2 = arith.constant 0 : i32
    %c0_i32_3 = arith.constant 0 : i32
    return %c0_i32, %c0_i32_0, %c0_i32_1, %c0_i32_2 : i32, i32, i32, i32
  }
  func.func @transform_5(%arg0: i32) -> (i32, i32, i32, i32) {
    %c0_i32 = arith.constant 0 : i32
    %c0_i32_0 = arith.constant 0 : i32
    %c0_i32_1 = arith.constant 0 : i32
    %c0_i32_2 = arith.constant 0 : i32
    %c0_i32_3 = arith.constant 0 : i32
    return %c0_i32, %c0_i32_0, %c0_i32_1, %c0_i32_2 : i32, i32, i32, i32
  }
  func.func @transform_6(%arg0: i32) -> (i32, i32, i32, i32) {
    %c0_i32 = arith.constant 0 : i32
    %c0_i32_0 = arith.constant 0 : i32
    %c0_i32_1 = arith.constant 0 : i32
    %c0_i32_2 = arith.constant 0 : i32
    %c0_i32_3 = arith.constant 0 : i32
    return %c0_i32, %c0_i32_0, %c0_i32_1, %c0_i32_2 : i32, i32, i32, i32
  }
  func.func @transform_7(%arg0: i32) -> (i32, i32, i32) {
    %c0_i32 = arith.constant 0 : i32
    %c0_i32_0 = arith.constant 0 : i32
    %c0_i32_1 = arith.constant 0 : i32
    %c0_i32_2 = arith.constant 0 : i32
    return %c0_i32, %c0_i32_0, %c0_i32_1 : i32, i32, i32
  }
  func.func @transform_8(%arg0: i32) -> (i32, i32, i32) {
    %c0_i32 = arith.constant 0 : i32
    %c0_i32_0 = arith.constant 0 : i32
    %c0_i32_1 = arith.constant 0 : i32
    %c0_i32_2 = arith.constant 0 : i32
    return %c0_i32, %c0_i32_0, %c0_i32_1 : i32, i32, i32
  }
  func.func @transform_9(%arg0: i32) -> (i32, i32, i32) {
    %c0_i32 = arith.constant 0 : i32
    %c0_i32_0 = arith.constant 0 : i32
    %c0_i32_1 = arith.constant 0 : i32
    %c0_i32_2 = arith.constant 0 : i32
    return %c0_i32, %c0_i32_0, %c0_i32_1 : i32, i32, i32
  }
  func.func @transform_10(%arg0: i32) -> (i32, i32, i32) {
    %c0_i32 = arith.constant 0 : i32
    %c0_i32_0 = arith.constant 0 : i32
    %c0_i32_1 = arith.constant 0 : i32
    %c0_i32_2 = arith.constant 0 : i32
    return %c0_i32, %c0_i32_0, %c0_i32_1 : i32, i32, i32
  }
  func.func @transform_11(%arg0: i32) -> (i32, i32, i32) {
    %c0_i32 = arith.constant 0 : i32
    %c0_i32_0 = arith.constant 0 : i32
    %c0_i32_1 = arith.constant 0 : i32
    return %arg0, %c0_i32, %c0_i32_0 : i32, i32, i32
  }
}

</mosaic_0001>

<llo_original>
// kernel: tpu_custom_call.1
$region0: #{tpu_custom_call.1}
  #allocation0 [shape = 'u32[]', space=smem, size = 0x4, offset = 0x4, fixed_abs, tag = 'smem constant byte address 0x4 - core index']
  #allocation1 [shape = 'u32[144,128]{1,0:T(1,128)}', space=vmem, size = 0x12000, scoped, tag = 'internal scratch']
  %s0 = inlined_call_operand.vmem [shape: s32[16,1], index: 0, kind: input, shape index: {}]
  %s1 = inlined_call_operand.vmem [shape: f32[2,1,8], index: 1, kind: input, shape index: {}]
  %s2 = inlined_call_operand.vmem [shape: f32[128,32], index: 2, kind: input, shape index: {}]
  %s3 = inlined_call_operand.vmem [shape: f32[10,32], index: 3, kind: input, shape index: {}]
  %s4 = inlined_call_operand.vmem [shape: f32[2,12,32,8], index: 4, kind: input, shape index: {}]
  %s5 = inlined_call_operand.vmem [shape: f32[2,12,1,8], index: 5, kind: input, shape index: {}]
  %s6 = inlined_call_operand.vmem [shape: f32[2,4,8,32], index: 6, kind: input, shape index: {}]
  %s7 = inlined_call_operand.vmem [shape: f32[2,32,64], index: 7, kind: input, shape index: {}]
  %s8 = inlined_call_operand.vmem [shape: f32[2,1,64], index: 8, kind: input, shape index: {}]
  %s9 = inlined_call_operand.vmem [shape: f32[2,64,32], index: 9, kind: input, shape index: {}]
  %s10 = inlined_call_operand.vmem [shape: f32[2,6,32], index: 10, kind: input, shape index: {}]
  %s11 = inlined_call_operand.hbm [shape: f32[2,1,32], index: 11, kind: output, shape index: {}]
  %s12 = sld [smem:[#allocation0]]
  $region77: #{tpu_custom_call.1} parent=0
    _
  %s14 = ssub.s32 1, %s12
  %s15 = scalar_select 0, %s14, %s12
  $region1: #{tpu_custom_call.1} parent=0
    #allocation2 [shape = 'u8[1024]{0}', space=vmem, size = 0x400, scoped, tag = 'output window, operand 0']
    #allocation3 [shape = 's32[2]{0}', space=sflag, size = 0x8, scoped, tag = 'scoped memory for tpu_custom_call.1']
    %16 = vsyncpa [#allocation3], 0
    %s17 = scalar_lea.sflag [#allocation3], 1
    %18 = vsyncpa %s17, 0
    loop: start=0, step=1, limit=4
    $region2: #{tpu_custom_call.1} parent=1 // loop_pre_header
      _
    $region3: #{tpu_custom_call.1} parent=1 // loop_header
      %s20 = sphi 0, %s24
      %p21 = scmp.ge.s32.totalorder %s20, 4
      %s30 = sphi 0, %s32
      %s33 = sphi 0, %s30
      %s34 = sphi 0, %s33
      %s50 = sphi 0, %s34
      %s56 = sphi 0, %s58
      %s59 = sphi 0, %s56
      %s60 = sphi 0, %s59
      %s76 = sphi 0, %s60
      %s80 = sphi 0, %s80
      %s82 = sphi 0, %s80
      %s83 = sphi 0, %s82
      %s97 = sphi 0, %s83
      %s101 = sphi 0, %s101
      %s103 = sphi 0, %s101
      %s104 = sphi 0, %s103
      %s118 = sphi 0, %s104
      %s122 = sphi 0, %s122
      %s124 = sphi 0, %s122
      %s125 = sphi 0, %s124
      %s139 = sphi 0, %s125
      %s143 = sphi 0, %s143
      %s145 = sphi 0, %s143
      %s146 = sphi 0, %s145
      %s160 = sphi 0, %s146
      %s164 = sphi 0, %s164
      %s166 = sphi 0, %s164
      %s167 = sphi 0, %s166
      %s181 = sphi 0, %s167
      %s185 = sphi 0, %s185
      %s187 = sphi 0, %s185
      %s188 = sphi 0, %s187
      %s202 = sphi 0, %s188
      %s206 = sphi 0, %s206
      %s208 = sphi 0, %s206
      %s209 = sphi 0, %s208
      %s223 = sphi 0, %s209
      %s227 = sphi 0, %s227
      %s229 = sphi 0, %s227
      %s230 = sphi 0, %s229
      %s244 = sphi 0, %s230
      %s248 = sphi 0, %s248
      %s250 = sphi 0, %s248
      %s251 = sphi 0, %s250
      %s265 = sphi 0, %s251
      %s271 = sphi 0, %s273
      %s274 = sphi 0, %s271
      %s275 = sphi 0, %s274
      %s291 = sphi 0, %s275
    $region4: #{tpu_custom_call.1} parent=1 // loop_header_branch
      %23 = sbr.rel (%p21) target = $region8
    $region5: #{tpu_custom_call.1} parent=1 // loop_body
      %s25 = ssub.s32 %s20, 1
      %s26 = ssub.s32 %s20, 2
      %s27 = sadd.s32 %s20, 1
      %s28 = ssub.s32 %s20, %s27
      %p29 = scmp.eq.s32.totalorder %s28, 0
      %s31 = sadd.s32 %s30, 1
      %s32 = scalar_select %p29, %s30, %s31
      %p35 = pneg %p29
      %p36 = scmp.eq.s32.totalorder %s20, 1
      %p37 = por %p35, %p36
      %p38 = scmp.ne.s32.totalorder %s30, %s33
      %p39 = scmp.eq.s32.totalorder %s20, 0
      %p40 = por %p38, %p39
      %p41 = scmp.ne.s32.totalorder %s30, %s33
      %p42 = scmp.eq.s32.totalorder %s25, 1
      %p43 = por %p41, %p42
      %p44 = scmp.ne.s32.totalorder %s33, %s34
      %p45 = scmp.eq.s32.totalorder %s25, 0
      %p46 = por %p44, %p45
      %p47 = scmp.ne.s32.totalorder %s33, %s34
      %p48 = scmp.eq.s32.totalorder %s26, 1
      %p49 = por %p47, %p48
      %p51 = scmp.ne.s32.totalorder %s34, %s50
      %p52 = scmp.eq.s32.totalorder %s26, 0
      %p53 = por %p51, %p52
      %s54 = ssub.s32 %s20, %s27
      %p55 = scmp.eq.s32.totalorder %s54, 0
      %s57 = sadd.s32 %s56, 1
      %s58 = scalar_select %p55, %s56, %s57
      %p61 = pneg %p55
      %p62 = scmp.eq.s32.totalorder %s20, 1
      %p63 = por %p61, %p62
      %p64 = scmp.ne.s32.totalorder %s56, %s59
      %p65 = scmp.eq.s32.totalorder %s20, 0
      %p66 = por %p64, %p65
      %p67 = scmp.ne.s32.totalorder %s56, %s59
      %p68 = scmp.eq.s32.totalorder %s25, 1
      %p69 = por %p67, %p68
      %p70 = scmp.ne.s32.totalorder %s59, %s60
      %p71 = scmp.eq.s32.totalorder %s25, 0
      %p72 = por %p70, %p71
      %p73 = scmp.ne.s32.totalorder %s59, %s60
      %p74 = scmp.eq.s32.totalorder %s26, 1
      %p75 = por %p73, %p74
      %p77 = scmp.ne.s32.totalorder %s60, %s76
      %p78 = scmp.eq.s32.totalorder %s26, 0
      %p79 = por %p77, %p78
      %s81 = sadd.s32 %s80, 1
      %p84 = scmp.eq.s32.totalorder %s20, 1
      %p85 = scmp.ne.s32.totalorder %s80, %s82
      %p86 = scmp.eq.s32.totalorder %s20, 0
      %p87 = por %p85, %p86
      %p88 = scmp.ne.s32.totalorder %s80, %s82
      %p89 = scmp.eq.s32.totalorder %s25, 1
      %p90 = por %p88, %p89
      %p91 = scmp.ne.s32.totalorder %s82, %s83
      %p92 = scmp.eq.s32.totalorder %s25, 0
      %p93 = por %p91, %p92
      %p94 = scmp.ne.s32.totalorder %s82, %s83
      %p95 = scmp.eq.s32.totalorder %s26, 1
      %p96 = por %p94, %p95
      %p98 = scmp.ne.s32.totalorder %s83, %s97
      %p99 = scmp.eq.s32.totalorder %s26, 0
      %p100 = por %p98, %p99
      %s102 = sadd.s32 %s101, 1
      %p105 = scmp.eq.s32.totalorder %s20, 1
      %p106 = scmp.ne.s32.totalorder %s101, %s103
      %p107 = scmp.eq.s32.totalorder %s20, 0
      %p108 = por %p106, %p107
      %p109 = scmp.ne.s32.totalorder %s101, %s103
      %p110 = scmp.eq.s32.totalorder %s25, 1
      %p111 = por %p109, %p110
      %p112 = scmp.ne.s32.totalorder %s103, %s104
      %p113 = scmp.eq.s32.totalorder %s25, 0
      %p114 = por %p112, %p113
      %p115 = scmp.ne.s32.totalorder %s103, %s104
      %p116 = scmp.eq.s32.totalorder %s26, 1
      %p117 = por %p115, %p116
      %p119 = scmp.ne.s32.totalorder %s104, %s118
      %p120 = scmp.eq.s32.totalorder %s26, 0
      %p121 = por %p119, %p120
      %s123 = sadd.s32 %s122, 1
      %p126 = scmp.eq.s32.totalorder %s20, 1
      %p127 = scmp.ne.s32.totalorder %s122, %s124
      %p128 = scmp.eq.s32.totalorder %s20, 0
      %p129 = por %p127, %p128
      %p130 = scmp.ne.s32.totalorder %s122, %s124
      %p131 = scmp.eq.s32.totalorder %s25, 1
      %p132 = por %p130, %p131
      %p133 = scmp.ne.s32.totalorder %s124, %s125
      %p134 = scmp.eq.s32.totalorder %s25, 0
      %p135 = por %p133, %p134
      %p136 = scmp.ne.s32.totalorder %s124, %s125
      %p137 = scmp.eq.s32.totalorder %s26, 1
      %p138 = por %p136, %p137
      %p140 = scmp.ne.s32.totalorder %s125, %s139
      %p141 = scmp.eq.s32.totalorder %s26, 0
      %p142 = por %p140, %p141
      %s144 = sadd.s32 %s143, 1
      %p147 = scmp.eq.s32.totalorder %s20, 1
      %p148 = scmp.ne.s32.totalorder %s143, %s145
      %p149 = scmp.eq.s32.totalorder %s20, 0
      %p150 = por %p148, %p149
      %p151 = scmp.ne.s32.totalorder %s143, %s145
      %p152 = scmp.eq.s32.totalorder %s25, 1
      %p153 = por %p151, %p152
      %p154 = scmp.ne.s32.totalorder %s145, %s146
      %p155 = scmp.eq.s32.totalorder %s25, 0
      %p156 = por %p154, %p155
      %p157 = scmp.ne.s32.totalorder %s145, %s146
      %p158 = scmp.eq.s32.totalorder %s26, 1
      %p159 = por %p157, %p158
      %p161 = scmp.ne.s32.totalorder %s146, %s160
      %p162 = scmp.eq.s32.totalorder %s26, 0
      %p163 = por %p161, %p162
      %s165 = sadd.s32 %s164, 1
      %p168 = scmp.eq.s32.totalorder %s20, 1
      %p169 = scmp.ne.s32.totalorder %s164, %s166
      %p170 = scmp.eq.s32.totalorder %s20, 0
      %p171 = por %p169, %p170
      %p172 = scmp.ne.s32.totalorder %s164, %s166
      %p173 = scmp.eq.s32.totalorder %s25, 1
      %p174 = por %p172, %p173
      %p175 = scmp.ne.s32.totalorder %s166, %s167
      %p176 = scmp.eq.s32.totalorder %s25, 0
      %p177 = por %p175, %p176
      %p178 = scmp.ne.s32.totalorder %s166, %s167
      %p179 = scmp.eq.s32.totalorder %s26, 1
      %p180 = por %p178, %p179
      %p182 = scmp.ne.s32.totalorder %s167, %s181
      %p183 = scmp.eq.s32.totalorder %s26, 0
      %p184 = por %p182, %p183
      %s186 = sadd.s32 %s185, 1
      %p189 = scmp.eq.s32.totalorder %s20, 1
      %p190 = scmp.ne.s32.totalorder %s185, %s187
      %p191 = scmp.eq.s32.totalorder %s20, 0
      %p192 = por %p190, %p191
      %p193 = scmp.ne.s32.totalorder %s185, %s187
      %p194 = scmp.eq.s32.totalorder %s25, 1
      %p195 = por %p193, %p194
      %p196 = scmp.ne.s32.totalorder %s187, %s188
      %p197 = scmp.eq.s32.totalorder %s25, 0
      %p198 = por %p196, %p197
      %p199 = scmp.ne.s32.totalorder %s187, %s188
      %p200 = scmp.eq.s32.totalorder %s26, 1
      %p201 = por %p199, %p200
      %p203 = scmp.ne.s32.totalorder %s188, %s202
      %p204 = scmp.eq.s32.totalorder %s26, 0
      %p205 = por %p203, %p204
      %s207 = sadd.s32 %s206, 1
      %p210 = scmp.eq.s32.totalorder %s20, 1
      %p211 = scmp.ne.s32.totalorder %s206, %s208
      %p212 = scmp.eq.s32.totalorder %s20, 0
      %p213 = por %p211, %p212
      %p214 = scmp.ne.s32.totalorder %s206, %s208
      %p215 = scmp.eq.s32.totalorder %s25, 1
      %p216 = por %p214, %p215
      %p217 = scmp.ne.s32.totalorder %s208, %s209
      %p218 = scmp.eq.s32.totalorder %s25, 0
      %p219 = por %p217, %p218
      %p220 = scmp.ne.s32.totalorder %s208, %s209
      %p221 = scmp.eq.s32.totalorder %s26, 1
      %p222 = por %p220, %p221
      %p224 = scmp.ne.s32.totalorder %s209, %s223
      %p225 = scmp.eq.s32.totalorder %s26, 0
      %p226 = por %p224, %p225
      %s228 = sadd.s32 %s227, 1
      %p231 = scmp.eq.s32.totalorder %s20, 1
      %p232 = scmp.ne.s32.totalorder %s227, %s229
      %p233 = scmp.eq.s32.totalorder %s20, 0
      %p234 = por %p232, %p233
      %p235 = scmp.ne.s32.totalorder %s227, %s229
      %p236 = scmp.eq.s32.totalorder %s25, 1
      %p237 = por %p235, %p236
      %p238 = scmp.ne.s32.totalorder %s229, %s230
      %p239 = scmp.eq.s32.totalorder %s25, 0
      %p240 = por %p238, %p239
      %p241 = scmp.ne.s32.totalorder %s229, %s230
      %p242 = scmp.eq.s32.totalorder %s26, 1
      %p243 = por %p241, %p242
      %p245 = scmp.ne.s32.totalorder %s230, %s244
      %p246 = scmp.eq.s32.totalorder %s26, 0
      %p247 = por %p245, %p246
      %s249 = sadd.s32 %s248, 1
      %p252 = scmp.eq.s32.totalorder %s20, 1
      %p253 = scmp.ne.s32.totalorder %s248, %s250
      %p254 = scmp.eq.s32.totalorder %s20, 0
      %p255 = por %p253, %p254
      %p256 = scmp.ne.s32.totalorder %s248, %s250
      %p257 = scmp.eq.s32.totalorder %s25, 1
      %p258 = por %p256, %p257
      %p259 = scmp.ne.s32.totalorder %s250, %s251
      %p260 = scmp.eq.s32.totalorder %s25, 0
      %p261 = por %p259, %p260
      %p262 = scmp.ne.s32.totalorder %s250, %s251
      %p263 = scmp.eq.s32.totalorder %s26, 1
      %p264 = por %p262, %p263
      %p266 = scmp.ne.s32.totalorder %s251, %s265
      %p267 = scmp.eq.s32.totalorder %s26, 0
      %p268 = por %p266, %p267
      %s269 = ssub.s32 %s20, %s27
      %p270 = scmp.eq.s32.totalorder %s269, 0
      %s272 = sadd.s32 %s271, 1
      %s273 = scalar_select %p270, %s271, %s272
      %p276 = pneg %p270
      %p277 = scmp.eq.s32.totalorder %s20, 1
      %p278 = por %p276, %p277
      %p279 = scmp.ne.s32.totalorder %s271, %s274
      %p280 = scmp.eq.s32.totalorder %s20, 0
      %p281 = por %p279, %p280
      %p282 = scmp.ne.s32.totalorder %s271, %s274
      %p283 = scmp.eq.s32.totalorder %s25, 1
      %p284 = por %p282, %p283
      %p285 = scmp.ne.s32.totalorder %s274, %s275
      %p286 = scmp.eq.s32.totalorder %s25, 0
      %p287 = por %p285, %p286
      %p288 = scmp.ne.s32.totalorder %s274, %s275
      %p289 = scmp.eq.s32.totalorder %s26, 1
      %p290 = por %p288, %p289
      %p292 = scmp.ne.s32.totalorder %s275, %s291
      %p293 = scmp.eq.s32.totalorder %s26, 0
      %p294 = por %p292, %p293
      %p295 = scmp.le.s32.totalorder 1, %s20
      %p296 = scmp.lt.s32.totalorder %s20, 3
      %p297 = pnand %p295, %p296
      %p298 = pneg %p297
      // Predicated region
      $region9: #{tpu_custom_call.1} parent=5 // pred_check
        _
      $region10: #{tpu_custom_call.1} parent=5 // pred_check_branch
        %300 = sbr.rel (%p297) target = $region12
      $region11: #{tpu_custom_call.1} parent=5 // pred_region
        %s301 = ssub.s32 %s20, 1
        // Predicated region
        $region13: #{tpu_custom_call.1} parent=11 // pred_check
          %p302 = pneg %p93
        $region14: #{tpu_custom_call.1} parent=11 // pred_check_branch
          %304 = sbr.rel (%p302) target = $region16
        $region15: #{tpu_custom_call.1} parent=11 // pred_region
          _
        $region16: #{tpu_custom_call.1} parent=11 // pred_fallthru
          _
        // Predicated region
        $region17: #{tpu_custom_call.1} parent=11 // pred_check
          %p305 = pneg %p114
        $region18: #{tpu_custom_call.1} parent=11 // pred_check_branch
          %307 = sbr.rel (%p305) target = $region20
        $region19: #{tpu_custom_call.1} parent=11 // pred_region
          _
        $region20: #{tpu_custom_call.1} parent=11 // pred_fallthru
          _
        // Predicated region
        $region21: #{tpu_custom_call.1} parent=11 // pred_check
          %p308 = pneg %p135
        $region22: #{tpu_custom_call.1} parent=11 // pred_check_branch
          %310 = sbr.rel (%p308) target = $region24
        $region23: #{tpu_custom_call.1} parent=11 // pred_region
          _
        $region24: #{tpu_custom_call.1} parent=11 // pred_fallthru
          _
        // Predicated region
        $region25: #{tpu_custom_call.1} parent=11 // pred_check
          %p311 = pneg %p156
        $region26: #{tpu_custom_call.1} parent=11 // pred_check_branch
          %313 = sbr.rel (%p311) target = $region28
        $region27: #{tpu_custom_call.1} parent=11 // pred_region
          _
        $region28: #{tpu_custom_call.1} parent=11 // pred_fallthru
          _
        // Predicated region
        $region29: #{tpu_custom_call.1} parent=11 // pred_check
          %p314 = pneg %p177
        $region30: #{tpu_custom_call.1} parent=11 // pred_check_branch
          %316 = sbr.rel (%p314) target = $region32
        $region31: #{tpu_custom_call.1} parent=11 // pred_region
          _
        $region32: #{tpu_custom_call.1} parent=11 // pred_fallthru
          _
        // Predicated region
        $region33: #{tpu_custom_call.1} parent=11 // pred_check
          %p317 = pneg %p198
        $region34: #{tpu_custom_call.1} parent=11 // pred_check_branch
          %319 = sbr.rel (%p317) target = $region36
        $region35: #{tpu_custom_call.1} parent=11 // pred_region
          _
        $region36: #{tpu_custom_call.1} parent=11 // pred_fallthru
          _
        // Predicated region
        $region37: #{tpu_custom_call.1} parent=11 // pred_check
          %p320 = pneg %p219
        $region38: #{tpu_custom_call.1} parent=11 // pred_check_branch
          %322 = sbr.rel (%p320) target = $region40
        $region39: #{tpu_custom_call.1} parent=11 // pred_region
          _
        $region40: #{tpu_custom_call.1} parent=11 // pred_fallthru
          _
        // Predicated region
        $region41: #{tpu_custom_call.1} parent=11 // pred_check
          %p323 = pneg %p240
        $region42: #{tpu_custom_call.1} parent=11 // pred_check_branch
          %325 = sbr.rel (%p323) target = $region44
        $region43: #{tpu_custom_call.1} parent=11 // pred_region
          _
        $region44: #{tpu_custom_call.1} parent=11 // pred_fallthru
          _
        // Predicated region
        $region45: #{tpu_custom_call.1} parent=11 // pred_check
          %p326 = pneg %p261
        $region46: #{tpu_custom_call.1} parent=11 // pred_check_branch
          %328 = sbr.rel (%p326) target = $region48
        $region47: #{tpu_custom_call.1} parent=11 // pred_region
          _
        $region48: #{tpu_custom_call.1} parent=11 // pred_fallthru
          _
      $region12: #{tpu_custom_call.1} parent=5 // pred_fallthru
        _
      %p329 = scmp.lt.s32.totalorder %s20, 2
      // Predicated region
      $region49: #{tpu_custom_call.1} parent=5 // pred_check
        %p330 = pneg %p329
      $region50: #{tpu_custom_call.1} parent=5 // pred_check_branch
        %332 = sbr.rel (%p330) target = $region52
      $region51: #{tpu_custom_call.1} parent=5 // pred_region
        // Predicated region
        $region53: #{tpu_custom_call.1} parent=51 // pred_check
          %p333 = pneg %p40
        $region54: #{tpu_custom_call.1} parent=51 // pred_check_branch
          %335 = sbr.rel (%p333) target = $region56
        $region55: #{tpu_custom_call.1} parent=51 // pred_region
          %p336 = scmp.lt.s32.totalorder %s20, 1
          %s337 = scalar_select %p336, %s20, 1
          %s338 = smul.addr %s337, 8
          %s339 = scalar_lea.vmem %s0, %s338
        $region56: #{tpu_custom_call.1} parent=51 // pred_fallthru
          _
        // Predicated region
        $region57: #{tpu_custom_call.1} parent=51 // pred_check
          %p340 = pneg %p66
        $region58: #{tpu_custom_call.1} parent=51 // pred_check_branch
          %342 = sbr.rel (%p340) target = $region60
        $region59: #{tpu_custom_call.1} parent=51 // pred_region
          %p343 = scmp.lt.s32.totalorder %s20, 1
          %s344 = scalar_select %p343, %s20, 1
          %s345 = scalar_lea.vmem %s1, %s344
        $region60: #{tpu_custom_call.1} parent=51 // pred_fallthru
          _
      $region52: #{tpu_custom_call.1} parent=5 // pred_fallthru
        _
      %p346 = scmp.le.s32.totalorder 1, %s20
      %p347 = scmp.lt.s32.totalorder %s20, 3
      %p348 = pnand %p346, %p347
      %p349 = pneg %p348
      // Predicated region
      $region61: #{tpu_custom_call.1} parent=5 // pred_check
        _
      $region62: #{tpu_custom_call.1} parent=5 // pred_check_branch
        %351 = sbr.rel (%p348) target = $region64
      $region63: #{tpu_custom_call.1} parent=5 // pred_region
        %s352 = ssub.s32 %s20, 1
        %p353 = scmp.lt.s32.totalorder %s25, 1
        %s354 = scalar_select %p353, %s25, 1
        %s355 = smul.addr %s354, 8
        %s356 = scalar_lea.vmem %s0, %s355
        %p357 = pneg %p46
        %p358 = pneg %p43
        %p359 = scmp.lt.s32.totalorder %s25, 1
        %s360 = scalar_select %p359, %s25, 1
        %s361 = scalar_lea.vmem %s1, %s360
        %p362 = pneg %p72
        %p363 = pneg %p69
        %p364 = pneg %p93
        %p365 = pneg %p90
        %p366 = pneg %p114
        %p367 = pneg %p111
        %p368 = pneg %p135
        %p369 = pneg %p132
        %p370 = pneg %p156
        %p371 = pneg %p153
        %p372 = pneg %p177
        %p373 = pneg %p174
        %p374 = pneg %p198
        %p375 = pneg %p195
        %p376 = pneg %p219
        %p377 = pneg %p216
        %p378 = pneg %p240
        %p379 = pneg %p237
        %p380 = pneg %p261
        %p381 = pneg %p258
        %p382 = pneg %p287
        %p383 = pneg %p284
        %s384 = sand.u32 %s274, 1
        %s385 = scalar_lea.sflag [#allocation3], %s384
        %s386 = sand.u32 %s274, 1
        %s387 = scalar_lea.vmem [#allocation2], %s386
        %p388 = scmp.lt.s32.totalorder %s25, 1
        %s389 = scalar_select %p388, %s25, 1
        %s390 = smul.addr %s389, 8
        %s391 = scalar_lea.vmem %s0, %s390
        %p392 = scmp.lt.s32.totalorder %s25, 1
        %s393 = scalar_select %p392, %s25, 1
        %s394 = scalar_lea.vmem %s1, %s393
        %v395 = vld [vmem:[%s391] sm:$0xff]
        %v396 = vlaneseq
        %v397 = vand.u32 %v396, 127
        %398 = vset.pattern.permute.xlu0 0
        %399 = vperm.xlu0 %398, %v395
        %v400 = vpop.permute.xlu0 %399
        %vm401 = vcmp.eq.s32.totalorder %v397, %v400
        %v402 = vsel %vm401, 1, 0
        %v403 = vcvt.s32.f32 %v402
        %v404 = vld [vmem:[%s2] sm:$0xff]
        %v405 = vld [vmem:[%s2 + $0x8] sm:$0xff]
        %v406 = vld [vmem:[%s2 + $0x10] sm:$0xff]
        %v407 = vld [vmem:[%s2 + $0x18] sm:$0xff]
        %v408 = vld [vmem:[%s2 + $0x20] sm:$0xff]
        %v409 = vld [vmem:[%s2 + $0x28] sm:$0xff]
        %v410 = vld [vmem:[%s2 + $0x30] sm:$0xff]
        %v411 = vld [vmem:[%s2 + $0x38] sm:$0xff]
        %v412 = vld [vmem:[%s2 + $0x40] sm:$0xff]
        %v413 = vld [vmem:[%s2 + $0x48] sm:$0xff]
        %v414 = vld [vmem:[%s2 + $0x50] sm:$0xff]
        %v415 = vld [vmem:[%s2 + $0x58] sm:$0xff]
        %v416 = vld [vmem:[%s2 + $0x60] sm:$0xff]
        %v417 = vld [vmem:[%s2 + $0x68] sm:$0xff]
        %v418 = vld [vmem:[%s2 + $0x70] sm:$0xff]
        %v419 = vld [vmem:[%s2 + $0x78] sm:$0xff]
        %v420 = vld [vmem:[%s3] sm:$0xff]
        %421 = vmatprep.subr.mxu0 0.0
        %422 = vmatpush1.msra.mxu0 %v419
        %423 = vmatprep.subr.mxu0 0.0
        %424 = vmatpush1.msra.mxu0 %v418
        %425 = vmatprep.subr.mxu0 0.0
        %426 = vmatpush1.msra.mxu0 %v417
        %427 = vmatprep.subr.mxu0 0.0
        %428 = vmatpush1.msra.mxu0 %v416
        %429 = vmatprep.subr.mxu0 0.0
        %430 = vmatpush1.msra.mxu0 %v415
        %431 = vmatprep.subr.mxu0 0.0
        %432 = vmatpush1.msra.mxu0 %v414
        %433 = vmatprep.subr.mxu0 0.0
        %434 = vmatpush1.msra.mxu0 %v413
        %435 = vmatprep.subr.mxu0 0.0
        %436 = vmatpush1.msra.mxu0 %v412
        %437 = vmatprep.subr.mxu0 0.0
        %438 = vmatpush1.msra.mxu0 %v411
        %439 = vmatprep.subr.mxu0 0.0
        %440 = vmatpush1.msra.mxu0 %v410
        %441 = vmatprep.subr.mxu0 0.0
        %442 = vmatpush1.msra.mxu0 %v409
        %443 = vmatprep.subr.mxu0 0.0
        %444 = vmatpush1.msra.mxu0 %v408
        %445 = vmatprep.subr.mxu0 0.0
        %446 = vmatpush1.msra.mxu0 %v407
        %447 = vmatprep.subr.mxu0 0.0
        %448 = vmatpush1.msra.mxu0 %v406
        %449 = vmatprep.subr.mxu0 0.0
        %450 = vmatpush1.msra.mxu0 %v405
        %451 = vmatprep.subr.mxu0 0.0
        %452 = vmatpush1.msra.mxu0 %v404
        %453 = vmatprep.subr.mxu0 0.0
        %454 = vmatpush2.msra.mxu0 0.0
        %455 = vmatprep.subr.mxu0 0.0
        %456 = vmatpush2.msra.mxu0 0.0
        %457 = vmatprep.subr.mxu0 0.0
        %458 = vmatpush2.msra.mxu0 0.0
        %459 = vmatprep.subr.mxu0 0.0
        %460 = vmatpush2.msra.mxu0 0.0
        %461 = vmatprep.subr.mxu0 0.0
        %462 = vmatpush2.msra.mxu0 0.0
        %463 = vmatprep.subr.mxu0 0.0
        %464 = vmatpush2.msra.mxu0 0.0
        %465 = vmatprep.subr.mxu0 0.0
        %466 = vmatpush2.msra.mxu0 0.0
        %467 = vmatprep.subr.mxu0 0.0
        %468 = vmatpush2.msra.mxu0 0.0
        %469 = vmatprep.subr.mxu0 0.0
        %470 = vmatpush2.msra.mxu0 0.0
        %471 = vmatprep.subr.mxu0 0.0
        %472 = vmatpush2.msra.mxu0 0.0
        %473 = vmatprep.subr.mxu0 0.0
        %474 = vmatpush2.msra.mxu0 0.0
        %475 = vmatprep.subr.mxu0 0.0
        %476 = vmatpush2.msra.mxu0 0.0
        %477 = vmatprep.subr.mxu0 0.0
        %478 = vmatpush2.msra.mxu0 0.0
        %479 = vmatprep.subr.mxu0 0.0
        %480 = vmatpush2.msra.mxu0 0.0
        %481 = vmatprep.subr.mxu0 0.0
        %482 = vmatpush2.msra.mxu0 0.0
        %483 = vmatprep.subr.mxu0 0.0
        %484 = vmatpush2.msra.mxu0 0.0
        %485 = vmatprep.mubr.f32.mxu0 0.0
        %486 = vmatmul.mubr.f32.gmra.mxu0 %v403
        %v487 = vpop.f32.mrf.mxu0
        %v488 = vadd.f32 %v420, %v487
        %v489 = vpop.f32.mrf.mxu0
        %490 = vdwg.mxu0
        %v491 = vld [vmem:[%s3 + $0x8] sm:$0x1]
        %v492 = vld [vmem:[%s3 + $0x9] sm:$0x1]
        %vm493 = vcmask 261120
        %v494 = vsel %vm493, %v488, 0.0
        %495 = vadd.xlane.f32.xlu0 %v494
        %v496 = vpop.xlane.xlu0 %495
        %v497 = vrcp.pop 32.0
        %v498 = vmul.f32 %v496, %v497
        %v499 = vsub.f32 %v488, %v498
        %v500 = vmul.f32 %v499, %v499
        %v501 = vsel %vm493, %v500, 0.0
        %502 = vadd.xlane.f32.xlu0 %v501
        %v503 = vpop.xlane.xlu0 %502
        %v504 = vmul.f32 %v503, %v497
        %v505 = vadd.f32 %v504, 1e-12
        %v506 = vrsqrt.pop %v505
        %v507 = vmul.f32 %v499, %v506
        %v508 = vlaneseq
        %v509 = vshrl.u32 %v508, 7
        %v510 = vsub.s32 0, %v509
        %v511 = vrot.slane %v491, %v510
        %v512 = vmul.f32 %v507, %v511
        %v513 = vlaneseq
        %v514 = vshrl.u32 %v513, 7
        %v515 = vsub.s32 0, %v514
        %v516 = vrot.slane %v492, %v515
        %v517 = vadd.f32 %v512, %v516
        %v518 = vld [vmem:[%s394] sm:$0x1]
        %v519 = vld [vmem:[%s10] sm:$0x3f]
        %v520 = vld [vmem:[%s4] sm:$0xff]
        %v521 = vld [vmem:[%s4 + $0x8] sm:$0xff]
        %v522 = vld [vmem:[%s4 + $0x10] sm:$0xff]
        %v523 = vld [vmem:[%s4 + $0x18] sm:$0xff]
        %v524 = vld [vmem:[%s4 + $0x20] sm:$0xff]
        %v525 = vld [vmem:[%s4 + $0x28] sm:$0xff]
        %v526 = vld [vmem:[%s4 + $0x30] sm:$0xff]
        %v527 = vld [vmem:[%s4 + $0x38] sm:$0xff]
        %v528 = vld [vmem:[%s4 + $0x40] sm:$0xff]
        %v529 = vld [vmem:[%s4 + $0x48] sm:$0xff]
        %v530 = vld [vmem:[%s4 + $0x50] sm:$0xff]
        %v531 = vld [vmem:[%s4 + $0x58] sm:$0xff]
        %v532 = vld [vmem:[%s4 + $0x60] sm:$0xff]
        %v533 = vld [vmem:[%s4 + $0x68] sm:$0xff]
        %v534 = vld [vmem:[%s4 + $0x70] sm:$0xff]
        %v535 = vld [vmem:[%s4 + $0x78] sm:$0xff]
        %v536 = vld [vmem:[%s4 + $0x80] sm:$0xff]
        %v537 = vld [vmem:[%s4 + $0x88] sm:$0xff]
        %v538 = vld [vmem:[%s4 + $0x90] sm:$0xff]
        %v539 = vld [vmem:[%s4 + $0x98] sm:$0xff]
        %v540 = vld [vmem:[%s4 + $0xa0] sm:$0xff]
        %v541 = vld [vmem:[%s4 + $0xa8] sm:$0xff]
        %v542 = vld [vmem:[%s4 + $0xb0] sm:$0xff]
        %v543 = vld [vmem:[%s4 + $0xb8] sm:$0xff]
        %v544 = vld [vmem:[%s4 + $0xc0] sm:$0xff]
        %v545 = vld [vmem:[%s4 + $0xc8] sm:$0xff]
        %v546 = vld [vmem:[%s4 + $0xd0] sm:$0xff]
        %v547 = vld [vmem:[%s4 + $0xd8] sm:$0xff]
        %v548 = vld [vmem:[%s4 + $0xe0] sm:$0xff]
        %v549 = vld [vmem:[%s4 + $0xe8] sm:$0xff]
        %v550 = vld [vmem:[%s4 + $0xf0] sm:$0xff]
        %v551 = vld [vmem:[%s4 + $0xf8] sm:$0xff]
        %v552 = vld [vmem:[%s4 + $0x100] sm:$0xff]
        %v553 = vld [vmem:[%s4 + $0x108] sm:$0xff]
        %v554 = vld [vmem:[%s4 + $0x110] sm:$0xff]
        %v555 = vld [vmem:[%s4 + $0x118] sm:$0xff]
        %v556 = vld [vmem:[%s4 + $0x120] sm:$0xff]
        %v557 = vld [vmem:[%s4 + $0x128] sm:$0xff]
        %v558 = vld [vmem:[%s4 + $0x130] sm:$0xff]
        %v559 = vld [vmem:[%s4 + $0x138] sm:$0xff]
        %v560 = vld [vmem:[%s4 + $0x140] sm:$0xff]
        %v561 = vld [vmem:[%s4 + $0x148] sm:$0xff]
        %v562 = vld [vmem:[%s4 + $0x150] sm:$0xff]
        %v563 = vld [vmem:[%s4 + $0x158] sm:$0xff]
        %v564 = vld [vmem:[%s4 + $0x160] sm:$0xff]
        %v565 = vld [vmem:[%s4 + $0x168] sm:$0xff]
        %v566 = vld [vmem:[%s4 + $0x170] sm:$0xff]
        %v567 = vld [vmem:[%s4 + $0x178] sm:$0xff]
        %v568 = vld [vmem:[%s5] sm:$0x1]
        %v569 = vld [vmem:[%s5 + $0x1] sm:$0x1]
        %v570 = vld [vmem:[%s5 + $0x2] sm:$0x1]
        %v571 = vld [vmem:[%s5 + $0x3] sm:$0x1]
        %v572 = vld [vmem:[%s5 + $0x4] sm:$0x1]
        %v573 = vld [vmem:[%s5 + $0x5] sm:$0x1]
        %v574 = vld [vmem:[%s5 + $0x6] sm:$0x1]
        %v575 = vld [vmem:[%s5 + $0x7] sm:$0x1]
        %v576 = vld [vmem:[%s5 + $0x8] sm:$0x1]
        %v577 = vld [vmem:[%s5 + $0x9] sm:$0x1]
        %v578 = vld [vmem:[%s5 + $0xa] sm:$0x1]
        %v579 = vld [vmem:[%s5 + $0xb] sm:$0x1]
        %v592 = vlaneseq
        %v593 = vshrl.u32 %v592, 7
        %v594 = vsub.s32 0, %v593
        %v595 = vrot.slane %v568, %v594
        %v596 = vlaneseq
        %v597 = vshrl.u32 %v596, 7
        %v598 = vsub.s32 0, %v597
        %v599 = vrot.slane %v569, %v598
        %v600 = vlaneseq
        %v601 = vshrl.u32 %v600, 7
        %v602 = vsub.s32 0, %v601
        %v603 = vrot.slane %v570, %v602
        %v604 = vlaneseq
        %v605 = vshrl.u32 %v604, 7
        %v606 = vsub.s32 0, %v605
        %v607 = vrot.slane %v571, %v606
        %v608 = vlaneseq
        %v609 = vshrl.u32 %v608, 7
        %v610 = vsub.s32 0, %v609
        %v611 = vrot.slane %v572, %v610
        %v612 = vlaneseq
        %v613 = vshrl.u32 %v612, 7
        %v614 = vsub.s32 0, %v613
        %v615 = vrot.slane %v573, %v614
        %v616 = vlaneseq
        %v617 = vshrl.u32 %v616, 7
        %v618 = vsub.s32 0, %v617
        %v619 = vrot.slane %v574, %v618
        %v620 = vlaneseq
        %v621 = vshrl.u32 %v620, 7
        %v622 = vsub.s32 0, %v621
        %v623 = vrot.slane %v575, %v622
        %v624 = vlaneseq
        %v625 = vshrl.u32 %v624, 7
        %v626 = vsub.s32 0, %v625
        %v627 = vrot.slane %v576, %v626
        %v628 = vlaneseq
        %v629 = vshrl.u32 %v628, 7
        %v630 = vsub.s32 0, %v629
        %v631 = vrot.slane %v577, %v630
        %v632 = vlaneseq
        %v633 = vshrl.u32 %v632, 7
        %v634 = vsub.s32 0, %v633
        %v635 = vrot.slane %v578, %v634
        %v636 = vlaneseq
        %v637 = vshrl.u32 %v636, 7
        %v638 = vsub.s32 0, %v637
        %v639 = vrot.slane %v579, %v638
        %v653 = vsel %vm493, %v517, 0
        %655 = vmatprep.subr.mxu0 0.0
        %656 = vmatpush1.msra.mxu0 0.0
        %657 = vmatprep.subr.mxu0 0.0
        %658 = vmatpush1.msra.mxu0 0.0
        %659 = vmatprep.subr.mxu0 0.0
        %660 = vmatpush1.msra.mxu0 0.0
        %661 = vmatprep.subr.mxu0 0.0
        %662 = vmatpush1.msra.mxu0 0.0
        %663 = vmatprep.subr.mxu0 0.0
        %664 = vmatpush1.msra.mxu0 0.0
        %665 = vmatprep.subr.mxu0 0.0
        %666 = vmatpush1.msra.mxu0 0.0
        %667 = vmatprep.subr.mxu0 0.0
        %668 = vmatpush1.msra.mxu0 0.0
        %669 = vmatprep.subr.mxu0 0.0
        %670 = vmatpush1.msra.mxu0 0.0
        %671 = vmatprep.subr.mxu0 0.0
        %672 = vmatpush1.msra.mxu0 0.0
        %673 = vmatprep.subr.mxu0 0.0
        %674 = vmatpush1.msra.mxu0 0.0
        %675 = vmatprep.subr.mxu0 0.0
        %676 = vmatpush1.msra.mxu0 0.0
        %677 = vmatprep.subr.mxu0 0.0
        %678 = vmatpush1.msra.mxu0 0.0
        %679 = vmatprep.subr.mxu0 0.0
        %680 = vmatpush1.msra.mxu0 %v523
        %681 = vmatprep.subr.mxu0 0.0
        %682 = vmatpush1.msra.mxu0 %v522
        %683 = vmatprep.subr.mxu0 0.0
        %684 = vmatpush1.msra.mxu0 %v521
        %685 = vmatprep.subr.mxu0 0.0
        %686 = vmatpush1.msra.mxu0 %v520
        %687 = vmatprep.subr.mxu0 0.0
        %688 = vmatpush2.msra.mxu0 0.0
        %689 = vmatprep.subr.mxu0 0.0
        %690 = vmatpush2.msra.mxu0 0.0
        %691 = vmatprep.subr.mxu0 0.0
        %692 = vmatpush2.msra.mxu0 0.0
        %693 = vmatprep.subr.mxu0 0.0
        %694 = vmatpush2.msra.mxu0 0.0
        %695 = vmatprep.subr.mxu0 0.0
        %696 = vmatpush2.msra.mxu0 0.0
        %697 = vmatprep.subr.mxu0 0.0
        %698 = vmatpush2.msra.mxu0 0.0
        %699 = vmatprep.subr.mxu0 0.0
        %700 = vmatpush2.msra.mxu0 0.0
        %701 = vmatprep.subr.mxu0 0.0
        %702 = vmatpush2.msra.mxu0 0.0
        %703 = vmatprep.subr.mxu0 0.0
        %704 = vmatpush2.msra.mxu0 0.0
        %705 = vmatprep.subr.mxu0 0.0
        %706 = vmatpush2.msra.mxu0 0.0
        %707 = vmatprep.subr.mxu0 0.0
        %708 = vmatpush2.msra.mxu0 0.0
        %709 = vmatprep.subr.mxu0 0.0
        %710 = vmatpush2.msra.mxu0 0.0
        %711 = vmatprep.subr.mxu0 0.0
        %712 = vmatpush2.msra.mxu0 0.0
        %713 = vmatprep.subr.mxu0 0.0
        %714 = vmatpush2.msra.mxu0 0.0
        %715 = vmatprep.subr.mxu0 0.0
        %716 = vmatpush2.msra.mxu0 0.0
        %717 = vmatprep.subr.mxu0 0.0
        %718 = vmatpush2.msra.mxu0 0.0
        %719 = vmatprep.mubr.f32.mxu0 0.0
        %720 = vmatmul.mubr.f32.gmra.mxu0 %v653
        %v721 = vpop.f32.mrf.mxu0
        %v722 = vadd.f32 %v595, %v721
        %v723 = vpop.f32.mrf.mxu0
        %724 = vdwg.mxu0
        %725 = vmatprep.subr.mxu0 0.0
        %726 = vmatpush1.msra.mxu0 0.0
        %727 = vmatprep.subr.mxu0 0.0
        %728 = vmatpush1.msra.mxu0 0.0
        %729 = vmatprep.subr.mxu0 0.0
        %730 = vmatpush1.msra.mxu0 0.0
        %731 = vmatprep.subr.mxu0 0.0
        %732 = vmatpush1.msra.mxu0 0.0
        %733 = vmatprep.subr.mxu0 0.0
        %734 = vmatpush1.msra.mxu0 0.0
        %735 = vmatprep.subr.mxu0 0.0
        %736 = vmatpush1.msra.mxu0 0.0
        %737 = vmatprep.subr.mxu0 0.0
        %738 = vmatpush1.msra.mxu0 0.0
        %739 = vmatprep.subr.mxu0 0.0
        %740 = vmatpush1.msra.mxu0 0.0
        %741 = vmatprep.subr.mxu0 0.0
        %742 = vmatpush1.msra.mxu0 0.0
        %743 = vmatprep.subr.mxu0 0.0
        %744 = vmatpush1.msra.mxu0 0.0
        %745 = vmatprep.subr.mxu0 0.0
        %746 = vmatpush1.msra.mxu0 0.0
        %747 = vmatprep.subr.mxu0 0.0
        %748 = vmatpush1.msra.mxu0 0.0
        %749 = vmatprep.subr.mxu0 0.0
        %750 = vmatpush1.msra.mxu0 %v527
        %751 = vmatprep.subr.mxu0 0.0
        %752 = vmatpush1.msra.mxu0 %v526
        %753 = vmatprep.subr.mxu0 0.0
        %754 = vmatpush1.msra.mxu0 %v525
        %755 = vmatprep.subr.mxu0 0.0
        %756 = vmatpush1.msra.mxu0 %v524
        %757 = vmatprep.subr.mxu0 0.0
        %758 = vmatpush2.msra.mxu0 0.0
        %759 = vmatprep.subr.mxu0 0.0
        %760 = vmatpush2.msra.mxu0 0.0
        %761 = vmatprep.subr.mxu0 0.0
        %762 = vmatpush2.msra.mxu0 0.0
        %763 = vmatprep.subr.mxu0 0.0
        %764 = vmatpush2.msra.mxu0 0.0
        %765 = vmatprep.subr.mxu0 0.0
        %766 = vmatpush2.msra.mxu0 0.0
        %767 = vmatprep.subr.mxu0 0.0
        %768 = vmatpush2.msra.mxu0 0.0
        %769 = vmatprep.subr.mxu0 0.0
        %770 = vmatpush2.msra.mxu0 0.0
        %771 = vmatprep.subr.mxu0 0.0
        %772 = vmatpush2.msra.mxu0 0.0
        %773 = vmatprep.subr.mxu0 0.0
        %774 = vmatpush2.msra.mxu0 0.0
        %775 = vmatprep.subr.mxu0 0.0
        %776 = vmatpush2.msra.mxu0 0.0
        %777 = vmatprep.subr.mxu0 0.0
        %778 = vmatpush2.msra.mxu0 0.0
        %779 = vmatprep.subr.mxu0 0.0
        %780 = vmatpush2.msra.mxu0 0.0
        %781 = vmatprep.subr.mxu0 0.0
        %782 = vmatpush2.msra.mxu0 0.0
        %783 = vmatprep.subr.mxu0 0.0
        %784 = vmatpush2.msra.mxu0 0.0
        %785 = vmatprep.subr.mxu0 0.0
        %786 = vmatpush2.msra.mxu0 0.0
        %787 = vmatprep.subr.mxu0 0.0
        %788 = vmatpush2.msra.mxu0 0.0
        %789 = vmatprep.mubr.f32.mxu0 0.0
        %790 = vmatmul.mubr.f32.gmra.mxu0 %v653
        %v791 = vpop.f32.mrf.mxu0
        %v792 = vadd.f32 %v599, %v791
        %v793 = vpop.f32.mrf.mxu0
        %794 = vdwg.mxu0
        %795 = vmatprep.subr.mxu0 0.0
        %796 = vmatpush1.msra.mxu0 0.0
        %797 = vmatprep.subr.mxu0 0.0
        %798 = vmatpush1.msra.mxu0 0.0
        %799 = vmatprep.subr.mxu0 0.0
        %800 = vmatpush1.msra.mxu0 0.0
        %801 = vmatprep.subr.mxu0 0.0
        %802 = vmatpush1.msra.mxu0 0.0
        %803 = vmatprep.subr.mxu0 0.0
        %804 = vmatpush1.msra.mxu0 0.0
        %805 = vmatprep.subr.mxu0 0.0
        %806 = vmatpush1.msra.mxu0 0.0
        %807 = vmatprep.subr.mxu0 0.0
        %808 = vmatpush1.msra.mxu0 0.0
        %809 = vmatprep.subr.mxu0 0.0
        %810 = vmatpush1.msra.mxu0 0.0
        %811 = vmatprep.subr.mxu0 0.0
        %812 = vmatpush1.msra.mxu0 0.0
        %813 = vmatprep.subr.mxu0 0.0
        %814 = vmatpush1.msra.mxu0 0.0
        %815 = vmatprep.subr.mxu0 0.0
        %816 = vmatpush1.msra.mxu0 0.0
        %817 = vmatprep.subr.mxu0 0.0
        %818 = vmatpush1.msra.mxu0 0.0
        %819 = vmatprep.subr.mxu0 0.0
        %820 = vmatpush1.msra.mxu0 %v531
        %821 = vmatprep.subr.mxu0 0.0
        %822 = vmatpush1.msra.mxu0 %v530
        %823 = vmatprep.subr.mxu0 0.0
        %824 = vmatpush1.msra.mxu0 %v529
        %825 = vmatprep.subr.mxu0 0.0
        %826 = vmatpush1.msra.mxu0 %v528
        %827 = vmatprep.subr.mxu0 0.0
        %828 = vmatpush2.msra.mxu0 0.0
        %829 = vmatprep.subr.mxu0 0.0
        %830 = vmatpush2.msra.mxu0 0.0
        %831 = vmatprep.subr.mxu0 0.0
        %832 = vmatpush2.msra.mxu0 0.0
        %833 = vmatprep.subr.mxu0 0.0
        %834 = vmatpush2.msra.mxu0 0.0
        %835 = vmatprep.subr.mxu0 0.0
        %836 = vmatpush2.msra.mxu0 0.0
        %837 = vmatprep.subr.mxu0 0.0
        %838 = vmatpush2.msra.mxu0 0.0
        %839 = vmatprep.subr.mxu0 0.0
        %840 = vmatpush2.msra.mxu0 0.0
        %841 = vmatprep.subr.mxu0 0.0
        %842 = vmatpush2.msra.mxu0 0.0
        %843 = vmatprep.subr.mxu0 0.0
        %844 = vmatpush2.msra.mxu0 0.0
        %845 = vmatprep.subr.mxu0 0.0
        %846 = vmatpush2.msra.mxu0 0.0
        %847 = vmatprep.subr.mxu0 0.0
        %848 = vmatpush2.msra.mxu0 0.0
        %849 = vmatprep.subr.mxu0 0.0
        %850 = vmatpush2.msra.mxu0 0.0
        %851 = vmatprep.subr.mxu0 0.0
        %852 = vmatpush2.msra.mxu0 0.0
        %853 = vmatprep.subr.mxu0 0.0
        %854 = vmatpush2.msra.mxu0 0.0
        %855 = vmatprep.subr.mxu0 0.0
        %856 = vmatpush2.msra.mxu0 0.0
        %857 = vmatprep.subr.mxu0 0.0
        %858 = vmatpush2.msra.mxu0 0.0
        %859 = vmatprep.mubr.f32.mxu0 0.0
        %860 = vmatmul.mubr.f32.gmra.mxu0 %v653
        %v861 = vpop.f32.mrf.mxu0
        %v862 = vadd.f32 %v603, %v861
        %v863 = vpop.f32.mrf.mxu0
        %864 = vdwg.mxu0
        %865 = vmatprep.subr.mxu0 0.0
        %866 = vmatpush1.msra.mxu0 0.0
        %867 = vmatprep.subr.mxu0 0.0
        %868 = vmatpush1.msra.mxu0 0.0
        %869 = vmatprep.subr.mxu0 0.0
        %870 = vmatpush1.msra.mxu0 0.0
        %871 = vmatprep.subr.mxu0 0.0
        %872 = vmatpush1.msra.mxu0 0.0
        %873 = vmatprep.subr.mxu0 0.0
        %874 = vmatpush1.msra.mxu0 0.0
        %875 = vmatprep.subr.mxu0 0.0
        %876 = vmatpush1.msra.mxu0 0.0
        %877 = vmatprep.subr.mxu0 0.0
        %878 = vmatpush1.msra.mxu0 0.0
        %879 = vmatprep.subr.mxu0 0.0
        %880 = vmatpush1.msra.mxu0 0.0
        %881 = vmatprep.subr.mxu0 0.0
        %882 = vmatpush1.msra.mxu0 0.0
        %883 = vmatprep.subr.mxu0 0.0
        %884 = vmatpush1.msra.mxu0 0.0
        %885 = vmatprep.subr.mxu0 0.0
        %886 = vmatpush1.msra.mxu0 0.0
        %887 = vmatprep.subr.mxu0 0.0
        %888 = vmatpush1.msra.mxu0 0.0
        %889 = vmatprep.subr.mxu0 0.0
        %890 = vmatpush1.msra.mxu0 %v535
        %891 = vmatprep.subr.mxu0 0.0
        %892 = vmatpush1.msra.mxu0 %v534
        %893 = vmatprep.subr.mxu0 0.0
        %894 = vmatpush1.msra.mxu0 %v533
        %895 = vmatprep.subr.mxu0 0.0
        %896 = vmatpush1.msra.mxu0 %v532
        %897 = vmatprep.subr.mxu0 0.0
        %898 = vmatpush2.msra.mxu0 0.0
        %899 = vmatprep.subr.mxu0 0.0
        %900 = vmatpush2.msra.mxu0 0.0
        %901 = vmatprep.subr.mxu0 0.0
        %902 = vmatpush2.msra.mxu0 0.0
        %903 = vmatprep.subr.mxu0 0.0
        %904 = vmatpush2.msra.mxu0 0.0
        %905 = vmatprep.subr.mxu0 0.0
        %906 = vmatpush2.msra.mxu0 0.0
        %907 = vmatprep.subr.mxu0 0.0
        %908 = vmatpush2.msra.mxu0 0.0
        %909 = vmatprep.subr.mxu0 0.0
        %910 = vmatpush2.msra.mxu0 0.0
        %911 = vmatprep.subr.mxu0 0.0
        %912 = vmatpush2.msra.mxu0 0.0
        %913 = vmatprep.subr.mxu0 0.0
        %914 = vmatpush2.msra.mxu0 0.0
        %915 = vmatprep.subr.mxu0 0.0
        %916 = vmatpush2.msra.mxu0 0.0
        %917 = vmatprep.subr.mxu0 0.0
        %918 = vmatpush2.msra.mxu0 0.0
        %919 = vmatprep.subr.mxu0 0.0
        %920 = vmatpush2.msra.mxu0 0.0
        %921 = vmatprep.subr.mxu0 0.0
        %922 = vmatpush2.msra.mxu0 0.0
        %923 = vmatprep.subr.mxu0 0.0
        %924 = vmatpush2.msra.mxu0 0.0
        %925 = vmatprep.subr.mxu0 0.0
        %926 = vmatpush2.msra.mxu0 0.0
        %927 = vmatprep.subr.mxu0 0.0
        %928 = vmatpush2.msra.mxu0 0.0
        %929 = vmatprep.mubr.f32.mxu0 0.0
        %930 = vmatmul.mubr.f32.gmra.mxu0 %v653
        %v931 = vpop.f32.mrf.mxu0
        %v932 = vadd.f32 %v607, %v931
        %v933 = vpop.f32.mrf.mxu0
        %934 = vdwg.mxu0
        %935 = vmatprep.subr.mxu0 0.0
        %936 = vmatpush1.msra.mxu0 0.0
        %937 = vmatprep.subr.mxu0 0.0
        %938 = vmatpush1.msra.mxu0 0.0
        %939 = vmatprep.subr.mxu0 0.0
        %940 = vmatpush1.msra.mxu0 0.0
        %941 = vmatprep.subr.mxu0 0.0
        %942 = vmatpush1.msra.mxu0 0.0
        %943 = vmatprep.subr.mxu0 0.0
        %944 = vmatpush1.msra.mxu0 0.0
        %945 = vmatprep.subr.mxu0 0.0
        %946 = vmatpush1.msra.mxu0 0.0
        %947 = vmatprep.subr.mxu0 0.0
        %948 = vmatpush1.msra.mxu0 0.0
        %949 = vmatprep.subr.mxu0 0.0
        %950 = vmatpush1.msra.mxu0 0.0
        %951 = vmatprep.subr.mxu0 0.0
        %952 = vmatpush1.msra.mxu0 0.0
        %953 = vmatprep.subr.mxu0 0.0
        %954 = vmatpush1.msra.mxu0 0.0
        %955 = vmatprep.subr.mxu0 0.0
        %956 = vmatpush1.msra.mxu0 0.0
        %957 = vmatprep.subr.mxu0 0.0
        %958 = vmatpush1.msra.mxu0 0.0
        %959 = vmatprep.subr.mxu0 0.0
        %960 = vmatpush1.msra.mxu0 %v539
        %961 = vmatprep.subr.mxu0 0.0
        %962 = vmatpush1.msra.mxu0 %v538
        %963 = vmatprep.subr.mxu0 0.0
        %964 = vmatpush1.msra.mxu0 %v537
        %965 = vmatprep.subr.mxu0 0.0
        %966 = vmatpush1.msra.mxu0 %v536
        %967 = vmatprep.subr.mxu0 0.0
        %968 = vmatpush2.msra.mxu0 0.0
        %969 = vmatprep.subr.mxu0 0.0
        %970 = vmatpush2.msra.mxu0 0.0
        %971 = vmatprep.subr.mxu0 0.0
        %972 = vmatpush2.msra.mxu0 0.0
        %973 = vmatprep.subr.mxu0 0.0
        %974 = vmatpush2.msra.mxu0 0.0
        %975 = vmatprep.subr.mxu0 0.0
        %976 = vmatpush2.msra.mxu0 0.0
        %977 = vmatprep.subr.mxu0 0.0
        %978 = vmatpush2.msra.mxu0 0.0
        %979 = vmatprep.subr.mxu0 0.0
        %980 = vmatpush2.msra.mxu0 0.0
        %981 = vmatprep.subr.mxu0 0.0
        %982 = vmatpush2.msra.mxu0 0.0
        %983 = vmatprep.subr.mxu0 0.0
        %984 = vmatpush2.msra.mxu0 0.0
        %985 = vmatprep.subr.mxu0 0.0
        %986 = vmatpush2.msra.mxu0 0.0
        %987 = vmatprep.subr.mxu0 0.0
        %988 = vmatpush2.msra.mxu0 0.0
        %989 = vmatprep.subr.mxu0 0.0
        %990 = vmatpush2.msra.mxu0 0.0
        %991 = vmatprep.subr.mxu0 0.0
        %992 = vmatpush2.msra.mxu0 0.0
        %993 = vmatprep.subr.mxu0 0.0
        %994 = vmatpush2.msra.mxu0 0.0
        %995 = vmatprep.subr.mxu0 0.0
        %996 = vmatpush2.msra.mxu0 0.0
        %997 = vmatprep.subr.mxu0 0.0
        %998 = vmatpush2.msra.mxu0 0.0
        %999 = vmatprep.mubr.f32.mxu0 0.0
        %1000 = vmatmul.mubr.f32.gmra.mxu0 %v653
        %v1001 = vpop.f32.mrf.mxu0
        %v1002 = vadd.f32 %v611, %v1001
        %v1003 = vpop.f32.mrf.mxu0
        %1004 = vdwg.mxu0
        %1005 = vmatprep.subr.mxu0 0.0
        %1006 = vmatpush1.msra.mxu0 0.0
        %1007 = vmatprep.subr.mxu0 0.0
        %1008 = vmatpush1.msra.mxu0 0.0
        %1009 = vmatprep.subr.mxu0 0.0
        %1010 = vmatpush1.msra.mxu0 0.0
        %1011 = vmatprep.subr.mxu0 0.0
        %1012 = vmatpush1.msra.mxu0 0.0
        %1013 = vmatprep.subr.mxu0 0.0
        %1014 = vmatpush1.msra.mxu0 0.0
        %1015 = vmatprep.subr.mxu0 0.0
        %1016 = vmatpush1.msra.mxu0 0.0
        %1017 = vmatprep.subr.mxu0 0.0
        %1018 = vmatpush1.msra.mxu0 0.0
        %1019 = vmatprep.subr.mxu0 0.0
        %1020 = vmatpush1.msra.mxu0 0.0
        %1021 = vmatprep.subr.mxu0 0.0
        %1022 = vmatpush1.msra.mxu0 0.0
        %1023 = vmatprep.subr.mxu0 0.0
        %1024 = vmatpush1.msra.mxu0 0.0
        %1025 = vmatprep.subr.mxu0 0.0
        %1026 = vmatpush1.msra.mxu0 0.0
        %1027 = vmatprep.subr.mxu0 0.0
        %1028 = vmatpush1.msra.mxu0 0.0
        %1029 = vmatprep.subr.mxu0 0.0
        %1030 = vmatpush1.msra.mxu0 %v543
        %1031 = vmatprep.subr.mxu0 0.0
        %1032 = vmatpush1.msra.mxu0 %v542
        %1033 = vmatprep.subr.mxu0 0.0
        %1034 = vmatpush1.msra.mxu0 %v541
        %1035 = vmatprep.subr.mxu0 0.0
        %1036 = vmatpush1.msra.mxu0 %v540
        %1037 = vmatprep.subr.mxu0 0.0
        %1038 = vmatpush2.msra.mxu0 0.0
        %1039 = vmatprep.subr.mxu0 0.0
        %1040 = vmatpush2.msra.mxu0 0.0
        %1041 = vmatprep.subr.mxu0 0.0
        %1042 = vmatpush2.msra.mxu0 0.0
        %1043 = vmatprep.subr.mxu0 0.0
        %1044 = vmatpush2.msra.mxu0 0.0
        %1045 = vmatprep.subr.mxu0 0.0
        %1046 = vmatpush2.msra.mxu0 0.0
        %1047 = vmatprep.subr.mxu0 0.0
        %1048 = vmatpush2.msra.mxu0 0.0
        %1049 = vmatprep.subr.mxu0 0.0
        %1050 = vmatpush2.msra.mxu0 0.0
        %1051 = vmatprep.subr.mxu0 0.0
        %1052 = vmatpush2.msra.mxu0 0.0
        %1053 = vmatprep.subr.mxu0 0.0
        %1054 = vmatpush2.msra.mxu0 0.0
        %1055 = vmatprep.subr.mxu0 0.0
        %1056 = vmatpush2.msra.mxu0 0.0
        %1057 = vmatprep.subr.mxu0 0.0
        %1058 = vmatpush2.msra.mxu0 0.0
        %1059 = vmatprep.subr.mxu0 0.0
        %1060 = vmatpush2.msra.mxu0 0.0
        %1061 = vmatprep.subr.mxu0 0.0
        %1062 = vmatpush2.msra.mxu0 0.0
        %1063 = vmatprep.subr.mxu0 0.0
        %1064 = vmatpush2.msra.mxu0 0.0
        %1065 = vmatprep.subr.mxu0 0.0
        %1066 = vmatpush2.msra.mxu0 0.0
        %1067 = vmatprep.subr.mxu0 0.0
        %1068 = vmatpush2.msra.mxu0 0.0
        %1069 = vmatprep.mubr.f32.mxu0 0.0
        %1070 = vmatmul.mubr.f32.gmra.mxu0 %v653
        %v1071 = vpop.f32.mrf.mxu0
        %v1072 = vadd.f32 %v615, %v1071
        %v1073 = vpop.f32.mrf.mxu0
        %1074 = vdwg.mxu0
        %1075 = vmatprep.subr.mxu0 0.0
        %1076 = vmatpush1.msra.mxu0 0.0
        %1077 = vmatprep.subr.mxu0 0.0
        %1078 = vmatpush1.msra.mxu0 0.0
        %1079 = vmatprep.subr.mxu0 0.0
        %1080 = vmatpush1.msra.mxu0 0.0
        %1081 = vmatprep.subr.mxu0 0.0
        %1082 = vmatpush1.msra.mxu0 0.0
        %1083 = vmatprep.subr.mxu0 0.0
        %1084 = vmatpush1.msra.mxu0 0.0
        %1085 = vmatprep.subr.mxu0 0.0
        %1086 = vmatpush1.msra.mxu0 0.0
        %1087 = vmatprep.subr.mxu0 0.0
        %1088 = vmatpush1.msra.mxu0 0.0
        %1089 = vmatprep.subr.mxu0 0.0
        %1090 = vmatpush1.msra.mxu0 0.0
        %1091 = vmatprep.subr.mxu0 0.0
        %1092 = vmatpush1.msra.mxu0 0.0
        %1093 = vmatprep.subr.mxu0 0.0
        %1094 = vmatpush1.msra.mxu0 0.0
        %1095 = vmatprep.subr.mxu0 0.0
        %1096 = vmatpush1.msra.mxu0 0.0
        %1097 = vmatprep.subr.mxu0 0.0
        %1098 = vmatpush1.msra.mxu0 0.0
        %1099 = vmatprep.subr.mxu0 0.0
        %1100 = vmatpush1.msra.mxu0 %v547
        %1101 = vmatprep.subr.mxu0 0.0
        %1102 = vmatpush1.msra.mxu0 %v546
        %1103 = vmatprep.subr.mxu0 0.0
        %1104 = vmatpush1.msra.mxu0 %v545
        %1105 = vmatprep.subr.mxu0 0.0
        %1106 = vmatpush1.msra.mxu0 %v544
        %1107 = vmatprep.subr.mxu0 0.0
        %1108 = vmatpush2.msra.mxu0 0.0
        %1109 = vmatprep.subr.mxu0 0.0
        %1110 = vmatpush2.msra.mxu0 0.0
        %1111 = vmatprep.subr.mxu0 0.0
        %1112 = vmatpush2.msra.mxu0 0.0
        %1113 = vmatprep.subr.mxu0 0.0
        %1114 = vmatpush2.msra.mxu0 0.0
        %1115 = vmatprep.subr.mxu0 0.0
        %1116 = vmatpush2.msra.mxu0 0.0
        %1117 = vmatprep.subr.mxu0 0.0
        %1118 = vmatpush2.msra.mxu0 0.0
        %1119 = vmatprep.subr.mxu0 0.0
        %1120 = vmatpush2.msra.mxu0 0.0
        %1121 = vmatprep.subr.mxu0 0.0
        %1122 = vmatpush2.msra.mxu0 0.0
        %1123 = vmatprep.subr.mxu0 0.0
        %1124 = vmatpush2.msra.mxu0 0.0
        %1125 = vmatprep.subr.mxu0 0.0
        %1126 = vmatpush2.msra.mxu0 0.0
        %1127 = vmatprep.subr.mxu0 0.0
        %1128 = vmatpush2.msra.mxu0 0.0
        %1129 = vmatprep.subr.mxu0 0.0
        %1130 = vmatpush2.msra.mxu0 0.0
        %1131 = vmatprep.subr.mxu0 0.0
        %1132 = vmatpush2.msra.mxu0 0.0
        %1133 = vmatprep.subr.mxu0 0.0
        %1134 = vmatpush2.msra.mxu0 0.0
        %1135 = vmatprep.subr.mxu0 0.0
        %1136 = vmatpush2.msra.mxu0 0.0
        %1137 = vmatprep.subr.mxu0 0.0
        %1138 = vmatpush2.msra.mxu0 0.0
        %1139 = vmatprep.mubr.f32.mxu0 0.0
        %1140 = vmatmul.mubr.f32.gmra.mxu0 %v653
        %v1141 = vpop.f32.mrf.mxu0
        %v1142 = vadd.f32 %v619, %v1141
        %v1143 = vpop.f32.mrf.mxu0
        %1144 = vdwg.mxu0
        %1145 = vmatprep.subr.mxu0 0.0
        %1146 = vmatpush1.msra.mxu0 0.0
        %1147 = vmatprep.subr.mxu0 0.0
        %1148 = vmatpush1.msra.mxu0 0.0
        %1149 = vmatprep.subr.mxu0 0.0
        %1150 = vmatpush1.msra.mxu0 0.0
        %1151 = vmatprep.subr.mxu0 0.0
        %1152 = vmatpush1.msra.mxu0 0.0
        %1153 = vmatprep.subr.mxu0 0.0
        %1154 = vmatpush1.msra.mxu0 0.0
        %1155 = vmatprep.subr.mxu0 0.0
        %1156 = vmatpush1.msra.mxu0 0.0
        %1157 = vmatprep.subr.mxu0 0.0
        %1158 = vmatpush1.msra.mxu0 0.0
        %1159 = vmatprep.subr.mxu0 0.0
        %1160 = vmatpush1.msra.mxu0 0.0
        %1161 = vmatprep.subr.mxu0 0.0
        %1162 = vmatpush1.msra.mxu0 0.0
        %1163 = vmatprep.subr.mxu0 0.0
        %1164 = vmatpush1.msra.mxu0 0.0
        %1165 = vmatprep.subr.mxu0 0.0
        %1166 = vmatpush1.msra.mxu0 0.0
        %1167 = vmatprep.subr.mxu0 0.0
        %1168 = vmatpush1.msra.mxu0 0.0
        %1169 = vmatprep.subr.mxu0 0.0
        %1170 = vmatpush1.msra.mxu0 %v551
        %1171 = vmatprep.subr.mxu0 0.0
        %1172 = vmatpush1.msra.mxu0 %v550
        %1173 = vmatprep.subr.mxu0 0.0
        %1174 = vmatpush1.msra.mxu0 %v549
        %1175 = vmatprep.subr.mxu0 0.0
        %1176 = vmatpush1.msra.mxu0 %v548
        %1177 = vmatprep.subr.mxu0 0.0
        %1178 = vmatpush2.msra.mxu0 0.0
        %1179 = vmatprep.subr.mxu0 0.0
        %1180 = vmatpush2.msra.mxu0 0.0
        %1181 = vmatprep.subr.mxu0 0.0
        %1182 = vmatpush2.msra.mxu0 0.0
        %1183 = vmatprep.subr.mxu0 0.0
        %1184 = vmatpush2.msra.mxu0 0.0
        %1185 = vmatprep.subr.mxu0 0.0
        %1186 = vmatpush2.msra.mxu0 0.0
        %1187 = vmatprep.subr.mxu0 0.0
        %1188 = vmatpush2.msra.mxu0 0.0
        %1189 = vmatprep.subr.mxu0 0.0
        %1190 = vmatpush2.msra.mxu0 0.0
        %1191 = vmatprep.subr.mxu0 0.0
        %1192 = vmatpush2.msra.mxu0 0.0
        %1193 = vmatprep.subr.mxu0 0.0
        %1194 = vmatpush2.msra.mxu0 0.0
        %1195 = vmatprep.subr.mxu0 0.0
        %1196 = vmatpush2.msra.mxu0 0.0
        %1197 = vmatprep.subr.mxu0 0.0
        %1198 = vmatpush2.msra.mxu0 0.0
        %1199 = vmatprep.subr.mxu0 0.0
        %1200 = vmatpush2.msra.mxu0 0.0
        %1201 = vmatprep.subr.mxu0 0.0
        %1202 = vmatpush2.msra.mxu0 0.0
        %1203 = vmatprep.subr.mxu0 0.0
        %1204 = vmatpush2.msra.mxu0 0.0
        %1205 = vmatprep.subr.mxu0 0.0
        %1206 = vmatpush2.msra.mxu0 0.0
        %1207 = vmatprep.subr.mxu0 0.0
        %1208 = vmatpush2.msra.mxu0 0.0
        %1209 = vmatprep.mubr.f32.mxu0 0.0
        %1210 = vmatmul.mubr.f32.gmra.mxu0 %v653
        %v1211 = vpop.f32.mrf.mxu0
        %v1212 = vadd.f32 %v623, %v1211
        %v1213 = vpop.f32.mrf.mxu0
        %1214 = vdwg.mxu0
        %1215 = vmatprep.subr.mxu0 0.0
        %1216 = vmatpush1.msra.mxu0 0.0
        %1217 = vmatprep.subr.mxu0 0.0
        %1218 = vmatpush1.msra.mxu0 0.0
        %1219 = vmatprep.subr.mxu0 0.0
        %1220 = vmatpush1.msra.mxu0 0.0
        %1221 = vmatprep.subr.mxu0 0.0
        %1222 = vmatpush1.msra.mxu0 0.0
        %1223 = vmatprep.subr.mxu0 0.0
        %1224 = vmatpush1.msra.mxu0 0.0
        %1225 = vmatprep.subr.mxu0 0.0
        %1226 = vmatpush1.msra.mxu0 0.0
        %1227 = vmatprep.subr.mxu0 0.0
        %1228 = vmatpush1.msra.mxu0 0.0
        %1229 = vmatprep.subr.mxu0 0.0
        %1230 = vmatpush1.msra.mxu0 0.0
        %1231 = vmatprep.subr.mxu0 0.0
        %1232 = vmatpush1.msra.mxu0 0.0
        %1233 = vmatprep.subr.mxu0 0.0
        %1234 = vmatpush1.msra.mxu0 0.0
        %1235 = vmatprep.subr.mxu0 0.0
        %1236 = vmatpush1.msra.mxu0 0.0
        %1237 = vmatprep.subr.mxu0 0.0
        %1238 = vmatpush1.msra.mxu0 0.0
        %1239 = vmatprep.subr.mxu0 0.0
        %1240 = vmatpush1.msra.mxu0 %v555
        %1241 = vmatprep.subr.mxu0 0.0
        %1242 = vmatpush1.msra.mxu0 %v554
        %1243 = vmatprep.subr.mxu0 0.0
        %1244 = vmatpush1.msra.mxu0 %v553
        %1245 = vmatprep.subr.mxu0 0.0
        %1246 = vmatpush1.msra.mxu0 %v552
        %1247 = vmatprep.subr.mxu0 0.0
        %1248 = vmatpush2.msra.mxu0 0.0
        %1249 = vmatprep.subr.mxu0 0.0
        %1250 = vmatpush2.msra.mxu0 0.0
        %1251 = vmatprep.subr.mxu0 0.0
        %1252 = vmatpush2.msra.mxu0 0.0
        %1253 = vmatprep.subr.mxu0 0.0
        %1254 = vmatpush2.msra.mxu0 0.0
        %1255 = vmatprep.subr.mxu0 0.0
        %1256 = vmatpush2.msra.mxu0 0.0
        %1257 = vmatprep.subr.mxu0 0.0
        %1258 = vmatpush2.msra.mxu0 0.0
        %1259 = vmatprep.subr.mxu0 0.0
        %1260 = vmatpush2.msra.mxu0 0.0
        %1261 = vmatprep.subr.mxu0 0.0
        %1262 = vmatpush2.msra.mxu0 0.0
        %1263 = vmatprep.subr.mxu0 0.0
        %1264 = vmatpush2.msra.mxu0 0.0
        %1265 = vmatprep.subr.mxu0 0.0
        %1266 = vmatpush2.msra.mxu0 0.0
        %1267 = vmatprep.subr.mxu0 0.0
        %1268 = vmatpush2.msra.mxu0 0.0
        %1269 = vmatprep.subr.mxu0 0.0
        %1270 = vmatpush2.msra.mxu0 0.0
        %1271 = vmatprep.subr.mxu0 0.0
        %1272 = vmatpush2.msra.mxu0 0.0
        %1273 = vmatprep.subr.mxu0 0.0
        %1274 = vmatpush2.msra.mxu0 0.0
        %1275 = vmatprep.subr.mxu0 0.0
        %1276 = vmatpush2.msra.mxu0 0.0
        %1277 = vmatprep.subr.mxu0 0.0
        %1278 = vmatpush2.msra.mxu0 0.0
        %1279 = vmatprep.mubr.f32.mxu0 0.0
        %1280 = vmatmul.mubr.f32.gmra.mxu0 %v653
        %v1281 = vpop.f32.mrf.mxu0
        %v1282 = vadd.f32 %v627, %v1281
        %v1283 = vpop.f32.mrf.mxu0
        %1284 = vdwg.mxu0
        %1285 = vmatprep.subr.mxu0 0.0
        %1286 = vmatpush1.msra.mxu0 0.0
        %1287 = vmatprep.subr.mxu0 0.0
        %1288 = vmatpush1.msra.mxu0 0.0
        %1289 = vmatprep.subr.mxu0 0.0
        %1290 = vmatpush1.msra.mxu0 0.0
        %1291 = vmatprep.subr.mxu0 0.0
        %1292 = vmatpush1.msra.mxu0 0.0
        %1293 = vmatprep.subr.mxu0 0.0
        %1294 = vmatpush1.msra.mxu0 0.0
        %1295 = vmatprep.subr.mxu0 0.0
        %1296 = vmatpush1.msra.mxu0 0.0
        %1297 = vmatprep.subr.mxu0 0.0
        %1298 = vmatpush1.msra.mxu0 0.0
        %1299 = vmatprep.subr.mxu0 0.0
        %1300 = vmatpush1.msra.mxu0 0.0
        %1301 = vmatprep.subr.mxu0 0.0
        %1302 = vmatpush1.msra.mxu0 0.0
        %1303 = vmatprep.subr.mxu0 0.0
        %1304 = vmatpush1.msra.mxu0 0.0
        %1305 = vmatprep.subr.mxu0 0.0
        %1306 = vmatpush1.msra.mxu0 0.0
        %1307 = vmatprep.subr.mxu0 0.0
        %1308 = vmatpush1.msra.mxu0 0.0
        %1309 = vmatprep.subr.mxu0 0.0
        %1310 = vmatpush1.msra.mxu0 %v559
        %1311 = vmatprep.subr.mxu0 0.0
        %1312 = vmatpush1.msra.mxu0 %v558
        %1313 = vmatprep.subr.mxu0 0.0
        %1314 = vmatpush1.msra.mxu0 %v557
        %1315 = vmatprep.subr.mxu0 0.0
        %1316 = vmatpush1.msra.mxu0 %v556
        %1317 = vmatprep.subr.mxu0 0.0
        %1318 = vmatpush2.msra.mxu0 0.0
        %1319 = vmatprep.subr.mxu0 0.0
        %1320 = vmatpush2.msra.mxu0 0.0
        %1321 = vmatprep.subr.mxu0 0.0
        %1322 = vmatpush2.msra.mxu0 0.0
        %1323 = vmatprep.subr.mxu0 0.0
        %1324 = vmatpush2.msra.mxu0 0.0
        %1325 = vmatprep.subr.mxu0 0.0
        %1326 = vmatpush2.msra.mxu0 0.0
        %1327 = vmatprep.subr.mxu0 0.0
        %1328 = vmatpush2.msra.mxu0 0.0
        %1329 = vmatprep.subr.mxu0 0.0
        %1330 = vmatpush2.msra.mxu0 0.0
        %1331 = vmatprep.subr.mxu0 0.0
        %1332 = vmatpush2.msra.mxu0 0.0
        %1333 = vmatprep.subr.mxu0 0.0
        %1334 = vmatpush2.msra.mxu0 0.0
        %1335 = vmatprep.subr.mxu0 0.0
        %1336 = vmatpush2.msra.mxu0 0.0
        %1337 = vmatprep.subr.mxu0 0.0
        %1338 = vmatpush2.msra.mxu0 0.0
        %1339 = vmatprep.subr.mxu0 0.0
        %1340 = vmatpush2.msra.mxu0 0.0
        %1341 = vmatprep.subr.mxu0 0.0
        %1342 = vmatpush2.msra.mxu0 0.0
        %1343 = vmatprep.subr.mxu0 0.0
        %1344 = vmatpush2.msra.mxu0 0.0
        %1345 = vmatprep.subr.mxu0 0.0
        %1346 = vmatpush2.msra.mxu0 0.0
        %1347 = vmatprep.subr.mxu0 0.0
        %1348 = vmatpush2.msra.mxu0 0.0
        %1349 = vmatprep.mubr.f32.mxu0 0.0
        %1350 = vmatmul.mubr.f32.gmra.mxu0 %v653
        %v1351 = vpop.f32.mrf.mxu0
        %v1352 = vadd.f32 %v631, %v1351
        %v1353 = vpop.f32.mrf.mxu0
        %1354 = vdwg.mxu0
        %1355 = vmatprep.subr.mxu0 0.0
        %1356 = vmatpush1.msra.mxu0 0.0
        %1357 = vmatprep.subr.mxu0 0.0
        %1358 = vmatpush1.msra.mxu0 0.0
        %1359 = vmatprep.subr.mxu0 0.0
        %1360 = vmatpush1.msra.mxu0 0.0
        %1361 = vmatprep.subr.mxu0 0.0
        %1362 = vmatpush1.msra.mxu0 0.0
        %1363 = vmatprep.subr.mxu0 0.0
        %1364 = vmatpush1.msra.mxu0 0.0
        %1365 = vmatprep.subr.mxu0 0.0
        %1366 = vmatpush1.msra.mxu0 0.0
        %1367 = vmatprep.subr.mxu0 0.0
        %1368 = vmatpush1.msra.mxu0 0.0
        %1369 = vmatprep.subr.mxu0 0.0
        %1370 = vmatpush1.msra.mxu0 0.0
        %1371 = vmatprep.subr.mxu0 0.0
        %1372 = vmatpush1.msra.mxu0 0.0
        %1373 = vmatprep.subr.mxu0 0.0
        %1374 = vmatpush1.msra.mxu0 0.0
        %1375 = vmatprep.subr.mxu0 0.0
        %1376 = vmatpush1.msra.mxu0 0.0
        %1377 = vmatprep.subr.mxu0 0.0
        %1378 = vmatpush1.msra.mxu0 0.0
        %1379 = vmatprep.subr.mxu0 0.0
        %1380 = vmatpush1.msra.mxu0 %v563
        %1381 = vmatprep.subr.mxu0 0.0
        %1382 = vmatpush1.msra.mxu0 %v562
        %1383 = vmatprep.subr.mxu0 0.0
        %1384 = vmatpush1.msra.mxu0 %v561
        %1385 = vmatprep.subr.mxu0 0.0
        %1386 = vmatpush1.msra.mxu0 %v560
        %1387 = vmatprep.subr.mxu0 0.0
        %1388 = vmatpush2.msra.mxu0 0.0
        %1389 = vmatprep.subr.mxu0 0.0
        %1390 = vmatpush2.msra.mxu0 0.0
        %1391 = vmatprep.subr.mxu0 0.0
        %1392 = vmatpush2.msra.mxu0 0.0
        %1393 = vmatprep.subr.mxu0 0.0
        %1394 = vmatpush2.msra.mxu0 0.0
        %1395 = vmatprep.subr.mxu0 0.0
        %1396 = vmatpush2.msra.mxu0 0.0
        %1397 = vmatprep.subr.mxu0 0.0
        %1398 = vmatpush2.msra.mxu0 0.0
        %1399 = vmatprep.subr.mxu0 0.0
        %1400 = vmatpush2.msra.mxu0 0.0
        %1401 = vmatprep.subr.mxu0 0.0
        %1402 = vmatpush2.msra.mxu0 0.0
        %1403 = vmatprep.subr.mxu0 0.0
        %1404 = vmatpush2.msra.mxu0 0.0
        %1405 = vmatprep.subr.mxu0 0.0
        %1406 = vmatpush2.msra.mxu0 0.0
        %1407 = vmatprep.subr.mxu0 0.0
        %1408 = vmatpush2.msra.mxu0 0.0
        %1409 = vmatprep.subr.mxu0 0.0
        %1410 = vmatpush2.msra.mxu0 0.0
        %1411 = vmatprep.subr.mxu0 0.0
        %1412 = vmatpush2.msra.mxu0 0.0
        %1413 = vmatprep.subr.mxu0 0.0
        %1414 = vmatpush2.msra.mxu0 0.0
        %1415 = vmatprep.subr.mxu0 0.0
        %1416 = vmatpush2.msra.mxu0 0.0
        %1417 = vmatprep.subr.mxu0 0.0
        %1418 = vmatpush2.msra.mxu0 0.0
        %1419 = vmatprep.mubr.f32.mxu0 0.0
        %1420 = vmatmul.mubr.f32.gmra.mxu0 %v653
        %v1421 = vpop.f32.mrf.mxu0
        %v1422 = vadd.f32 %v635, %v1421
        %v1423 = vpop.f32.mrf.mxu0
        %1424 = vdwg.mxu0
        %1425 = vmatprep.subr.mxu0 0.0
        %1426 = vmatpush1.msra.mxu0 0.0
        %1427 = vmatprep.subr.mxu0 0.0
        %1428 = vmatpush1.msra.mxu0 0.0
        %1429 = vmatprep.subr.mxu0 0.0
        %1430 = vmatpush1.msra.mxu0 0.0
        %1431 = vmatprep.subr.mxu0 0.0
        %1432 = vmatpush1.msra.mxu0 0.0
        %1433 = vmatprep.subr.mxu0 0.0
        %1434 = vmatpush1.msra.mxu0 0.0
        %1435 = vmatprep.subr.mxu0 0.0
        %1436 = vmatpush1.msra.mxu0 0.0
        %1437 = vmatprep.subr.mxu0 0.0
        %1438 = vmatpush1.msra.mxu0 0.0
        %1439 = vmatprep.subr.mxu0 0.0
        %1440 = vmatpush1.msra.mxu0 0.0
        %1441 = vmatprep.subr.mxu0 0.0
        %1442 = vmatpush1.msra.mxu0 0.0
        %1443 = vmatprep.subr.mxu0 0.0
        %1444 = vmatpush1.msra.mxu0 0.0
        %1445 = vmatprep.subr.mxu0 0.0
        %1446 = vmatpush1.msra.mxu0 0.0
        %1447 = vmatprep.subr.mxu0 0.0
        %1448 = vmatpush1.msra.mxu0 0.0
        %1449 = vmatprep.subr.mxu0 0.0
        %1450 = vmatpush1.msra.mxu0 %v567
        %1451 = vmatprep.subr.mxu0 0.0
        %1452 = vmatpush1.msra.mxu0 %v566
        %1453 = vmatprep.subr.mxu0 0.0
        %1454 = vmatpush1.msra.mxu0 %v565
        %1455 = vmatprep.subr.mxu0 0.0
        %1456 = vmatpush1.msra.mxu0 %v564
        %1457 = vmatprep.subr.mxu0 0.0
        %1458 = vmatpush2.msra.mxu0 0.0
        %1459 = vmatprep.subr.mxu0 0.0
        %1460 = vmatpush2.msra.mxu0 0.0
        %1461 = vmatprep.subr.mxu0 0.0
        %1462 = vmatpush2.msra.mxu0 0.0
        %1463 = vmatprep.subr.mxu0 0.0
        %1464 = vmatpush2.msra.mxu0 0.0
        %1465 = vmatprep.subr.mxu0 0.0
        %1466 = vmatpush2.msra.mxu0 0.0
        %1467 = vmatprep.subr.mxu0 0.0
        %1468 = vmatpush2.msra.mxu0 0.0
        %1469 = vmatprep.subr.mxu0 0.0
        %1470 = vmatpush2.msra.mxu0 0.0
        %1471 = vmatprep.subr.mxu0 0.0
        %1472 = vmatpush2.msra.mxu0 0.0
        %1473 = vmatprep.subr.mxu0 0.0
        %1474 = vmatpush2.msra.mxu0 0.0
        %1475 = vmatprep.subr.mxu0 0.0
        %1476 = vmatpush2.msra.mxu0 0.0
        %1477 = vmatprep.subr.mxu0 0.0
        %1478 = vmatpush2.msra.mxu0 0.0
        %1479 = vmatprep.subr.mxu0 0.0
        %1480 = vmatpush2.msra.mxu0 0.0
        %1481 = vmatprep.subr.mxu0 0.0
        %1482 = vmatpush2.msra.mxu0 0.0
        %1483 = vmatprep.subr.mxu0 0.0
        %1484 = vmatpush2.msra.mxu0 0.0
        %1485 = vmatprep.subr.mxu0 0.0
        %1486 = vmatpush2.msra.mxu0 0.0
        %1487 = vmatprep.subr.mxu0 0.0
        %1488 = vmatpush2.msra.mxu0 0.0
        %1489 = vmatprep.mubr.f32.mxu0 0.0
        %1490 = vmatmul.mubr.f32.gmra.mxu0 %v653
        %v1491 = vpop.f32.mrf.mxu0
        %v1492 = vadd.f32 %v639, %v1491
        %v1493 = vpop.f32.mrf.mxu0
        %1494 = vdwg.mxu0
        %v1496 = vlaneseq
        %v1497 = vshrl.u32 %v1496, 7
        %v1498 = vsub.s32 0, %v1497
        %v1499 = vrot.slane %v518, %v1498
        %vm1501 = vcmask 64512
        %v1503 = vsel %vm1501, %v722, 0
        %v1506 = vsel %vm1501, %v1002, 0
        %1508 = vmatprep.subr.mxu0 0.0
        %1509 = vmatpush1.xpose.msra.mxu0 0.0
        %1510 = vmatprep.subr.mxu0 0.0
        %1511 = vmatpush1.xpose.msra.mxu0 0.0
        %1512 = vmatprep.subr.mxu0 0.0
        %1513 = vmatpush1.xpose.msra.mxu0 0.0
        %1514 = vmatprep.subr.mxu0 0.0
        %1515 = vmatpush1.xpose.msra.mxu0 0.0
        %1516 = vmatprep.subr.mxu0 0.0
        %1517 = vmatpush1.xpose.msra.mxu0 0.0
        %1518 = vmatprep.subr.mxu0 0.0
        %1519 = vmatpush1.xpose.msra.mxu0 0.0
        %1520 = vmatprep.subr.mxu0 0.0
        %1521 = vmatpush1.xpose.msra.mxu0 0.0
        %1522 = vmatprep.subr.mxu0 0.0
        %1523 = vmatpush1.xpose.msra.mxu0 0.0
        %1524 = vmatprep.subr.mxu0 0.0
        %1525 = vmatpush1.xpose.msra.mxu0 0.0
        %1526 = vmatprep.subr.mxu0 0.0
        %1527 = vmatpush1.xpose.msra.mxu0 0.0
        %1528 = vmatprep.subr.mxu0 0.0
        %1529 = vmatpush1.xpose.msra.mxu0 0.0
        %1530 = vmatprep.subr.mxu0 0.0
        %1531 = vmatpush1.xpose.msra.mxu0 0.0
        %1532 = vmatprep.subr.mxu0 0.0
        %1533 = vmatpush1.xpose.msra.mxu0 0.0
        %1534 = vmatprep.subr.mxu0 0.0
        %1535 = vmatpush1.xpose.msra.mxu0 0.0
        %1536 = vmatprep.subr.mxu0 0.0
        %1537 = vmatpush1.xpose.msra.mxu0 0.0
        %1538 = vmatprep.subr.mxu0 0.0
        %1539 = vmatpush1.xpose.msra.mxu0 %v1506
        %1540 = vmatprep.subr.mxu0 0.0
        %1541 = vmatpush2.xpose.msra.mxu0 0.0
        %1542 = vmatprep.subr.mxu0 0.0
        %1543 = vmatpush2.xpose.msra.mxu0 0.0
        %1544 = vmatprep.subr.mxu0 0.0
        %1545 = vmatpush2.xpose.msra.mxu0 0.0
        %1546 = vmatprep.subr.mxu0 0.0
        %1547 = vmatpush2.xpose.msra.mxu0 0.0
        %1548 = vmatprep.subr.mxu0 0.0
        %1549 = vmatpush2.xpose.msra.mxu0 0.0
        %1550 = vmatprep.subr.mxu0 0.0
        %1551 = vmatpush2.xpose.msra.mxu0 0.0
        %1552 = vmatprep.subr.mxu0 0.0
        %1553 = vmatpush2.xpose.msra.mxu0 0.0
        %1554 = vmatprep.subr.mxu0 0.0
        %1555 = vmatpush2.xpose.msra.mxu0 0.0
        %1556 = vmatprep.subr.mxu0 0.0
        %1557 = vmatpush2.xpose.msra.mxu0 0.0
        %1558 = vmatprep.subr.mxu0 0.0
        %1559 = vmatpush2.xpose.msra.mxu0 0.0
        %1560 = vmatprep.subr.mxu0 0.0
        %1561 = vmatpush2.xpose.msra.mxu0 0.0
        %1562 = vmatprep.subr.mxu0 0.0
        %1563 = vmatpush2.xpose.msra.mxu0 0.0
        %1564 = vmatprep.subr.mxu0 0.0
        %1565 = vmatpush2.xpose.msra.mxu0 0.0
        %1566 = vmatprep.subr.mxu0 0.0
        %1567 = vmatpush2.xpose.msra.mxu0 0.0
        %1568 = vmatprep.subr.mxu0 0.0
        %1569 = vmatpush2.xpose.msra.mxu0 0.0
        %1570 = vmatprep.subr.mxu0 0.0
        %1571 = vmatpush2.xpose.msra.mxu0 0.0
        %1572 = vmatprep.mubr.f32.mxu0 0.0
        %1573 = vmatmul.mubr.f32.gmra.mxu0 %v1503
        %v1574 = vpop.f32.mrf.mxu0
        %v1575 = vadd.f32 %v1499, %v1574
        %v1576 = vpop.f32.mrf.mxu0
        %1577 = vdwg.mxu0
        %v1579 = vsel %vm1501, %v792, 0
        %v1582 = vsel %vm1501, %v1072, 0
        %1584 = vmatprep.subr.mxu0 0.0
        %1585 = vmatpush1.xpose.msra.mxu0 0.0
        %1586 = vmatprep.subr.mxu0 0.0
        %1587 = vmatpush1.xpose.msra.mxu0 0.0
        %1588 = vmatprep.subr.mxu0 0.0
        %1589 = vmatpush1.xpose.msra.mxu0 0.0
        %1590 = vmatprep.subr.mxu0 0.0
        %1591 = vmatpush1.xpose.msra.mxu0 0.0
        %1592 = vmatprep.subr.mxu0 0.0
        %1593 = vmatpush1.xpose.msra.mxu0 0.0
        %1594 = vmatprep.subr.mxu0 0.0
        %1595 = vmatpush1.xpose.msra.mxu0 0.0
        %1596 = vmatprep.subr.mxu0 0.0
        %1597 = vmatpush1.xpose.msra.mxu0 0.0
        %1598 = vmatprep.subr.mxu0 0.0
        %1599 = vmatpush1.xpose.msra.mxu0 0.0
        %1600 = vmatprep.subr.mxu0 0.0
        %1601 = vmatpush1.xpose.msra.mxu0 0.0
        %1602 = vmatprep.subr.mxu0 0.0
        %1603 = vmatpush1.xpose.msra.mxu0 0.0
        %1604 = vmatprep.subr.mxu0 0.0
        %1605 = vmatpush1.xpose.msra.mxu0 0.0
        %1606 = vmatprep.subr.mxu0 0.0
        %1607 = vmatpush1.xpose.msra.mxu0 0.0
        %1608 = vmatprep.subr.mxu0 0.0
        %1609 = vmatpush1.xpose.msra.mxu0 0.0
        %1610 = vmatprep.subr.mxu0 0.0
        %1611 = vmatpush1.xpose.msra.mxu0 0.0
        %1612 = vmatprep.subr.mxu0 0.0
        %1613 = vmatpush1.xpose.msra.mxu0 0.0
        %1614 = vmatprep.subr.mxu0 0.0
        %1615 = vmatpush1.xpose.msra.mxu0 %v1582
        %1616 = vmatprep.subr.mxu0 0.0
        %1617 = vmatpush2.xpose.msra.mxu0 0.0
        %1618 = vmatprep.subr.mxu0 0.0
        %1619 = vmatpush2.xpose.msra.mxu0 0.0
        %1620 = vmatprep.subr.mxu0 0.0
        %1621 = vmatpush2.xpose.msra.mxu0 0.0
        %1622 = vmatprep.subr.mxu0 0.0
        %1623 = vmatpush2.xpose.msra.mxu0 0.0
        %1624 = vmatprep.subr.mxu0 0.0
        %1625 = vmatpush2.xpose.msra.mxu0 0.0
        %1626 = vmatprep.subr.mxu0 0.0
        %1627 = vmatpush2.xpose.msra.mxu0 0.0
        %1628 = vmatprep.subr.mxu0 0.0
        %1629 = vmatpush2.xpose.msra.mxu0 0.0
        %1630 = vmatprep.subr.mxu0 0.0
        %1631 = vmatpush2.xpose.msra.mxu0 0.0
        %1632 = vmatprep.subr.mxu0 0.0
        %1633 = vmatpush2.xpose.msra.mxu0 0.0
        %1634 = vmatprep.subr.mxu0 0.0
        %1635 = vmatpush2.xpose.msra.mxu0 0.0
        %1636 = vmatprep.subr.mxu0 0.0
        %1637 = vmatpush2.xpose.msra.mxu0 0.0
        %1638 = vmatprep.subr.mxu0 0.0
        %1639 = vmatpush2.xpose.msra.mxu0 0.0
        %1640 = vmatprep.subr.mxu0 0.0
        %1641 = vmatpush2.xpose.msra.mxu0 0.0
        %1642 = vmatprep.subr.mxu0 0.0
        %1643 = vmatpush2.xpose.msra.mxu0 0.0
        %1644 = vmatprep.subr.mxu0 0.0
        %1645 = vmatpush2.xpose.msra.mxu0 0.0
        %1646 = vmatprep.subr.mxu0 0.0
        %1647 = vmatpush2.xpose.msra.mxu0 0.0
        %1648 = vmatprep.mubr.f32.mxu0 0.0
        %1649 = vmatmul.mubr.f32.gmra.mxu0 %v1579
        %v1650 = vpop.f32.mrf.mxu0
        %v1651 = vadd.f32 %v1499, %v1650
        %v1652 = vpop.f32.mrf.mxu0
        %1653 = vdwg.mxu0
        %v1655 = vsel %vm1501, %v862, 0
        %v1658 = vsel %vm1501, %v1142, 0
        %1660 = vmatprep.subr.mxu0 0.0
        %1661 = vmatpush1.xpose.msra.mxu0 0.0
        %1662 = vmatprep.subr.mxu0 0.0
        %1663 = vmatpush1.xpose.msra.mxu0 0.0
        %1664 = vmatprep.subr.mxu0 0.0
        %1665 = vmatpush1.xpose.msra.mxu0 0.0
        %1666 = vmatprep.subr.mxu0 0.0
        %1667 = vmatpush1.xpose.msra.mxu0 0.0
        %1668 = vmatprep.subr.mxu0 0.0
        %1669 = vmatpush1.xpose.msra.mxu0 0.0
        %1670 = vmatprep.subr.mxu0 0.0
        %1671 = vmatpush1.xpose.msra.mxu0 0.0
        %1672 = vmatprep.subr.mxu0 0.0
        %1673 = vmatpush1.xpose.msra.mxu0 0.0
        %1674 = vmatprep.subr.mxu0 0.0
        %1675 = vmatpush1.xpose.msra.mxu0 0.0
        %1676 = vmatprep.subr.mxu0 0.0
        %1677 = vmatpush1.xpose.msra.mxu0 0.0
        %1678 = vmatprep.subr.mxu0 0.0
        %1679 = vmatpush1.xpose.msra.mxu0 0.0
        %1680 = vmatprep.subr.mxu0 0.0
        %1681 = vmatpush1.xpose.msra.mxu0 0.0
        %1682 = vmatprep.subr.mxu0 0.0
        %1683 = vmatpush1.xpose.msra.mxu0 0.0
        %1684 = vmatprep.subr.mxu0 0.0
        %1685 = vmatpush1.xpose.msra.mxu0 0.0
        %1686 = vmatprep.subr.mxu0 0.0
        %1687 = vmatpush1.xpose.msra.mxu0 0.0
        %1688 = vmatprep.subr.mxu0 0.0
        %1689 = vmatpush1.xpose.msra.mxu0 0.0
        %1690 = vmatprep.subr.mxu0 0.0
        %1691 = vmatpush1.xpose.msra.mxu0 %v1658
        %1692 = vmatprep.subr.mxu0 0.0
        %1693 = vmatpush2.xpose.msra.mxu0 0.0
        %1694 = vmatprep.subr.mxu0 0.0
        %1695 = vmatpush2.xpose.msra.mxu0 0.0
        %1696 = vmatprep.subr.mxu0 0.0
        %1697 = vmatpush2.xpose.msra.mxu0 0.0
        %1698 = vmatprep.subr.mxu0 0.0
        %1699 = vmatpush2.xpose.msra.mxu0 0.0
        %1700 = vmatprep.subr.mxu0 0.0
        %1701 = vmatpush2.xpose.msra.mxu0 0.0
        %1702 = vmatprep.subr.mxu0 0.0
        %1703 = vmatpush2.xpose.msra.mxu0 0.0
        %1704 = vmatprep.subr.mxu0 0.0
        %1705 = vmatpush2.xpose.msra.mxu0 0.0
        %1706 = vmatprep.subr.mxu0 0.0
        %1707 = vmatpush2.xpose.msra.mxu0 0.0
        %1708 = vmatprep.subr.mxu0 0.0
        %1709 = vmatpush2.xpose.msra.mxu0 0.0
        %1710 = vmatprep.subr.mxu0 0.0
        %1711 = vmatpush2.xpose.msra.mxu0 0.0
        %1712 = vmatprep.subr.mxu0 0.0
        %1713 = vmatpush2.xpose.msra.mxu0 0.0
        %1714 = vmatprep.subr.mxu0 0.0
        %1715 = vmatpush2.xpose.msra.mxu0 0.0
        %1716 = vmatprep.subr.mxu0 0.0
        %1717 = vmatpush2.xpose.msra.mxu0 0.0
        %1718 = vmatprep.subr.mxu0 0.0
        %1719 = vmatpush2.xpose.msra.mxu0 0.0
        %1720 = vmatprep.subr.mxu0 0.0
        %1721 = vmatpush2.xpose.msra.mxu0 0.0
        %1722 = vmatprep.subr.mxu0 0.0
        %1723 = vmatpush2.xpose.msra.mxu0 0.0
        %1724 = vmatprep.mubr.f32.mxu0 0.0
        %1725 = vmatmul.mubr.f32.gmra.mxu0 %v1655
        %v1726 = vpop.f32.mrf.mxu0
        %v1727 = vadd.f32 %v1499, %v1726
        %v1728 = vpop.f32.mrf.mxu0
        %1729 = vdwg.mxu0
        %v1731 = vsel %vm1501, %v932, 0
        %v1734 = vsel %vm1501, %v1212, 0
        %1736 = vmatprep.subr.mxu0 0.0
        %1737 = vmatpush1.xpose.msra.mxu0 0.0
        %1738 = vmatprep.subr.mxu0 0.0
        %1739 = vmatpush1.xpose.msra.mxu0 0.0
        %1740 = vmatprep.subr.mxu0 0.0
        %1741 = vmatpush1.xpose.msra.mxu0 0.0
        %1742 = vmatprep.subr.mxu0 0.0
        %1743 = vmatpush1.xpose.msra.mxu0 0.0
        %1744 = vmatprep.subr.mxu0 0.0
        %1745 = vmatpush1.xpose.msra.mxu0 0.0
        %1746 = vmatprep.subr.mxu0 0.0
        %1747 = vmatpush1.xpose.msra.mxu0 0.0
        %1748 = vmatprep.subr.mxu0 0.0
        %1749 = vmatpush1.xpose.msra.mxu0 0.0
        %1750 = vmatprep.subr.mxu0 0.0
        %1751 = vmatpush1.xpose.msra.mxu0 0.0
        %1752 = vmatprep.subr.mxu0 0.0
        %1753 = vmatpush1.xpose.msra.mxu0 0.0
        %1754 = vmatprep.subr.mxu0 0.0
        %1755 = vmatpush1.xpose.msra.mxu0 0.0
        %1756 = vmatprep.subr.mxu0 0.0
        %1757 = vmatpush1.xpose.msra.mxu0 0.0
        %1758 = vmatprep.subr.mxu0 0.0
        %1759 = vmatpush1.xpose.msra.mxu0 0.0
        %1760 = vmatprep.subr.mxu0 0.0
        %1761 = vmatpush1.xpose.msra.mxu0 0.0
        %1762 = vmatprep.subr.mxu0 0.0
        %1763 = vmatpush1.xpose.msra.mxu0 0.0
        %1764 = vmatprep.subr.mxu0 0.0
        %1765 = vmatpush1.xpose.msra.mxu0 0.0
        %1766 = vmatprep.subr.mxu0 0.0
        %1767 = vmatpush1.xpose.msra.mxu0 %v1734
        %1768 = vmatprep.subr.mxu0 0.0
        %1769 = vmatpush2.xpose.msra.mxu0 0.0
        %1770 = vmatprep.subr.mxu0 0.0
        %1771 = vmatpush2.xpose.msra.mxu0 0.0
        %1772 = vmatprep.subr.mxu0 0.0
        %1773 = vmatpush2.xpose.msra.mxu0 0.0
        %1774 = vmatprep.subr.mxu0 0.0
        %1775 = vmatpush2.xpose.msra.mxu0 0.0
        %1776 = vmatprep.subr.mxu0 0.0
        %1777 = vmatpush2.xpose.msra.mxu0 0.0
        %1778 = vmatprep.subr.mxu0 0.0
        %1779 = vmatpush2.xpose.msra.mxu0 0.0
        %1780 = vmatprep.subr.mxu0 0.0
        %1781 = vmatpush2.xpose.msra.mxu0 0.0
        %1782 = vmatprep.subr.mxu0 0.0
        %1783 = vmatpush2.xpose.msra.mxu0 0.0
        %1784 = vmatprep.subr.mxu0 0.0
        %1785 = vmatpush2.xpose.msra.mxu0 0.0
        %1786 = vmatprep.subr.mxu0 0.0
        %1787 = vmatpush2.xpose.msra.mxu0 0.0
        %1788 = vmatprep.subr.mxu0 0.0
        %1789 = vmatpush2.xpose.msra.mxu0 0.0
        %1790 = vmatprep.subr.mxu0 0.0
        %1791 = vmatpush2.xpose.msra.mxu0 0.0
        %1792 = vmatprep.subr.mxu0 0.0
        %1793 = vmatpush2.xpose.msra.mxu0 0.0
        %1794 = vmatprep.subr.mxu0 0.0
        %1795 = vmatpush2.xpose.msra.mxu0 0.0
        %1796 = vmatprep.subr.mxu0 0.0
        %1797 = vmatpush2.xpose.msra.mxu0 0.0
        %1798 = vmatprep.subr.mxu0 0.0
        %1799 = vmatpush2.xpose.msra.mxu0 0.0
        %1800 = vmatprep.mubr.f32.mxu0 0.0
        %1801 = vmatmul.mubr.f32.gmra.mxu0 %v1731
        %v1802 = vpop.f32.mrf.mxu0
        %v1803 = vadd.f32 %v1499, %v1802
        %v1804 = vpop.f32.mrf.mxu0
        %1805 = vdwg.mxu0
        %v1806 = vsel %vm1501, %v1575, -inf
        %1807 = vmax.xlane.f32.xlu0 %v1806
        %v1808 = vpop.xlane.xlu0 %1807
        %v1809 = vsel %vm1501, %v1651, -inf
        %1810 = vmax.xlane.f32.xlu0 %v1809
        %v1811 = vpop.xlane.xlu0 %1810
        %v1812 = vsel %vm1501, %v1727, -inf
        %1813 = vmax.xlane.f32.xlu0 %v1812
        %v1814 = vpop.xlane.xlu0 %1813
        %v1815 = vsel %vm1501, %v1803, -inf
        %1816 = vmax.xlane.f32.xlu0 %v1815
        %v1817 = vpop.xlane.xlu0 %1816
        %v1818 = vsub.f32 %v1575, %v1808
        %v1819 = vsub.f32 %v1651, %v1811
        %v1820 = vsub.f32 %v1727, %v1814
        %v1821 = vsub.f32 %v1803, %v1817
        %v1822 = vmul.f32 %v1818, 1.442695
        %v1823 = vpow.pop %v1822
        %v1824 = vmul.f32 %v1819, 1.442695
        %v1825 = vpow.pop %v1824
        %v1826 = vmul.f32 %v1820, 1.442695
        %v1827 = vpow.pop %v1826
        %v1828 = vmul.f32 %v1821, 1.442695
        %v1829 = vpow.pop %v1828
        %v1830 = vsel %vm1501, %v1823, 0.0
        %1831 = vadd.xlane.f32.xlu0 %v1830
        %v1832 = vpop.xlane.xlu0 %1831
        %v1833 = vsel %vm1501, %v1825, 0.0
        %1834 = vadd.xlane.f32.xlu0 %v1833
        %v1835 = vpop.xlane.xlu0 %1834
        %v1836 = vsel %vm1501, %v1827, 0.0
        %1837 = vadd.xlane.f32.xlu0 %v1836
        %v1838 = vpop.xlane.xlu0 %1837
        %v1839 = vsel %vm1501, %v1829, 0.0
        %1840 = vadd.xlane.f32.xlu0 %v1839
        %v1841 = vpop.xlane.xlu0 %1840
        %v1842 = vrcp.pop %v1832
        %v1843 = vrcp.pop %v1835
        %v1844 = vrcp.pop %v1838
        %v1845 = vrcp.pop %v1841
        %v1846 = vmul.f32 %v1823, %v1842
        %v1847 = vmul.f32 %v1825, %v1843
        %v1848 = vmul.f32 %v1827, %v1844
        %v1849 = vmul.f32 %v1829, %v1845
        %v1851 = vsel %vm1501, %v1846, 0
        %1853 = vmatprep.subr.mxu0 0.0
        %1854 = vmatpush1.msra.mxu0 0.0
        %1855 = vmatprep.subr.mxu0 0.0
        %1856 = vmatpush1.msra.mxu0 0.0
        %1857 = vmatprep.subr.mxu0 0.0
        %1858 = vmatpush1.msra.mxu0 0.0
        %1859 = vmatprep.subr.mxu0 0.0
        %1860 = vmatpush1.msra.mxu0 0.0
        %1861 = vmatprep.subr.mxu0 0.0
        %1862 = vmatpush1.msra.mxu0 0.0
        %1863 = vmatprep.subr.mxu0 0.0
        %1864 = vmatpush1.msra.mxu0 0.0
        %1865 = vmatprep.subr.mxu0 0.0
        %1866 = vmatpush1.msra.mxu0 0.0
        %1867 = vmatprep.subr.mxu0 0.0
        %1868 = vmatpush1.msra.mxu0 0.0
        %1869 = vmatprep.subr.mxu0 0.0
        %1870 = vmatpush1.msra.mxu0 0.0
        %1871 = vmatprep.subr.mxu0 0.0
        %1872 = vmatpush1.msra.mxu0 0.0
        %1873 = vmatprep.subr.mxu0 0.0
        %1874 = vmatpush1.msra.mxu0 0.0
        %1875 = vmatprep.subr.mxu0 0.0
        %1876 = vmatpush1.msra.mxu0 0.0
        %1877 = vmatprep.subr.mxu0 0.0
        %1878 = vmatpush1.msra.mxu0 0.0
        %1879 = vmatprep.subr.mxu0 0.0
        %1880 = vmatpush1.msra.mxu0 0.0
        %1881 = vmatprep.subr.mxu0 0.0
        %1882 = vmatpush1.msra.mxu0 0.0
        %1883 = vmatprep.subr.mxu0 0.0
        %1884 = vmatpush1.msra.mxu0 %v1282
        %1885 = vmatprep.subr.mxu0 0.0
        %1886 = vmatpush2.msra.mxu0 0.0
        %1887 = vmatprep.subr.mxu0 0.0
        %1888 = vmatpush2.msra.mxu0 0.0
        %1889 = vmatprep.subr.mxu0 0.0
        %1890 = vmatpush2.msra.mxu0 0.0
        %1891 = vmatprep.subr.mxu0 0.0
        %1892 = vmatpush2.msra.mxu0 0.0
        %1893 = vmatprep.subr.mxu0 0.0
        %1894 = vmatpush2.msra.mxu0 0.0
        %1895 = vmatprep.subr.mxu0 0.0
        %1896 = vmatpush2.msra.mxu0 0.0
        %1897 = vmatprep.subr.mxu0 0.0
        %1898 = vmatpush2.msra.mxu0 0.0
        %1899 = vmatprep.subr.mxu0 0.0
        %1900 = vmatpush2.msra.mxu0 0.0
        %1901 = vmatprep.subr.mxu0 0.0
        %1902 = vmatpush2.msra.mxu0 0.0
        %1903 = vmatprep.subr.mxu0 0.0
        %1904 = vmatpush2.msra.mxu0 0.0
        %1905 = vmatprep.subr.mxu0 0.0
        %1906 = vmatpush2.msra.mxu0 0.0
        %1907 = vmatprep.subr.mxu0 0.0
        %1908 = vmatpush2.msra.mxu0 0.0
        %1909 = vmatprep.subr.mxu0 0.0
        %1910 = vmatpush2.msra.mxu0 0.0
        %1911 = vmatprep.subr.mxu0 0.0
        %1912 = vmatpush2.msra.mxu0 0.0
        %1913 = vmatprep.subr.mxu0 0.0
        %1914 = vmatpush2.msra.mxu0 0.0
        %1915 = vmatprep.subr.mxu0 0.0
        %1916 = vmatpush2.msra.mxu0 0.0
        %1917 = vmatprep.mubr.f32.mxu0 0.0
        %1918 = vmatmul.mubr.f32.gmra.mxu0 %v1851
        %v1919 = vpop.f32.mrf.mxu0
        %v1920 = vadd.f32 0.0, %v1919
        %v1921 = vpop.f32.mrf.mxu0
        %1922 = vdwg.mxu0
        %v1924 = vsel %vm1501, %v1847, 0
        %1926 = vmatprep.subr.mxu0 0.0
        %1927 = vmatpush1.msra.mxu0 0.0
        %1928 = vmatprep.subr.mxu0 0.0
        %1929 = vmatpush1.msra.mxu0 0.0
        %1930 = vmatprep.subr.mxu0 0.0
        %1931 = vmatpush1.msra.mxu0 0.0
        %1932 = vmatprep.subr.mxu0 0.0
        %1933 = vmatpush1.msra.mxu0 0.0
        %1934 = vmatprep.subr.mxu0 0.0
        %1935 = vmatpush1.msra.mxu0 0.0
        %1936 = vmatprep.subr.mxu0 0.0
        %1937 = vmatpush1.msra.mxu0 0.0
        %1938 = vmatprep.subr.mxu0 0.0
        %1939 = vmatpush1.msra.mxu0 0.0
        %1940 = vmatprep.subr.mxu0 0.0
        %1941 = vmatpush1.msra.mxu0 0.0
        %1942 = vmatprep.subr.mxu0 0.0
        %1943 = vmatpush1.msra.mxu0 0.0
        %1944 = vmatprep.subr.mxu0 0.0
        %1945 = vmatpush1.msra.mxu0 0.0
        %1946 = vmatprep.subr.mxu0 0.0
        %1947 = vmatpush1.msra.mxu0 0.0
        %1948 = vmatprep.subr.mxu0 0.0
        %1949 = vmatpush1.msra.mxu0 0.0
        %1950 = vmatprep.subr.mxu0 0.0
        %1951 = vmatpush1.msra.mxu0 0.0
        %1952 = vmatprep.subr.mxu0 0.0
        %1953 = vmatpush1.msra.mxu0 0.0
        %1954 = vmatprep.subr.mxu0 0.0
        %1955 = vmatpush1.msra.mxu0 0.0
        %1956 = vmatprep.subr.mxu0 0.0
        %1957 = vmatpush1.msra.mxu0 %v1352
        %1958 = vmatprep.subr.mxu0 0.0
        %1959 = vmatpush2.msra.mxu0 0.0
        %1960 = vmatprep.subr.mxu0 0.0
        %1961 = vmatpush2.msra.mxu0 0.0
        %1962 = vmatprep.subr.mxu0 0.0
        %1963 = vmatpush2.msra.mxu0 0.0
        %1964 = vmatprep.subr.mxu0 0.0
        %1965 = vmatpush2.msra.mxu0 0.0
        %1966 = vmatprep.subr.mxu0 0.0
        %1967 = vmatpush2.msra.mxu0 0.0
        %1968 = vmatprep.subr.mxu0 0.0
        %1969 = vmatpush2.msra.mxu0 0.0
        %1970 = vmatprep.subr.mxu0 0.0
        %1971 = vmatpush2.msra.mxu0 0.0
        %1972 = vmatprep.subr.mxu0 0.0
        %1973 = vmatpush2.msra.mxu0 0.0
        %1974 = vmatprep.subr.mxu0 0.0
        %1975 = vmatpush2.msra.mxu0 0.0
        %1976 = vmatprep.subr.mxu0 0.0
        %1977 = vmatpush2.msra.mxu0 0.0
        %1978 = vmatprep.subr.mxu0 0.0
        %1979 = vmatpush2.msra.mxu0 0.0
        %1980 = vmatprep.subr.mxu0 0.0
        %1981 = vmatpush2.msra.mxu0 0.0
        %1982 = vmatprep.subr.mxu0 0.0
        %1983 = vmatpush2.msra.mxu0 0.0
        %1984 = vmatprep.subr.mxu0 0.0
        %1985 = vmatpush2.msra.mxu0 0.0
        %1986 = vmatprep.subr.mxu0 0.0
        %1987 = vmatpush2.msra.mxu0 0.0
        %1988 = vmatprep.subr.mxu0 0.0
        %1989 = vmatpush2.msra.mxu0 0.0
        %1990 = vmatprep.mubr.f32.mxu0 0.0
        %1991 = vmatmul.mubr.f32.gmra.mxu0 %v1924
        %v1992 = vpop.f32.mrf.mxu0
        %v1993 = vadd.f32 0.0, %v1992
        %v1994 = vpop.f32.mrf.mxu0
        %1995 = vdwg.mxu0
        %v1997 = vsel %vm1501, %v1848, 0
        %1999 = vmatprep.subr.mxu0 0.0
        %2000 = vmatpush1.msra.mxu0 0.0
        %2001 = vmatprep.subr.mxu0 0.0
        %2002 = vmatpush1.msra.mxu0 0.0
        %2003 = vmatprep.subr.mxu0 0.0
        %2004 = vmatpush1.msra.mxu0 0.0
        %2005 = vmatprep.subr.mxu0 0.0
        %2006 = vmatpush1.msra.mxu0 0.0
        %2007 = vmatprep.subr.mxu0 0.0
        %2008 = vmatpush1.msra.mxu0 0.0
        %2009 = vmatprep.subr.mxu0 0.0
        %2010 = vmatpush1.msra.mxu0 0.0
        %2011 = vmatprep.subr.mxu0 0.0
        %2012 = vmatpush1.msra.mxu0 0.0
        %2013 = vmatprep.subr.mxu0 0.0
        %2014 = vmatpush1.msra.mxu0 0.0
        %2015 = vmatprep.subr.mxu0 0.0
        %2016 = vmatpush1.msra.mxu0 0.0
        %2017 = vmatprep.subr.mxu0 0.0
        %2018 = vmatpush1.msra.mxu0 0.0
        %2019 = vmatprep.subr.mxu0 0.0
        %2020 = vmatpush1.msra.mxu0 0.0
        %2021 = vmatprep.subr.mxu0 0.0
        %2022 = vmatpush1.msra.mxu0 0.0
        %2023 = vmatprep.subr.mxu0 0.0
        %2024 = vmatpush1.msra.mxu0 0.0
        %2025 = vmatprep.subr.mxu0 0.0
        %2026 = vmatpush1.msra.mxu0 0.0
        %2027 = vmatprep.subr.mxu0 0.0
        %2028 = vmatpush1.msra.mxu0 0.0
        %2029 = vmatprep.subr.mxu0 0.0
        %2030 = vmatpush1.msra.mxu0 %v1422
        %2031 = vmatprep.subr.mxu0 0.0
        %2032 = vmatpush2.msra.mxu0 0.0
        %2033 = vmatprep.subr.mxu0 0.0
        %2034 = vmatpush2.msra.mxu0 0.0
        %2035 = vmatprep.subr.mxu0 0.0
        %2036 = vmatpush2.msra.mxu0 0.0
        %2037 = vmatprep.subr.mxu0 0.0
        %2038 = vmatpush2.msra.mxu0 0.0
        %2039 = vmatprep.subr.mxu0 0.0
        %2040 = vmatpush2.msra.mxu0 0.0
        %2041 = vmatprep.subr.mxu0 0.0
        %2042 = vmatpush2.msra.mxu0 0.0
        %2043 = vmatprep.subr.mxu0 0.0
        %2044 = vmatpush2.msra.mxu0 0.0
        %2045 = vmatprep.subr.mxu0 0.0
        %2046 = vmatpush2.msra.mxu0 0.0
        %2047 = vmatprep.subr.mxu0 0.0
        %2048 = vmatpush2.msra.mxu0 0.0
        %2049 = vmatprep.subr.mxu0 0.0
        %2050 = vmatpush2.msra.mxu0 0.0
        %2051 = vmatprep.subr.mxu0 0.0
        %2052 = vmatpush2.msra.mxu0 0.0
        %2053 = vmatprep.subr.mxu0 0.0
        %2054 = vmatpush2.msra.mxu0 0.0
        %2055 = vmatprep.subr.mxu0 0.0
        %2056 = vmatpush2.msra.mxu0 0.0
        %2057 = vmatprep.subr.mxu0 0.0
        %2058 = vmatpush2.msra.mxu0 0.0
        %2059 = vmatprep.subr.mxu0 0.0
        %2060 = vmatpush2.msra.mxu0 0.0
        %2061 = vmatprep.subr.mxu0 0.0
        %2062 = vmatpush2.msra.mxu0 0.0
        %2063 = vmatprep.mubr.f32.mxu0 0.0
        %2064 = vmatmul.mubr.f32.gmra.mxu0 %v1997
        %v2065 = vpop.f32.mrf.mxu0
        %v2066 = vadd.f32 0.0, %v2065
        %v2067 = vpop.f32.mrf.mxu0
        %2068 = vdwg.mxu0
        %v2070 = vsel %vm1501, %v1849, 0
        %2072 = vmatprep.subr.mxu0 0.0
        %2073 = vmatpush1.msra.mxu0 0.0
        %2074 = vmatprep.subr.mxu0 0.0
        %2075 = vmatpush1.msra.mxu0 0.0
        %2076 = vmatprep.subr.mxu0 0.0
        %2077 = vmatpush1.msra.mxu0 0.0
        %2078 = vmatprep.subr.mxu0 0.0
        %2079 = vmatpush1.msra.mxu0 0.0
        %2080 = vmatprep.subr.mxu0 0.0
        %2081 = vmatpush1.msra.mxu0 0.0
        %2082 = vmatprep.subr.mxu0 0.0
        %2083 = vmatpush1.msra.mxu0 0.0
        %2084 = vmatprep.subr.mxu0 0.0
        %2085 = vmatpush1.msra.mxu0 0.0
        %2086 = vmatprep.subr.mxu0 0.0
        %2087 = vmatpush1.msra.mxu0 0.0
        %2088 = vmatprep.subr.mxu0 0.0
        %2089 = vmatpush1.msra.mxu0 0.0
        %2090 = vmatprep.subr.mxu0 0.0
        %2091 = vmatpush1.msra.mxu0 0.0
        %2092 = vmatprep.subr.mxu0 0.0
        %2093 = vmatpush1.msra.mxu0 0.0
        %2094 = vmatprep.subr.mxu0 0.0
        %2095 = vmatpush1.msra.mxu0 0.0
        %2096 = vmatprep.subr.mxu0 0.0
        %2097 = vmatpush1.msra.mxu0 0.0
        %2098 = vmatprep.subr.mxu0 0.0
        %2099 = vmatpush1.msra.mxu0 0.0
        %2100 = vmatprep.subr.mxu0 0.0
        %2101 = vmatpush1.msra.mxu0 0.0
        %2102 = vmatprep.subr.mxu0 0.0
        %2103 = vmatpush1.msra.mxu0 %v1492
        %2104 = vmatprep.subr.mxu0 0.0
        %2105 = vmatpush2.msra.mxu0 0.0
        %2106 = vmatprep.subr.mxu0 0.0
        %2107 = vmatpush2.msra.mxu0 0.0
        %2108 = vmatprep.subr.mxu0 0.0
        %2109 = vmatpush2.msra.mxu0 0.0
        %2110 = vmatprep.subr.mxu0 0.0
        %2111 = vmatpush2.msra.mxu0 0.0
        %2112 = vmatprep.subr.mxu0 0.0
        %2113 = vmatpush2.msra.mxu0 0.0
        %2114 = vmatprep.subr.mxu0 0.0
        %2115 = vmatpush2.msra.mxu0 0.0
        %2116 = vmatprep.subr.mxu0 0.0
        %2117 = vmatpush2.msra.mxu0 0.0
        %2118 = vmatprep.subr.mxu0 0.0
        %2119 = vmatpush2.msra.mxu0 0.0
        %2120 = vmatprep.subr.mxu0 0.0
        %2121 = vmatpush2.msra.mxu0 0.0
        %2122 = vmatprep.subr.mxu0 0.0
        %2123 = vmatpush2.msra.mxu0 0.0
        %2124 = vmatprep.subr.mxu0 0.0
        %2125 = vmatpush2.msra.mxu0 0.0
        %2126 = vmatprep.subr.mxu0 0.0
        %2127 = vmatpush2.msra.mxu0 0.0
        %2128 = vmatprep.subr.mxu0 0.0
        %2129 = vmatpush2.msra.mxu0 0.0
        %2130 = vmatprep.subr.mxu0 0.0
        %2131 = vmatpush2.msra.mxu0 0.0
        %2132 = vmatprep.subr.mxu0 0.0
        %2133 = vmatpush2.msra.mxu0 0.0
        %2134 = vmatprep.subr.mxu0 0.0
        %2135 = vmatpush2.msra.mxu0 0.0
        %2136 = vmatprep.mubr.f32.mxu0 0.0
        %2137 = vmatmul.mubr.f32.gmra.mxu0 %v2070
        %v2138 = vpop.f32.mrf.mxu0
        %v2139 = vadd.f32 0.0, %v2138
        %v2140 = vpop.f32.mrf.mxu0
        %2141 = vdwg.mxu0
        %v2142 = vld [vmem:[%s6] sm:$0xff]
        %v2143 = vld [vmem:[%s6 + $0x8] sm:$0xff]
        %v2144 = vld [vmem:[%s6 + $0x10] sm:$0xff]
        %v2145 = vld [vmem:[%s6 + $0x18] sm:$0xff]
        %v2147 = vsel %vm1501, %v1920, 0
        %2149 = vmatprep.subr.mxu0 0.0
        %2150 = vmatpush1.msra.mxu0 0.0
        %2151 = vmatprep.subr.mxu0 0.0
        %2152 = vmatpush1.msra.mxu0 0.0
        %2153 = vmatprep.subr.mxu0 0.0
        %2154 = vmatpush1.msra.mxu0 0.0
        %2155 = vmatprep.subr.mxu0 0.0
        %2156 = vmatpush1.msra.mxu0 0.0
        %2157 = vmatprep.subr.mxu0 0.0
        %2158 = vmatpush1.msra.mxu0 0.0
        %2159 = vmatprep.subr.mxu0 0.0
        %2160 = vmatpush1.msra.mxu0 0.0
        %2161 = vmatprep.subr.mxu0 0.0
        %2162 = vmatpush1.msra.mxu0 0.0
        %2163 = vmatprep.subr.mxu0 0.0
        %2164 = vmatpush1.msra.mxu0 0.0
        %2165 = vmatprep.subr.mxu0 0.0
        %2166 = vmatpush1.msra.mxu0 0.0
        %2167 = vmatprep.subr.mxu0 0.0
        %2168 = vmatpush1.msra.mxu0 0.0
        %2169 = vmatprep.subr.mxu0 0.0
        %2170 = vmatpush1.msra.mxu0 0.0
        %2171 = vmatprep.subr.mxu0 0.0
        %2172 = vmatpush1.msra.mxu0 0.0
        %2173 = vmatprep.subr.mxu0 0.0
        %2174 = vmatpush1.msra.mxu0 0.0
        %2175 = vmatprep.subr.mxu0 0.0
        %2176 = vmatpush1.msra.mxu0 0.0
        %2177 = vmatprep.subr.mxu0 0.0
        %2178 = vmatpush1.msra.mxu0 0.0
        %2179 = vmatprep.subr.mxu0 0.0
        %2180 = vmatpush1.msra.mxu0 %v2142
        %2181 = vmatprep.subr.mxu0 0.0
        %2182 = vmatpush2.msra.mxu0 0.0
        %2183 = vmatprep.subr.mxu0 0.0
        %2184 = vmatpush2.msra.mxu0 0.0
        %2185 = vmatprep.subr.mxu0 0.0
        %2186 = vmatpush2.msra.mxu0 0.0
        %2187 = vmatprep.subr.mxu0 0.0
        %2188 = vmatpush2.msra.mxu0 0.0
        %2189 = vmatprep.subr.mxu0 0.0
        %2190 = vmatpush2.msra.mxu0 0.0
        %2191 = vmatprep.subr.mxu0 0.0
        %2192 = vmatpush2.msra.mxu0 0.0
        %2193 = vmatprep.subr.mxu0 0.0
        %2194 = vmatpush2.msra.mxu0 0.0
        %2195 = vmatprep.subr.mxu0 0.0
        %2196 = vmatpush2.msra.mxu0 0.0
        %2197 = vmatprep.subr.mxu0 0.0
        %2198 = vmatpush2.msra.mxu0 0.0
        %2199 = vmatprep.subr.mxu0 0.0
        %2200 = vmatpush2.msra.mxu0 0.0
        %2201 = vmatprep.subr.mxu0 0.0
        %2202 = vmatpush2.msra.mxu0 0.0
        %2203 = vmatprep.subr.mxu0 0.0
        %2204 = vmatpush2.msra.mxu0 0.0
        %2205 = vmatprep.subr.mxu0 0.0
        %2206 = vmatpush2.msra.mxu0 0.0
        %2207 = vmatprep.subr.mxu0 0.0
        %2208 = vmatpush2.msra.mxu0 0.0
        %2209 = vmatprep.subr.mxu0 0.0
        %2210 = vmatpush2.msra.mxu0 0.0
        %2211 = vmatprep.subr.mxu0 0.0
        %2212 = vmatpush2.msra.mxu0 0.0
        %2213 = vmatprep.mubr.f32.mxu0 0.0
        %2214 = vmatmul.mubr.f32.gmra.mxu0 %v2147
        %v2215 = vpop.f32.mrf.mxu0
        %v2216 = vadd.f32 0.0, %v2215
        %v2217 = vpop.f32.mrf.mxu0
        %2218 = vdwg.mxu0
        %v2220 = vsel %vm1501, %v1993, 0
        %2222 = vmatprep.subr.mxu0 0.0
        %2223 = vmatpush1.msra.mxu0 0.0
        %2224 = vmatprep.subr.mxu0 0.0
        %2225 = vmatpush1.msra.mxu0 0.0
        %2226 = vmatprep.subr.mxu0 0.0
        %2227 = vmatpush1.msra.mxu0 0.0
        %2228 = vmatprep.subr.mxu0 0.0
        %2229 = vmatpush1.msra.mxu0 0.0
        %2230 = vmatprep.subr.mxu0 0.0
        %2231 = vmatpush1.msra.mxu0 0.0
        %2232 = vmatprep.subr.mxu0 0.0
        %2233 = vmatpush1.msra.mxu0 0.0
        %2234 = vmatprep.subr.mxu0 0.0
        %2235 = vmatpush1.msra.mxu0 0.0
        %2236 = vmatprep.subr.mxu0 0.0
        %2237 = vmatpush1.msra.mxu0 0.0
        %2238 = vmatprep.subr.mxu0 0.0
        %2239 = vmatpush1.msra.mxu0 0.0
        %2240 = vmatprep.subr.mxu0 0.0
        %2241 = vmatpush1.msra.mxu0 0.0
        %2242 = vmatprep.subr.mxu0 0.0
        %2243 = vmatpush1.msra.mxu0 0.0
        %2244 = vmatprep.subr.mxu0 0.0
        %2245 = vmatpush1.msra.mxu0 0.0
        %2246 = vmatprep.subr.mxu0 0.0
        %2247 = vmatpush1.msra.mxu0 0.0
        %2248 = vmatprep.subr.mxu0 0.0
        %2249 = vmatpush1.msra.mxu0 0.0
        %2250 = vmatprep.subr.mxu0 0.0
        %2251 = vmatpush1.msra.mxu0 0.0
        %2252 = vmatprep.subr.mxu0 0.0
        %2253 = vmatpush1.msra.mxu0 %v2143
        %2254 = vmatprep.subr.mxu0 0.0
        %2255 = vmatpush2.msra.mxu0 0.0
        %2256 = vmatprep.subr.mxu0 0.0
        %2257 = vmatpush2.msra.mxu0 0.0
        %2258 = vmatprep.subr.mxu0 0.0
        %2259 = vmatpush2.msra.mxu0 0.0
        %2260 = vmatprep.subr.mxu0 0.0
        %2261 = vmatpush2.msra.mxu0 0.0
        %2262 = vmatprep.subr.mxu0 0.0
        %2263 = vmatpush2.msra.mxu0 0.0
        %2264 = vmatprep.subr.mxu0 0.0
        %2265 = vmatpush2.msra.mxu0 0.0
        %2266 = vmatprep.subr.mxu0 0.0
        %2267 = vmatpush2.msra.mxu0 0.0
        %2268 = vmatprep.subr.mxu0 0.0
        %2269 = vmatpush2.msra.mxu0 0.0
        %2270 = vmatprep.subr.mxu0 0.0
        %2271 = vmatpush2.msra.mxu0 0.0
        %2272 = vmatprep.subr.mxu0 0.0
        %2273 = vmatpush2.msra.mxu0 0.0
        %2274 = vmatprep.subr.mxu0 0.0
        %2275 = vmatpush2.msra.mxu0 0.0
        %2276 = vmatprep.subr.mxu0 0.0
        %2277 = vmatpush2.msra.mxu0 0.0
        %2278 = vmatprep.subr.mxu0 0.0
        %2279 = vmatpush2.msra.mxu0 0.0
        %2280 = vmatprep.subr.mxu0 0.0
        %2281 = vmatpush2.msra.mxu0 0.0
        %2282 = vmatprep.subr.mxu0 0.0
        %2283 = vmatpush2.msra.mxu0 0.0
        %2284 = vmatprep.subr.mxu0 0.0
        %2285 = vmatpush2.msra.mxu0 0.0
        %2286 = vmatprep.mubr.f32.mxu0 0.0
        %2287 = vmatmul.mubr.f32.gmra.mxu0 %v2220
        %v2288 = vpop.f32.mrf.mxu0
        %v2289 = vadd.f32 0.0, %v2288
        %v2290 = vpop.f32.mrf.mxu0
        %2291 = vdwg.mxu0
        %v2293 = vsel %vm1501, %v2066, 0
        %2295 = vmatprep.subr.mxu0 0.0
        %2296 = vmatpush1.msra.mxu0 0.0
        %2297 = vmatprep.subr.mxu0 0.0
        %2298 = vmatpush1.msra.mxu0 0.0
        %2299 = vmatprep.subr.mxu0 0.0
        %2300 = vmatpush1.msra.mxu0 0.0
        %2301 = vmatprep.subr.mxu0 0.0
        %2302 = vmatpush1.msra.mxu0 0.0
        %2303 = vmatprep.subr.mxu0 0.0
        %2304 = vmatpush1.msra.mxu0 0.0
        %2305 = vmatprep.subr.mxu0 0.0
        %2306 = vmatpush1.msra.mxu0 0.0
        %2307 = vmatprep.subr.mxu0 0.0
        %2308 = vmatpush1.msra.mxu0 0.0
        %2309 = vmatprep.subr.mxu0 0.0
        %2310 = vmatpush1.msra.mxu0 0.0
        %2311 = vmatprep.subr.mxu0 0.0
        %2312 = vmatpush1.msra.mxu0 0.0
        %2313 = vmatprep.subr.mxu0 0.0
        %2314 = vmatpush1.msra.mxu0 0.0
        %2315 = vmatprep.subr.mxu0 0.0
        %2316 = vmatpush1.msra.mxu0 0.0
        %2317 = vmatprep.subr.mxu0 0.0
        %2318 = vmatpush1.msra.mxu0 0.0
        %2319 = vmatprep.subr.mxu0 0.0
        %2320 = vmatpush1.msra.mxu0 0.0
        %2321 = vmatprep.subr.mxu0 0.0
        %2322 = vmatpush1.msra.mxu0 0.0
        %2323 = vmatprep.subr.mxu0 0.0
        %2324 = vmatpush1.msra.mxu0 0.0
        %2325 = vmatprep.subr.mxu0 0.0
        %2326 = vmatpush1.msra.mxu0 %v2144
        %2327 = vmatprep.subr.mxu0 0.0
        %2328 = vmatpush2.msra.mxu0 0.0
        %2329 = vmatprep.subr.mxu0 0.0
        %2330 = vmatpush2.msra.mxu0 0.0
        %2331 = vmatprep.subr.mxu0 0.0
        %2332 = vmatpush2.msra.mxu0 0.0
        %2333 = vmatprep.subr.mxu0 0.0
        %2334 = vmatpush2.msra.mxu0 0.0
        %2335 = vmatprep.subr.mxu0 0.0
        %2336 = vmatpush2.msra.mxu0 0.0
        %2337 = vmatprep.subr.mxu0 0.0
        %2338 = vmatpush2.msra.mxu0 0.0
        %2339 = vmatprep.subr.mxu0 0.0
        %2340 = vmatpush2.msra.mxu0 0.0
        %2341 = vmatprep.subr.mxu0 0.0
        %2342 = vmatpush2.msra.mxu0 0.0
        %2343 = vmatprep.subr.mxu0 0.0
        %2344 = vmatpush2.msra.mxu0 0.0
        %2345 = vmatprep.subr.mxu0 0.0
        %2346 = vmatpush2.msra.mxu0 0.0
        %2347 = vmatprep.subr.mxu0 0.0
        %2348 = vmatpush2.msra.mxu0 0.0
        %2349 = vmatprep.subr.mxu0 0.0
        %2350 = vmatpush2.msra.mxu0 0.0
        %2351 = vmatprep.subr.mxu0 0.0
        %2352 = vmatpush2.msra.mxu0 0.0
        %2353 = vmatprep.subr.mxu0 0.0
        %2354 = vmatpush2.msra.mxu0 0.0
        %2355 = vmatprep.subr.mxu0 0.0
        %2356 = vmatpush2.msra.mxu0 0.0
        %2357 = vmatprep.subr.mxu0 0.0
        %2358 = vmatpush2.msra.mxu0 0.0
        %2359 = vmatprep.mubr.f32.mxu0 0.0
        %2360 = vmatmul.mubr.f32.gmra.mxu0 %v2293
        %v2361 = vpop.f32.mrf.mxu0
        %v2362 = vadd.f32 0.0, %v2361
        %v2363 = vpop.f32.mrf.mxu0
        %2364 = vdwg.mxu0
        %v2366 = vsel %vm1501, %v2139, 0
        %2368 = vmatprep.subr.mxu0 0.0
        %2369 = vmatpush1.msra.mxu0 0.0
        %2370 = vmatprep.subr.mxu0 0.0
        %2371 = vmatpush1.msra.mxu0 0.0
        %2372 = vmatprep.subr.mxu0 0.0
        %2373 = vmatpush1.msra.mxu0 0.0
        %2374 = vmatprep.subr.mxu0 0.0
        %2375 = vmatpush1.msra.mxu0 0.0
        %2376 = vmatprep.subr.mxu0 0.0
        %2377 = vmatpush1.msra.mxu0 0.0
        %2378 = vmatprep.subr.mxu0 0.0
        %2379 = vmatpush1.msra.mxu0 0.0
        %2380 = vmatprep.subr.mxu0 0.0
        %2381 = vmatpush1.msra.mxu0 0.0
        %2382 = vmatprep.subr.mxu0 0.0
        %2383 = vmatpush1.msra.mxu0 0.0
        %2384 = vmatprep.subr.mxu0 0.0
        %2385 = vmatpush1.msra.mxu0 0.0
        %2386 = vmatprep.subr.mxu0 0.0
        %2387 = vmatpush1.msra.mxu0 0.0
        %2388 = vmatprep.subr.mxu0 0.0
        %2389 = vmatpush1.msra.mxu0 0.0
        %2390 = vmatprep.subr.mxu0 0.0
        %2391 = vmatpush1.msra.mxu0 0.0
        %2392 = vmatprep.subr.mxu0 0.0
        %2393 = vmatpush1.msra.mxu0 0.0
        %2394 = vmatprep.subr.mxu0 0.0
        %2395 = vmatpush1.msra.mxu0 0.0
        %2396 = vmatprep.subr.mxu0 0.0
        %2397 = vmatpush1.msra.mxu0 0.0
        %2398 = vmatprep.subr.mxu0 0.0
        %2399 = vmatpush1.msra.mxu0 %v2145
        %2400 = vmatprep.subr.mxu0 0.0
        %2401 = vmatpush2.msra.mxu0 0.0
        %2402 = vmatprep.subr.mxu0 0.0
        %2403 = vmatpush2.msra.mxu0 0.0
        %2404 = vmatprep.subr.mxu0 0.0
        %2405 = vmatpush2.msra.mxu0 0.0
        %2406 = vmatprep.subr.mxu0 0.0
        %2407 = vmatpush2.msra.mxu0 0.0
        %2408 = vmatprep.subr.mxu0 0.0
        %2409 = vmatpush2.msra.mxu0 0.0
        %2410 = vmatprep.subr.mxu0 0.0
        %2411 = vmatpush2.msra.mxu0 0.0
        %2412 = vmatprep.subr.mxu0 0.0
        %2413 = vmatpush2.msra.mxu0 0.0
        %2414 = vmatprep.subr.mxu0 0.0
        %2415 = vmatpush2.msra.mxu0 0.0
        %2416 = vmatprep.subr.mxu0 0.0
        %2417 = vmatpush2.msra.mxu0 0.0
        %2418 = vmatprep.subr.mxu0 0.0
        %2419 = vmatpush2.msra.mxu0 0.0
        %2420 = vmatprep.subr.mxu0 0.0
        %2421 = vmatpush2.msra.mxu0 0.0
        %2422 = vmatprep.subr.mxu0 0.0
        %2423 = vmatpush2.msra.mxu0 0.0
        %2424 = vmatprep.subr.mxu0 0.0
        %2425 = vmatpush2.msra.mxu0 0.0
        %2426 = vmatprep.subr.mxu0 0.0
        %2427 = vmatpush2.msra.mxu0 0.0
        %2428 = vmatprep.subr.mxu0 0.0
        %2429 = vmatpush2.msra.mxu0 0.0
        %2430 = vmatprep.subr.mxu0 0.0
        %2431 = vmatpush2.msra.mxu0 0.0
        %2432 = vmatprep.mubr.f32.mxu0 0.0
        %2433 = vmatmul.mubr.f32.gmra.mxu0 %v2366
        %v2434 = vpop.f32.mrf.mxu0
        %v2435 = vadd.f32 0.0, %v2434
        %v2436 = vpop.f32.mrf.mxu0
        %2437 = vdwg.mxu0
        %v2438 = vsel %vm493, %v2216, 0.0
        %v2439 = vsel %vm493, %v2289, 0.0
        %v2440 = vadd.f32 %v2438, %v2439
        %v2441 = vsel %vm493, %v2362, 0.0
        %v2442 = vadd.f32 %v2440, %v2441
        %v2443 = vsel %vm493, %v2435, 0.0
        %v2444 = vadd.f32 %v2442, %v2443
        %v2445 = vlaneseq
        %v2446 = vshrl.u32 %v2445, 7
        %v2447 = vsub.s32 0, %v2446
        %v2448 = vrot.slane %v519, %v2447
        %v2449 = vadd.f32 %v2444, %v2448
        %v2450 = vadd.f32 %v517, %v2449
        %v2451 = vsel %vm493, %v2450, 0.0
        %2452 = vadd.xlane.f32.xlu0 %v2451
        %v2453 = vpop.xlane.xlu0 %2452
        %v2454 = vmul.f32 %v2453, %v497
        %v2455 = vsub.f32 %v2450, %v2454
        %v2456 = vmul.f32 %v2455, %v2455
        %v2457 = vsel %vm493, %v2456, 0.0
        %2458 = vadd.xlane.f32.xlu0 %v2457
        %v2459 = vpop.xlane.xlu0 %2458
        %v2460 = vmul.f32 %v2459, %v497
        %v2461 = vadd.f32 %v2460, 1e-12
        %v2462 = vrsqrt.pop %v2461
        %v2463 = vmul.f32 %v2455, %v2462
        %v2464 = vlaneseq
        %v2465 = vshrl.u32 %v2464, 7
        %v2466 = vsub.s32 1, %v2465
        %v2467 = vrot.slane %v519, %v2466
        %v2468 = vmul.f32 %v2463, %v2467
        %v2469 = vlaneseq
        %v2470 = vshrl.u32 %v2469, 7
        %v2471 = vsub.s32 2, %v2470
        %v2472 = vrot.slane %v519, %v2471
        %v2473 = vadd.f32 %v2468, %v2472
        %v2474 = vld [vmem:[%s7] sm:$0xff]
        %v2475 = vld [vmem:[%s7 + $0x8] sm:$0xff]
        %v2476 = vld [vmem:[%s7 + $0x10] sm:$0xff]
        %v2477 = vld [vmem:[%s7 + $0x18] sm:$0xff]
        %v2478 = vld [vmem:[%s8] sm:$0x1]
        %v2480 = vlaneseq
        %v2481 = vshrl.u32 %v2480, 7
        %v2482 = vsub.s32 0, %v2481
        %v2483 = vrot.slane %v2478, %v2482
        %v2486 = vsel %vm493, %v2473, 0
        %2488 = vmatprep.subr.mxu0 0.0
        %2489 = vmatpush1.msra.mxu0 0.0
        %2490 = vmatprep.subr.mxu0 0.0
        %2491 = vmatpush1.msra.mxu0 0.0
        %2492 = vmatprep.subr.mxu0 0.0
        %2493 = vmatpush1.msra.mxu0 0.0
        %2494 = vmatprep.subr.mxu0 0.0
        %2495 = vmatpush1.msra.mxu0 0.0
        %2496 = vmatprep.subr.mxu0 0.0
        %2497 = vmatpush1.msra.mxu0 0.0
        %2498 = vmatprep.subr.mxu0 0.0
        %2499 = vmatpush1.msra.mxu0 0.0
        %2500 = vmatprep.subr.mxu0 0.0
        %2501 = vmatpush1.msra.mxu0 0.0
        %2502 = vmatprep.subr.mxu0 0.0
        %2503 = vmatpush1.msra.mxu0 0.0
        %2504 = vmatprep.subr.mxu0 0.0
        %2505 = vmatpush1.msra.mxu0 0.0
        %2506 = vmatprep.subr.mxu0 0.0
        %2507 = vmatpush1.msra.mxu0 0.0
        %2508 = vmatprep.subr.mxu0 0.0
        %2509 = vmatpush1.msra.mxu0 0.0
        %2510 = vmatprep.subr.mxu0 0.0
        %2511 = vmatpush1.msra.mxu0 0.0
        %2512 = vmatprep.subr.mxu0 0.0
        %2513 = vmatpush1.msra.mxu0 %v2477
        %2514 = vmatprep.subr.mxu0 0.0
        %2515 = vmatpush1.msra.mxu0 %v2476
        %2516 = vmatprep.subr.mxu0 0.0
        %2517 = vmatpush1.msra.mxu0 %v2475
        %2518 = vmatprep.subr.mxu0 0.0
        %2519 = vmatpush1.msra.mxu0 %v2474
        %2520 = vmatprep.subr.mxu0 0.0
        %2521 = vmatpush2.msra.mxu0 0.0
        %2522 = vmatprep.subr.mxu0 0.0
        %2523 = vmatpush2.msra.mxu0 0.0
        %2524 = vmatprep.subr.mxu0 0.0
        %2525 = vmatpush2.msra.mxu0 0.0
        %2526 = vmatprep.subr.mxu0 0.0
        %2527 = vmatpush2.msra.mxu0 0.0
        %2528 = vmatprep.subr.mxu0 0.0
        %2529 = vmatpush2.msra.mxu0 0.0
        %2530 = vmatprep.subr.mxu0 0.0
        %2531 = vmatpush2.msra.mxu0 0.0
        %2532 = vmatprep.subr.mxu0 0.0
        %2533 = vmatpush2.msra.mxu0 0.0
        %2534 = vmatprep.subr.mxu0 0.0
        %2535 = vmatpush2.msra.mxu0 0.0
        %2536 = vmatprep.subr.mxu0 0.0
        %2537 = vmatpush2.msra.mxu0 0.0
        %2538 = vmatprep.subr.mxu0 0.0
        %2539 = vmatpush2.msra.mxu0 0.0
        %2540 = vmatprep.subr.mxu0 0.0
        %2541 = vmatpush2.msra.mxu0 0.0
        %2542 = vmatprep.subr.mxu0 0.0
        %2543 = vmatpush2.msra.mxu0 0.0
        %2544 = vmatprep.subr.mxu0 0.0
        %2545 = vmatpush2.msra.mxu0 0.0
        %2546 = vmatprep.subr.mxu0 0.0
        %2547 = vmatpush2.msra.mxu0 0.0
        %2548 = vmatprep.subr.mxu0 0.0
        %2549 = vmatpush2.msra.mxu0 0.0
        %2550 = vmatprep.subr.mxu0 0.0
        %2551 = vmatpush2.msra.mxu0 0.0
        %2552 = vmatprep.mubr.f32.mxu0 0.0
        %2553 = vmatmul.mubr.f32.gmra.mxu0 %v2486
        %v2554 = vpop.f32.mrf.mxu0
        %v2555 = vadd.f32 %v2483, %v2554
        %v2556 = vpop.f32.mrf.mxu0
        %2557 = vdwg.mxu0
        %v2558 = vmul.f32 %v2555, %v2555
        %v2559 = vmul.f32 %v2555, %v2558
        %v2560 = vmul.f32 %v2559, 0.044715
        %v2561 = vadd.f32 %v2555, %v2560
        %v2562 = vmul.f32 %v2561, 0.7978846
        %v2563 = vtanh.pop %v2562
        %v2564 = vadd.f32 %v2563, 1.0
        %v2565 = vmul.f32 %v2564, 0.5
        %v2566 = vmul.f32 %v2555, %v2565
        %v2567 = vld [vmem:[%s9] sm:$0xff]
        %v2568 = vld [vmem:[%s9 + $0x8] sm:$0xff]
        %v2569 = vld [vmem:[%s9 + $0x10] sm:$0xff]
        %v2570 = vld [vmem:[%s9 + $0x18] sm:$0xff]
        %v2571 = vld [vmem:[%s9 + $0x20] sm:$0xff]
        %v2572 = vld [vmem:[%s9 + $0x28] sm:$0xff]
        %v2573 = vld [vmem:[%s9 + $0x30] sm:$0xff]
        %v2574 = vld [vmem:[%s9 + $0x38] sm:$0xff]
        %v2575 = vlaneseq
        %v2576 = vshrl.u32 %v2575, 7
        %v2577 = vsub.s32 3, %v2576
        %v2578 = vrot.slane %v519, %v2577
        %vm2579 = vcmask 523264
        %v2581 = vsel %vm2579, %v2566, 0
        %2583 = vmatprep.subr.mxu0 0.0
        %2584 = vmatpush1.msra.mxu0 0.0
        %2585 = vmatprep.subr.mxu0 0.0
        %2586 = vmatpush1.msra.mxu0 0.0
        %2587 = vmatprep.subr.mxu0 0.0
        %2588 = vmatpush1.msra.mxu0 0.0
        %2589 = vmatprep.subr.mxu0 0.0
        %2590 = vmatpush1.msra.mxu0 0.0
        %2591 = vmatprep.subr.mxu0 0.0
        %2592 = vmatpush1.msra.mxu0 0.0
        %2593 = vmatprep.subr.mxu0 0.0
        %2594 = vmatpush1.msra.mxu0 0.0
        %2595 = vmatprep.subr.mxu0 0.0
        %2596 = vmatpush1.msra.mxu0 0.0
        %2597 = vmatprep.subr.mxu0 0.0
        %2598 = vmatpush1.msra.mxu0 0.0
        %2599 = vmatprep.subr.mxu0 0.0
        %2600 = vmatpush1.msra.mxu0 %v2574
        %2601 = vmatprep.subr.mxu0 0.0
        %2602 = vmatpush1.msra.mxu0 %v2573
        %2603 = vmatprep.subr.mxu0 0.0
        %2604 = vmatpush1.msra.mxu0 %v2572
        %2605 = vmatprep.subr.mxu0 0.0
        %2606 = vmatpush1.msra.mxu0 %v2571
        %2607 = vmatprep.subr.mxu0 0.0
        %2608 = vmatpush1.msra.mxu0 %v2570
        %2609 = vmatprep.subr.mxu0 0.0
        %2610 = vmatpush1.msra.mxu0 %v2569
        %2611 = vmatprep.subr.mxu0 0.0
        %2612 = vmatpush1.msra.mxu0 %v2568
        %2613 = vmatprep.subr.mxu0 0.0
        %2614 = vmatpush1.msra.mxu0 %v2567
        %2615 = vmatprep.subr.mxu0 0.0
        %2616 = vmatpush2.msra.mxu0 0.0
        %2617 = vmatprep.subr.mxu0 0.0
        %2618 = vmatpush2.msra.mxu0 0.0
        %2619 = vmatprep.subr.mxu0 0.0
        %2620 = vmatpush2.msra.mxu0 0.0
        %2621 = vmatprep.subr.mxu0 0.0
        %2622 = vmatpush2.msra.mxu0 0.0
        %2623 = vmatprep.subr.mxu0 0.0
        %2624 = vmatpush2.msra.mxu0 0.0
        %2625 = vmatprep.subr.mxu0 0.0
        %2626 = vmatpush2.msra.mxu0 0.0
        %2627 = vmatprep.subr.mxu0 0.0
        %2628 = vmatpush2.msra.mxu0 0.0
        %2629 = vmatprep.subr.mxu0 0.0
        %2630 = vmatpush2.msra.mxu0 0.0
        %2631 = vmatprep.subr.mxu0 0.0
        %2632 = vmatpush2.msra.mxu0 0.0
        %2633 = vmatprep.subr.mxu0 0.0
        %2634 = vmatpush2.msra.mxu0 0.0
        %2635 = vmatprep.subr.mxu0 0.0
        %2636 = vmatpush2.msra.mxu0 0.0
        %2637 = vmatprep.subr.mxu0 0.0
        %2638 = vmatpush2.msra.mxu0 0.0
        %2639 = vmatprep.subr.mxu0 0.0
        %2640 = vmatpush2.msra.mxu0 0.0
        %2641 = vmatprep.subr.mxu0 0.0
        %2642 = vmatpush2.msra.mxu0 0.0
        %2643 = vmatprep.subr.mxu0 0.0
        %2644 = vmatpush2.msra.mxu0 0.0
        %2645 = vmatprep.subr.mxu0 0.0
        %2646 = vmatpush2.msra.mxu0 0.0
        %2647 = vmatprep.mubr.f32.mxu0 0.0
        %2648 = vmatmul.mubr.f32.gmra.mxu0 %v2581
        %v2649 = vpop.f32.mrf.mxu0
        %v2650 = vadd.f32 %v2578, %v2649
        %v2651 = vpop.f32.mrf.mxu0
        %2652 = vdwg.mxu0
        %v2653 = vadd.f32 %v2473, %v2650
        %v2654 = vsel %vm493, %v2653, 0.0
        %2655 = vadd.xlane.f32.xlu0 %v2654
        %v2656 = vpop.xlane.xlu0 %2655
        %v2657 = vmul.f32 %v2656, %v497
        %v2658 = vsub.f32 %v2653, %v2657
        %v2659 = vmul.f32 %v2658, %v2658
        %v2660 = vsel %vm493, %v2659, 0.0
        %2661 = vadd.xlane.f32.xlu0 %v2660
        %v2662 = vpop.xlane.xlu0 %2661
        %v2663 = vmul.f32 %v2662, %v497
        %v2664 = vadd.f32 %v2663, 1e-12
        %v2665 = vrsqrt.pop %v2664
        %v2666 = vmul.f32 %v2658, %v2665
        %v2667 = vlaneseq
        %v2668 = vshrl.u32 %v2667, 7
        %v2669 = vsub.s32 4, %v2668
        %v2670 = vrot.slane %v519, %v2669
        %v2671 = vmul.f32 %v2666, %v2670
        %v2672 = vlaneseq
        %v2673 = vshrl.u32 %v2672, 7
        %v2674 = vsub.s32 5, %v2673
        %v2675 = vrot.slane %v519, %v2674
        %v2676 = vadd.f32 %v2671, %v2675
        %s2677 = scalar_lea.vmem %s10, 8
        %v2678 = vld [vmem:[%s2677] sm:$0x3f]
        %s2679 = scalar_lea.vmem %s4, 384
        %v2680 = vld [vmem:[%s2679] sm:$0xff]
        %v2681 = vld [vmem:[%s2679 + $0x8] sm:$0xff]
        %v2682 = vld [vmem:[%s2679 + $0x10] sm:$0xff]
        %v2683 = vld [vmem:[%s2679 + $0x18] sm:$0xff]
        %v2684 = vld [vmem:[%s2679 + $0x20] sm:$0xff]
        %v2685 = vld [vmem:[%s2679 + $0x28] sm:$0xff]
        %v2686 = vld [vmem:[%s2679 + $0x30] sm:$0xff]
        %v2687 = vld [vmem:[%s2679 + $0x38] sm:$0xff]
        %v2688 = vld [vmem:[%s2679 + $0x40] sm:$0xff]
        %v2689 = vld [vmem:[%s2679 + $0x48] sm:$0xff]
        %v2690 = vld [vmem:[%s2679 + $0x50] sm:$0xff]
        %v2691 = vld [vmem:[%s2679 + $0x58] sm:$0xff]
        %v2692 = vld [vmem:[%s2679 + $0x60] sm:$0xff]
        %v2693 = vld [vmem:[%s2679 + $0x68] sm:$0xff]
        %v2694 = vld [vmem:[%s2679 + $0x70] sm:$0xff]
        %v2695 = vld [vmem:[%s2679 + $0x78] sm:$0xff]
        %v2696 = vld [vmem:[%s2679 + $0x80] sm:$0xff]
        %v2697 = vld [vmem:[%s2679 + $0x88] sm:$0xff]
        %v2698 = vld [vmem:[%s2679 + $0x90] sm:$0xff]
        %v2699 = vld [vmem:[%s2679 + $0x98] sm:$0xff]
        %v2700 = vld [vmem:[%s2679 + $0xa0] sm:$0xff]
        %v2701 = vld [vmem:[%s2679 + $0xa8] sm:$0xff]
        %v2702 = vld [vmem:[%s2679 + $0xb0] sm:$0xff]
        %v2703 = vld [vmem:[%s2679 + $0xb8] sm:$0xff]
        %v2704 = vld [vmem:[%s2679 + $0xc0] sm:$0xff]
        %v2705 = vld [vmem:[%s2679 + $0xc8] sm:$0xff]
        %v2706 = vld [vmem:[%s2679 + $0xd0] sm:$0xff]
        %v2707 = vld [vmem:[%s2679 + $0xd8] sm:$0xff]
        %v2708 = vld [vmem:[%s2679 + $0xe0] sm:$0xff]
        %v2709 = vld [vmem:[%s2679 + $0xe8] sm:$0xff]
        %v2710 = vld [vmem:[%s2679 + $0xf0] sm:$0xff]
        %v2711 = vld [vmem:[%s2679 + $0xf8] sm:$0xff]
        %v2712 = vld [vmem:[%s2679 + $0x100] sm:$0xff]
        %v2713 = vld [vmem:[%s2679 + $0x108] sm:$0xff]
        %v2714 = vld [vmem:[%s2679 + $0x110] sm:$0xff]
        %v2715 = vld [vmem:[%s2679 + $0x118] sm:$0xff]
        %v2716 = vld [vmem:[%s2679 + $0x120] sm:$0xff]
        %v2717 = vld [vmem:[%s2679 + $0x128] sm:$0xff]
        %v2718 = vld [vmem:[%s2679 + $0x130] sm:$0xff]
        %v2719 = vld [vmem:[%s2679 + $0x138] sm:$0xff]
        %v2720 = vld [vmem:[%s2679 + $0x140] sm:$0xff]
        %v2721 = vld [vmem:[%s2679 + $0x148] sm:$0xff]
        %v2722 = vld [vmem:[%s2679 + $0x150] sm:$0xff]
        %v2723 = vld [vmem:[%s2679 + $0x158] sm:$0xff]
        %v2724 = vld [vmem:[%s2679 + $0x160] sm:$0xff]
        %v2725 = vld [vmem:[%s2679 + $0x168] sm:$0xff]
        %v2726 = vld [vmem:[%s2679 + $0x170] sm:$0xff]
        %v2727 = vld [vmem:[%s2679 + $0x178] sm:$0xff]
        %s2728 = scalar_lea.vmem %s5, 12
        %v2729 = vld [vmem:[%s2728] sm:$0x1]
        %v2730 = vld [vmem:[%s2728 + $0x1] sm:$0x1]
        %v2731 = vld [vmem:[%s2728 + $0x2] sm:$0x1]
        %v2732 = vld [vmem:[%s2728 + $0x3] sm:$0x1]
        %v2733 = vld [vmem:[%s2728 + $0x4] sm:$0x1]
        %v2734 = vld [vmem:[%s2728 + $0x5] sm:$0x1]
        %v2735 = vld [vmem:[%s2728 + $0x6] sm:$0x1]
        %v2736 = vld [vmem:[%s2728 + $0x7] sm:$0x1]
        %v2737 = vld [vmem:[%s2728 + $0x8] sm:$0x1]
        %v2738 = vld [vmem:[%s2728 + $0x9] sm:$0x1]
        %v2739 = vld [vmem:[%s2728 + $0xa] sm:$0x1]
        %v2740 = vld [vmem:[%s2728 + $0xb] sm:$0x1]
        %v2753 = vlaneseq
        %v2754 = vshrl.u32 %v2753, 7
        %v2755 = vsub.s32 0, %v2754
        %v2756 = vrot.slane %v2729, %v2755
        %v2757 = vlaneseq
        %v2758 = vshrl.u32 %v2757, 7
        %v2759 = vsub.s32 0, %v2758
        %v2760 = vrot.slane %v2730, %v2759
        %v2761 = vlaneseq
        %v2762 = vshrl.u32 %v2761, 7
        %v2763 = vsub.s32 0, %v2762
        %v2764 = vrot.slane %v2731, %v2763
        %v2765 = vlaneseq
        %v2766 = vshrl.u32 %v2765, 7
        %v2767 = vsub.s32 0, %v2766
        %v2768 = vrot.slane %v2732, %v2767
        %v2769 = vlaneseq
        %v2770 = vshrl.u32 %v2769, 7
        %v2771 = vsub.s32 0, %v2770
        %v2772 = vrot.slane %v2733, %v2771
        %v2773 = vlaneseq
        %v2774 = vshrl.u32 %v2773, 7
        %v2775 = vsub.s32 0, %v2774
        %v2776 = vrot.slane %v2734, %v2775
        %v2777 = vlaneseq
        %v2778 = vshrl.u32 %v2777, 7
        %v2779 = vsub.s32 0, %v2778
        %v2780 = vrot.slane %v2735, %v2779
        %v2781 = vlaneseq
        %v2782 = vshrl.u32 %v2781, 7
        %v2783 = vsub.s32 0, %v2782
        %v2784 = vrot.slane %v2736, %v2783
        %v2785 = vlaneseq
        %v2786 = vshrl.u32 %v2785, 7
        %v2787 = vsub.s32 0, %v2786
        %v2788 = vrot.slane %v2737, %v2787
        %v2789 = vlaneseq
        %v2790 = vshrl.u32 %v2789, 7
        %v2791 = vsub.s32 0, %v2790
        %v2792 = vrot.slane %v2738, %v2791
        %v2793 = vlaneseq
        %v2794 = vshrl.u32 %v2793, 7
        %v2795 = vsub.s32 0, %v2794
        %v2796 = vrot.slane %v2739, %v2795
        %v2797 = vlaneseq
        %v2798 = vshrl.u32 %v2797, 7
        %v2799 = vsub.s32 0, %v2798
        %v2800 = vrot.slane %v2740, %v2799
        %v2814 = vsel %vm493, %v2676, 0
        %2816 = vmatprep.subr.mxu0 0.0
        %2817 = vmatpush1.msra.mxu0 0.0
        %2818 = vmatprep.subr.mxu0 0.0
        %2819 = vmatpush1.msra.mxu0 0.0
        %2820 = vmatprep.subr.mxu0 0.0
        %2821 = vmatpush1.msra.mxu0 0.0
        %2822 = vmatprep.subr.mxu0 0.0
        %2823 = vmatpush1.msra.mxu0 0.0
        %2824 = vmatprep.subr.mxu0 0.0
        %2825 = vmatpush1.msra.mxu0 0.0
        %2826 = vmatprep.subr.mxu0 0.0
        %2827 = vmatpush1.msra.mxu0 0.0
        %2828 = vmatprep.subr.mxu0 0.0
        %2829 = vmatpush1.msra.mxu0 0.0
        %2830 = vmatprep.subr.mxu0 0.0
        %2831 = vmatpush1.msra.mxu0 0.0
        %2832 = vmatprep.subr.mxu0 0.0
        %2833 = vmatpush1.msra.mxu0 0.0
        %2834 = vmatprep.subr.mxu0 0.0
        %2835 = vmatpush1.msra.mxu0 0.0
        %2836 = vmatprep.subr.mxu0 0.0
        %2837 = vmatpush1.msra.mxu0 0.0
        %2838 = vmatprep.subr.mxu0 0.0
        %2839 = vmatpush1.msra.mxu0 0.0
        %2840 = vmatprep.subr.mxu0 0.0
        %2841 = vmatpush1.msra.mxu0 %v2683
        %2842 = vmatprep.subr.mxu0 0.0
        %2843 = vmatpush1.msra.mxu0 %v2682
        %2844 = vmatprep.subr.mxu0 0.0
        %2845 = vmatpush1.msra.mxu0 %v2681
        %2846 = vmatprep.subr.mxu0 0.0
        %2847 = vmatpush1.msra.mxu0 %v2680
        %2848 = vmatprep.subr.mxu0 0.0
        %2849 = vmatpush2.msra.mxu0 0.0
        %2850 = vmatprep.subr.mxu0 0.0
        %2851 = vmatpush2.msra.mxu0 0.0
        %2852 = vmatprep.subr.mxu0 0.0
        %2853 = vmatpush2.msra.mxu0 0.0
        %2854 = vmatprep.subr.mxu0 0.0
        %2855 = vmatpush2.msra.mxu0 0.0
        %2856 = vmatprep.subr.mxu0 0.0
        %2857 = vmatpush2.msra.mxu0 0.0
        %2858 = vmatprep.subr.mxu0 0.0
        %2859 = vmatpush2.msra.mxu0 0.0
        %2860 = vmatprep.subr.mxu0 0.0
        %2861 = vmatpush2.msra.mxu0 0.0
        %2862 = vmatprep.subr.mxu0 0.0
        %2863 = vmatpush2.msra.mxu0 0.0
        %2864 = vmatprep.subr.mxu0 0.0
        %2865 = vmatpush2.msra.mxu0 0.0
        %2866 = vmatprep.subr.mxu0 0.0
        %2867 = vmatpush2.msra.mxu0 0.0
        %2868 = vmatprep.subr.mxu0 0.0
        %2869 = vmatpush2.msra.mxu0 0.0
        %2870 = vmatprep.subr.mxu0 0.0
        %2871 = vmatpush2.msra.mxu0 0.0
        %2872 = vmatprep.subr.mxu0 0.0
        %2873 = vmatpush2.msra.mxu0 0.0
        %2874 = vmatprep.subr.mxu0 0.0
        %2875 = vmatpush2.msra.mxu0 0.0
        %2876 = vmatprep.subr.mxu0 0.0
        %2877 = vmatpush2.msra.mxu0 0.0
        %2878 = vmatprep.subr.mxu0 0.0
        %2879 = vmatpush2.msra.mxu0 0.0
        %2880 = vmatprep.mubr.f32.mxu0 0.0
        %2881 = vmatmul.mubr.f32.gmra.mxu0 %v2814
        %v2882 = vpop.f32.mrf.mxu0
        %v2883 = vadd.f32 %v2756, %v2882
        %v2884 = vpop.f32.mrf.mxu0
        %2885 = vdwg.mxu0
        %2886 = vmatprep.subr.mxu0 0.0
        %2887 = vmatpush1.msra.mxu0 0.0
        %2888 = vmatprep.subr.mxu0 0.0
        %2889 = vmatpush1.msra.mxu0 0.0
        %2890 = vmatprep.subr.mxu0 0.0
        %2891 = vmatpush1.msra.mxu0 0.0
        %2892 = vmatprep.subr.mxu0 0.0
        %2893 = vmatpush1.msra.mxu0 0.0
        %2894 = vmatprep.subr.mxu0 0.0
        %2895 = vmatpush1.msra.mxu0 0.0
        %2896 = vmatprep.subr.mxu0 0.0
        %2897 = vmatpush1.msra.mxu0 0.0
        %2898 = vmatprep.subr.mxu0 0.0
        %2899 = vmatpush1.msra.mxu0 0.0
        %2900 = vmatprep.subr.mxu0 0.0
        %2901 = vmatpush1.msra.mxu0 0.0
        %2902 = vmatprep.subr.mxu0 0.0
        %2903 = vmatpush1.msra.mxu0 0.0
        %2904 = vmatprep.subr.mxu0 0.0
        %2905 = vmatpush1.msra.mxu0 0.0
        %2906 = vmatprep.subr.mxu0 0.0
        %2907 = vmatpush1.msra.mxu0 0.0
        %2908 = vmatprep.subr.mxu0 0.0
        %2909 = vmatpush1.msra.mxu0 0.0
        %2910 = vmatprep.subr.mxu0 0.0
        %2911 = vmatpush1.msra.mxu0 %v2687
        %2912 = vmatprep.subr.mxu0 0.0
        %2913 = vmatpush1.msra.mxu0 %v2686
        %2914 = vmatprep.subr.mxu0 0.0
        %2915 = vmatpush1.msra.mxu0 %v2685
        %2916 = vmatprep.subr.mxu0 0.0
        %2917 = vmatpush1.msra.mxu0 %v2684
        %2918 = vmatprep.subr.mxu0 0.0
        %2919 = vmatpush2.msra.mxu0 0.0
        %2920 = vmatprep.subr.mxu0 0.0
        %2921 = vmatpush2.msra.mxu0 0.0
        %2922 = vmatprep.subr.mxu0 0.0
        %2923 = vmatpush2.msra.mxu0 0.0
        %2924 = vmatprep.subr.mxu0 0.0
        %2925 = vmatpush2.msra.mxu0 0.0
        %2926 = vmatprep.subr.mxu0 0.0
        %2927 = vmatpush2.msra.mxu0 0.0
        %2928 = vmatprep.subr.mxu0 0.0
        %2929 = vmatpush2.msra.mxu0 0.0
        %2930 = vmatprep.subr.mxu0 0.0
        %2931 = vmatpush2.msra.mxu0 0.0
        %2932 = vmatprep.subr.mxu0 0.0
        %2933 = vmatpush2.msra.mxu0 0.0
        %2934 = vmatprep.subr.mxu0 0.0
        %2935 = vmatpush2.msra.mxu0 0.0
        %2936 = vmatprep.subr.mxu0 0.0
        %2937 = vmatpush2.msra.mxu0 0.0
        %2938 = vmatprep.subr.mxu0 0.0
        %2939 = vmatpush2.msra.mxu0 0.0
        %2940 = vmatprep.subr.mxu0 0.0
        %2941 = vmatpush2.msra.mxu0 0.0
        %2942 = vmatprep.subr.mxu0 0.0
        %2943 = vmatpush2.msra.mxu0 0.0
        %2944 = vmatprep.subr.mxu0 0.0
        %2945 = vmatpush2.msra.mxu0 0.0
        %2946 = vmatprep.subr.mxu0 0.0
        %2947 = vmatpush2.msra.mxu0 0.0
        %2948 = vmatprep.subr.mxu0 0.0
        %2949 = vmatpush2.msra.mxu0 0.0
        %2950 = vmatprep.mubr.f32.mxu0 0.0
        %2951 = vmatmul.mubr.f32.gmra.mxu0 %v2814
        %v2952 = vpop.f32.mrf.mxu0
        %v2953 = vadd.f32 %v2760, %v2952
        %v2954 = vpop.f32.mrf.mxu0
        %2955 = vdwg.mxu0
        %2956 = vmatprep.subr.mxu0 0.0
        %2957 = vmatpush1.msra.mxu0 0.0
        %2958 = vmatprep.subr.mxu0 0.0
        %2959 = vmatpush1.msra.mxu0 0.0
        %2960 = vmatprep.subr.mxu0 0.0
        %2961 = vmatpush1.msra.mxu0 0.0
        %2962 = vmatprep.subr.mxu0 0.0
        %2963 = vmatpush1.msra.mxu0 0.0
        %2964 = vmatprep.subr.mxu0 0.0
        %2965 = vmatpush1.msra.mxu0 0.0
        %2966 = vmatprep.subr.mxu0 0.0
        %2967 = vmatpush1.msra.mxu0 0.0
        %2968 = vmatprep.subr.mxu0 0.0
        %2969 = vmatpush1.msra.mxu0 0.0
        %2970 = vmatprep.subr.mxu0 0.0
        %2971 = vmatpush1.msra.mxu0 0.0
        %2972 = vmatprep.subr.mxu0 0.0
        %2973 = vmatpush1.msra.mxu0 0.0
        %2974 = vmatprep.subr.mxu0 0.0
        %2975 = vmatpush1.msra.mxu0 0.0
        %2976 = vmatprep.subr.mxu0 0.0
        %2977 = vmatpush1.msra.mxu0 0.0
        %2978 = vmatprep.subr.mxu0 0.0
        %2979 = vmatpush1.msra.mxu0 0.0
        %2980 = vmatprep.subr.mxu0 0.0
        %2981 = vmatpush1.msra.mxu0 %v2691
        %2982 = vmatprep.subr.mxu0 0.0
        %2983 = vmatpush1.msra.mxu0 %v2690
        %2984 = vmatprep.subr.mxu0 0.0
        %2985 = vmatpush1.msra.mxu0 %v2689
        %2986 = vmatprep.subr.mxu0 0.0
        %2987 = vmatpush1.msra.mxu0 %v2688
        %2988 = vmatprep.subr.mxu0 0.0
        %2989 = vmatpush2.msra.mxu0 0.0
        %2990 = vmatprep.subr.mxu0 0.0
        %2991 = vmatpush2.msra.mxu0 0.0
        %2992 = vmatprep.subr.mxu0 0.0
        %2993 = vmatpush2.msra.mxu0 0.0
        %2994 = vmatprep.subr.mxu0 0.0
        %2995 = vmatpush2.msra.mxu0 0.0
        %2996 = vmatprep.subr.mxu0 0.0
        %2997 = vmatpush2.msra.mxu0 0.0
        %2998 = vmatprep.subr.mxu0 0.0
        %2999 = vmatpush2.msra.mxu0 0.0
        %3000 = vmatprep.subr.mxu0 0.0
        %3001 = vmatpush2.msra.mxu0 0.0
        %3002 = vmatprep.subr.mxu0 0.0
        %3003 = vmatpush2.msra.mxu0 0.0
        %3004 = vmatprep.subr.mxu0 0.0
        %3005 = vmatpush2.msra.mxu0 0.0
        %3006 = vmatprep.subr.mxu0 0.0
        %3007 = vmatpush2.msra.mxu0 0.0
        %3008 = vmatprep.subr.mxu0 0.0
        %3009 = vmatpush2.msra.mxu0 0.0
        %3010 = vmatprep.subr.mxu0 0.0
        %3011 = vmatpush2.msra.mxu0 0.0
        %3012 = vmatprep.subr.mxu0 0.0
        %3013 = vmatpush2.msra.mxu0 0.0
        %3014 = vmatprep.subr.mxu0 0.0
        %3015 = vmatpush2.msra.mxu0 0.0
        %3016 = vmatprep.subr.mxu0 0.0
        %3017 = vmatpush2.msra.mxu0 0.0
        %3018 = vmatprep.subr.mxu0 0.0
        %3019 = vmatpush2.msra.mxu0 0.0
        %3020 = vmatprep.mubr.f32.mxu0 0.0
        %3021 = vmatmul.mubr.f32.gmra.mxu0 %v2814
        %v3022 = vpop.f32.mrf.mxu0
        %v3023 = vadd.f32 %v2764, %v3022
        %v3024 = vpop.f32.mrf.mxu0
        %3025 = vdwg.mxu0
        %3026 = vmatprep.subr.mxu0 0.0
        %3027 = vmatpush1.msra.mxu0 0.0
        %3028 = vmatprep.subr.mxu0 0.0
        %3029 = vmatpush1.msra.mxu0 0.0
        %3030 = vmatprep.subr.mxu0 0.0
        %3031 = vmatpush1.msra.mxu0 0.0
        %3032 = vmatprep.subr.mxu0 0.0
        %3033 = vmatpush1.msra.mxu0 0.0
        %3034 = vmatprep.subr.mxu0 0.0
        %3035 = vmatpush1.msra.mxu0 0.0
        %3036 = vmatprep.subr.mxu0 0.0
        %3037 = vmatpush1.msra.mxu0 0.0
        %3038 = vmatprep.subr.mxu0 0.0
        %3039 = vmatpush1.msra.mxu0 0.0
        %3040 = vmatprep.subr.mxu0 0.0
        %3041 = vmatpush1.msra.mxu0 0.0
        %3042 = vmatprep.subr.mxu0 0.0
        %3043 = vmatpush1.msra.mxu0 0.0
        %3044 = vmatprep.subr.mxu0 0.0
        %3045 = vmatpush1.msra.mxu0 0.0
        %3046 = vmatprep.subr.mxu0 0.0
        %3047 = vmatpush1.msra.mxu0 0.0
        %3048 = vmatprep.subr.mxu0 0.0
        %3049 = vmatpush1.msra.mxu0 0.0
        %3050 = vmatprep.subr.mxu0 0.0
        %3051 = vmatpush1.msra.mxu0 %v2695
        %3052 = vmatprep.subr.mxu0 0.0
        %3053 = vmatpush1.msra.mxu0 %v2694
        %3054 = vmatprep.subr.mxu0 0.0
        %3055 = vmatpush1.msra.mxu0 %v2693
        %3056 = vmatprep.subr.mxu0 0.0
        %3057 = vmatpush1.msra.mxu0 %v2692
        %3058 = vmatprep.subr.mxu0 0.0
        %3059 = vmatpush2.msra.mxu0 0.0
        %3060 = vmatprep.subr.mxu0 0.0
        %3061 = vmatpush2.msra.mxu0 0.0
        %3062 = vmatprep.subr.mxu0 0.0
        %3063 = vmatpush2.msra.mxu0 0.0
        %3064 = vmatprep.subr.mxu0 0.0
        %3065 = vmatpush2.msra.mxu0 0.0
        %3066 = vmatprep.subr.mxu0 0.0
        %3067 = vmatpush2.msra.mxu0 0.0
        %3068 = vmatprep.subr.mxu0 0.0
        %3069 = vmatpush2.msra.mxu0 0.0
        %3070 = vmatprep.subr.mxu0 0.0
        %3071 = vmatpush2.msra.mxu0 0.0
        %3072 = vmatprep.subr.mxu0 0.0
        %3073 = vmatpush2.msra.mxu0 0.0
        %3074 = vmatprep.subr.mxu0 0.0
        %3075 = vmatpush2.msra.mxu0 0.0
        %3076 = vmatprep.subr.mxu0 0.0
        %3077 = vmatpush2.msra.mxu0 0.0
        %3078 = vmatprep.subr.mxu0 0.0
        %3079 = vmatpush2.msra.mxu0 0.0
        %3080 = vmatprep.subr.mxu0 0.0
        %3081 = vmatpush2.msra.mxu0 0.0
        %3082 = vmatprep.subr.mxu0 0.0
        %3083 = vmatpush2.msra.mxu0 0.0
        %3084 = vmatprep.subr.mxu0 0.0
        %3085 = vmatpush2.msra.mxu0 0.0
        %3086 = vmatprep.subr.mxu0 0.0
        %3087 = vmatpush2.msra.mxu0 0.0
        %3088 = vmatprep.subr.mxu0 0.0
        %3089 = vmatpush2.msra.mxu0 0.0
        %3090 = vmatprep.mubr.f32.mxu0 0.0
        %3091 = vmatmul.mubr.f32.gmra.mxu0 %v2814
        %v3092 = vpop.f32.mrf.mxu0
        %v3093 = vadd.f32 %v2768, %v3092
        %v3094 = vpop.f32.mrf.mxu0
        %3095 = vdwg.mxu0
        %3096 = vmatprep.subr.mxu0 0.0
        %3097 = vmatpush1.msra.mxu0 0.0
        %3098 = vmatprep.subr.mxu0 0.0
        %3099 = vmatpush1.msra.mxu0 0.0
        %3100 = vmatprep.subr.mxu0 0.0
        %3101 = vmatpush1.msra.mxu0 0.0
        %3102 = vmatprep.subr.mxu0 0.0
        %3103 = vmatpush1.msra.mxu0 0.0
        %3104 = vmatprep.subr.mxu0 0.0
        %3105 = vmatpush1.msra.mxu0 0.0
        %3106 = vmatprep.subr.mxu0 0.0
        %3107 = vmatpush1.msra.mxu0 0.0
        %3108 = vmatprep.subr.mxu0 0.0
        %3109 = vmatpush1.msra.mxu0 0.0
        %3110 = vmatprep.subr.mxu0 0.0
        %3111 = vmatpush1.msra.mxu0 0.0
        %3112 = vmatprep.subr.mxu0 0.0
        %3113 = vmatpush1.msra.mxu0 0.0
        %3114 = vmatprep.subr.mxu0 0.0
        %3115 = vmatpush1.msra.mxu0 0.0
        %3116 = vmatprep.subr.mxu0 0.0
        %3117 = vmatpush1.msra.mxu0 0.0
        %3118 = vmatprep.subr.mxu0 0.0
        %3119 = vmatpush1.msra.mxu0 0.0
        %3120 = vmatprep.subr.mxu0 0.0
        %3121 = vmatpush1.msra.mxu0 %v2699
        %3122 = vmatprep.subr.mxu0 0.0
        %3123 = vmatpush1.msra.mxu0 %v2698
        %3124 = vmatprep.subr.mxu0 0.0
        %3125 = vmatpush1.msra.mxu0 %v2697
        %3126 = vmatprep.subr.mxu0 0.0
        %3127 = vmatpush1.msra.mxu0 %v2696
        %3128 = vmatprep.subr.mxu0 0.0
        %3129 = vmatpush2.msra.mxu0 0.0
        %3130 = vmatprep.subr.mxu0 0.0
        %3131 = vmatpush2.msra.mxu0 0.0
        %3132 = vmatprep.subr.mxu0 0.0
        %3133 = vmatpush2.msra.mxu0 0.0
        %3134 = vmatprep.subr.mxu0 0.0
        %3135 = vmatpush2.msra.mxu0 0.0
        %3136 = vmatprep.subr.mxu0 0.0
        %3137 = vmatpush2.msra.mxu0 0.0
        %3138 = vmatprep.subr.mxu0 0.0
        %3139 = vmatpush2.msra.mxu0 0.0
        %3140 = vmatprep.subr.mxu0 0.0
        %3141 = vmatpush2.msra.mxu0 0.0
        %3142 = vmatprep.subr.mxu0 0.0
        %3143 = vmatpush2.msra.mxu0 0.0
        %3144 = vmatprep.subr.mxu0 0.0
        %3145 = vmatpush2.msra.mxu0 0.0
        %3146 = vmatprep.subr.mxu0 0.0
        %3147 = vmatpush2.msra.mxu0 0.0
        %3148 = vmatprep.subr.mxu0 0.0
        %3149 = vmatpush2.msra.mxu0 0.0
        %3150 = vmatprep.subr.mxu0 0.0
        %3151 = vmatpush2.msra.mxu0 0.0
        %3152 = vmatprep.subr.mxu0 0.0
        %3153 = vmatpush2.msra.mxu0 0.0
        %3154 = vmatprep.subr.mxu0 0.0
        %3155 = vmatpush2.msra.mxu0 0.0
        %3156 = vmatprep.subr.mxu0 0.0
        %3157 = vmatpush2.msra.mxu0 0.0
        %3158 = vmatprep.subr.mxu0 0.0
        %3159 = vmatpush2.msra.mxu0 0.0
        %3160 = vmatprep.mubr.f32.mxu0 0.0
        %3161 = vmatmul.mubr.f32.gmra.mxu0 %v2814
        %v3162 = vpop.f32.mrf.mxu0
        %v3163 = vadd.f32 %v2772, %v3162
        %v3164 = vpop.f32.mrf.mxu0
        %3165 = vdwg.mxu0
        %3166 = vmatprep.subr.mxu0 0.0
        %3167 = vmatpush1.msra.mxu0 0.0
        %3168 = vmatprep.subr.mxu0 0.0
        %3169 = vmatpush1.msra.mxu0 0.0
        %3170 = vmatprep.subr.mxu0 0.0
        %3171 = vmatpush1.msra.mxu0 0.0
        %3172 = vmatprep.subr.mxu0 0.0
        %3173 = vmatpush1.msra.mxu0 0.0
        %3174 = vmatprep.subr.mxu0 0.0
        %3175 = vmatpush1.msra.mxu0 0.0
        %3176 = vmatprep.subr.mxu0 0.0
        %3177 = vmatpush1.msra.mxu0 0.0
        %3178 = vmatprep.subr.mxu0 0.0
        %3179 = vmatpush1.msra.mxu0 0.0
        %3180 = vmatprep.subr.mxu0 0.0
        %3181 = vmatpush1.msra.mxu0 0.0
        %3182 = vmatprep.subr.mxu0 0.0
        %3183 = vmatpush1.msra.mxu0 0.0
        %3184 = vmatprep.subr.mxu0 0.0
        %3185 = vmatpush1.msra.mxu0 0.0
        %3186 = vmatprep.subr.mxu0 0.0
        %3187 = vmatpush1.msra.mxu0 0.0
        %3188 = vmatprep.subr.mxu0 0.0
        %3189 = vmatpush1.msra.mxu0 0.0
        %3190 = vmatprep.subr.mxu0 0.0
        %3191 = vmatpush1.msra.mxu0 %v2703
        %3192 = vmatprep.subr.mxu0 0.0
        %3193 = vmatpush1.msra.mxu0 %v2702
        %3194 = vmatprep.subr.mxu0 0.0
        %3195 = vmatpush1.msra.mxu0 %v2701
        %3196 = vmatprep.subr.mxu0 0.0
        %3197 = vmatpush1.msra.mxu0 %v2700
        %3198 = vmatprep.subr.mxu0 0.0
        %3199 = vmatpush2.msra.mxu0 0.0
        %3200 = vmatprep.subr.mxu0 0.0
        %3201 = vmatpush2.msra.mxu0 0.0
        %3202 = vmatprep.subr.mxu0 0.0
        %3203 = vmatpush2.msra.mxu0 0.0
        %3204 = vmatprep.subr.mxu0 0.0
        %3205 = vmatpush2.msra.mxu0 0.0
        %3206 = vmatprep.subr.mxu0 0.0
        %3207 = vmatpush2.msra.mxu0 0.0
        %3208 = vmatprep.subr.mxu0 0.0
        %3209 = vmatpush2.msra.mxu0 0.0
        %3210 = vmatprep.subr.mxu0 0.0
        %3211 = vmatpush2.msra.mxu0 0.0
        %3212 = vmatprep.subr.mxu0 0.0
        %3213 = vmatpush2.msra.mxu0 0.0
        %3214 = vmatprep.subr.mxu0 0.0
        %3215 = vmatpush2.msra.mxu0 0.0
        %3216 = vmatprep.subr.mxu0 0.0
        %3217 = vmatpush2.msra.mxu0 0.0
        %3218 = vmatprep.subr.mxu0 0.0
        %3219 = vmatpush2.msra.mxu0 0.0
        %3220 = vmatprep.subr.mxu0 0.0
        %3221 = vmatpush2.msra.mxu0 0.0
        %3222 = vmatprep.subr.mxu0 0.0
        %3223 = vmatpush2.msra.mxu0 0.0
        %3224 = vmatprep.subr.mxu0 0.0
        %3225 = vmatpush2.msra.mxu0 0.0
        %3226 = vmatprep.subr.mxu0 0.0
        %3227 = vmatpush2.msra.mxu0 0.0
        %3228 = vmatprep.subr.mxu0 0.0
        %3229 = vmatpush2.msra.mxu0 0.0
        %3230 = vmatprep.mubr.f32.mxu0 0.0
        %3231 = vmatmul.mubr.f32.gmra.mxu0 %v2814
        %v3232 = vpop.f32.mrf.mxu0
        %v3233 = vadd.f32 %v2776, %v3232
        %v3234 = vpop.f32.mrf.mxu0
        %3235 = vdwg.mxu0
        %3236 = vmatprep.subr.mxu0 0.0
        %3237 = vmatpush1.msra.mxu0 0.0
        %3238 = vmatprep.subr.mxu0 0.0
        %3239 = vmatpush1.msra.mxu0 0.0
        %3240 = vmatprep.subr.mxu0 0.0
        %3241 = vmatpush1.msra.mxu0 0.0
        %3242 = vmatprep.subr.mxu0 0.0
        %3243 = vmatpush1.msra.mxu0 0.0
        %3244 = vmatprep.subr.mxu0 0.0
        %3245 = vmatpush1.msra.mxu0 0.0
        %3246 = vmatprep.subr.mxu0 0.0
        %3247 = vmatpush1.msra.mxu0 0.0
        %3248 = vmatprep.subr.mxu0 0.0
        %3249 = vmatpush1.msra.mxu0 0.0
        %3250 = vmatprep.subr.mxu0 0.0
        %3251 = vmatpush1.msra.mxu0 0.0
        %3252 = vmatprep.subr.mxu0 0.0
        %3253 = vmatpush1.msra.mxu0 0.0
        %3254 = vmatprep.subr.mxu0 0.0
        %3255 = vmatpush1.msra.mxu0 0.0
        %3256 = vmatprep.subr.mxu0 0.0
        %3257 = vmatpush1.msra.mxu0 0.0
        %3258 = vmatprep.subr.mxu0 0.0
        %3259 = vmatpush1.msra.mxu0 0.0
        %3260 = vmatprep.subr.mxu0 0.0
        %3261 = vmatpush1.msra.mxu0 %v2707
        %3262 = vmatprep.subr.mxu0 0.0
        %3263 = vmatpush1.msra.mxu0 %v2706
        %3264 = vmatprep.subr.mxu0 0.0
        %3265 = vmatpush1.msra.mxu0 %v2705
        %3266 = vmatprep.subr.mxu0 0.0
        %3267 = vmatpush1.msra.mxu0 %v2704
        %3268 = vmatprep.subr.mxu0 0.0
        %3269 = vmatpush2.msra.mxu0 0.0
        %3270 = vmatprep.subr.mxu0 0.0
        %3271 = vmatpush2.msra.mxu0 0.0
        %3272 = vmatprep.subr.mxu0 0.0
        %3273 = vmatpush2.msra.mxu0 0.0
        %3274 = vmatprep.subr.mxu0 0.0
        %3275 = vmatpush2.msra.mxu0 0.0
        %3276 = vmatprep.subr.mxu0 0.0
        %3277 = vmatpush2.msra.mxu0 0.0
        %3278 = vmatprep.subr.mxu0 0.0
        %3279 = vmatpush2.msra.mxu0 0.0
        %3280 = vmatprep.subr.mxu0 0.0
        %3281 = vmatpush2.msra.mxu0 0.0
        %3282 = vmatprep.subr.mxu0 0.0
        %3283 = vmatpush2.msra.mxu0 0.0
        %3284 = vmatprep.subr.mxu0 0.0
        %3285 = vmatpush2.msra.mxu0 0.0
        %3286 = vmatprep.subr.mxu0 0.0
        %3287 = vmatpush2.msra.mxu0 0.0
        %3288 = vmatprep.subr.mxu0 0.0
        %3289 = vmatpush2.msra.mxu0 0.0
        %3290 = vmatprep.subr.mxu0 0.0
        %3291 = vmatpush2.msra.mxu0 0.0
        %3292 = vmatprep.subr.mxu0 0.0
        %3293 = vmatpush2.msra.mxu0 0.0
        %3294 = vmatprep.subr.mxu0 0.0
        %3295 = vmatpush2.msra.mxu0 0.0
        %3296 = vmatprep.subr.mxu0 0.0
        %3297 = vmatpush2.msra.mxu0 0.0
        %3298 = vmatprep.subr.mxu0 0.0
        %3299 = vmatpush2.msra.mxu0 0.0
        %3300 = vmatprep.mubr.f32.mxu0 0.0
        %3301 = vmatmul.mubr.f32.gmra.mxu0 %v2814
        %v3302 = vpop.f32.mrf.mxu0
        %v3303 = vadd.f32 %v2780, %v3302
        %v3304 = vpop.f32.mrf.mxu0
        %3305 = vdwg.mxu0
        %3306 = vmatprep.subr.mxu0 0.0
        %3307 = vmatpush1.msra.mxu0 0.0
        %3308 = vmatprep.subr.mxu0 0.0
        %3309 = vmatpush1.msra.mxu0 0.0
        %3310 = vmatprep.subr.mxu0 0.0
        %3311 = vmatpush1.msra.mxu0 0.0
        %3312 = vmatprep.subr.mxu0 0.0
        %3313 = vmatpush1.msra.mxu0 0.0
        %3314 = vmatprep.subr.mxu0 0.0
        %3315 = vmatpush1.msra.mxu0 0.0
        %3316 = vmatprep.subr.mxu0 0.0
        %3317 = vmatpush1.msra.mxu0 0.0
        %3318 = vmatprep.subr.mxu0 0.0
        %3319 = vmatpush1.msra.mxu0 0.0
        %3320 = vmatprep.subr.mxu0 0.0
        %3321 = vmatpush1.msra.mxu0 0.0
        %3322 = vmatprep.subr.mxu0 0.0
        %3323 = vmatpush1.msra.mxu0 0.0
        %3324 = vmatprep.subr.mxu0 0.0
        %3325 = vmatpush1.msra.mxu0 0.0
        %3326 = vmatprep.subr.mxu0 0.0
        %3327 = vmatpush1.msra.mxu0 0.0
        %3328 = vmatprep.subr.mxu0 0.0
        %3329 = vmatpush1.msra.mxu0 0.0
        %3330 = vmatprep.subr.mxu0 0.0
        %3331 = vmatpush1.msra.mxu0 %v2711
        %3332 = vmatprep.subr.mxu0 0.0
        %3333 = vmatpush1.msra.mxu0 %v2710
        %3334 = vmatprep.subr.mxu0 0.0
        %3335 = vmatpush1.msra.mxu0 %v2709
        %3336 = vmatprep.subr.mxu0 0.0
        %3337 = vmatpush1.msra.mxu0 %v2708
        %3338 = vmatprep.subr.mxu0 0.0
        %3339 = vmatpush2.msra.mxu0 0.0
        %3340 = vmatprep.subr.mxu0 0.0
        %3341 = vmatpush2.msra.mxu0 0.0
        %3342 = vmatprep.subr.mxu0 0.0
        %3343 = vmatpush2.msra.mxu0 0.0
        %3344 = vmatprep.subr.mxu0 0.0
        %3345 = vmatpush2.msra.mxu0 0.0
        %3346 = vmatprep.subr.mxu0 0.0
        %3347 = vmatpush2.msra.mxu0 0.0
        %3348 = vmatprep.subr.mxu0 0.0
        %3349 = vmatpush2.msra.mxu0 0.0
        %3350 = vmatprep.subr.mxu0 0.0
        %3351 = vmatpush2.msra.mxu0 0.0
        %3352 = vmatprep.subr.mxu0 0.0
        %3353 = vmatpush2.msra.mxu0 0.0
        %3354 = vmatprep.subr.mxu0 0.0
        %3355 = vmatpush2.msra.mxu0 0.0
        %3356 = vmatprep.subr.mxu0 0.0
        %3357 = vmatpush2.msra.mxu0 0.0
        %3358 = vmatprep.subr.mxu0 0.0
        %3359 = vmatpush2.msra.mxu0 0.0
        %3360 = vmatprep.subr.mxu0 0.0
        %3361 = vmatpush2.msra.mxu0 0.0
        %3362 = vmatprep.subr.mxu0 0.0
        %3363 = vmatpush2.msra.mxu0 0.0
        %3364 = vmatprep.subr.mxu0 0.0
        %3365 = vmatpush2.msra.mxu0 0.0
        %3366 = vmatprep.subr.mxu0 0.0
        %3367 = vmatpush2.msra.mxu0 0.0
        %3368 = vmatprep.subr.mxu0 0.0
        %3369 = vmatpush2.msra.mxu0 0.0
        %3370 = vmatprep.mubr.f32.mxu0 0.0
        %3371 = vmatmul.mubr.f32.gmra.mxu0 %v2814
        %v3372 = vpop.f32.mrf.mxu0
        %v3373 = vadd.f32 %v2784, %v3372
        %v3374 = vpop.f32.mrf.mxu0
        %3375 = vdwg.mxu0
        %3376 = vmatprep.subr.mxu0 0.0
        %3377 = vmatpush1.msra.mxu0 0.0
        %3378 = vmatprep.subr.mxu0 0.0
        %3379 = vmatpush1.msra.mxu0 0.0
        %3380 = vmatprep.subr.mxu0 0.0
        %3381 = vmatpush1.msra.mxu0 0.0
        %3382 = vmatprep.subr.mxu0 0.0
        %3383 = vmatpush1.msra.mxu0 0.0
        %3384 = vmatprep.subr.mxu0 0.0
        %3385 = vmatpush1.msra.mxu0 0.0
        %3386 = vmatprep.subr.mxu0 0.0
        %3387 = vmatpush1.msra.mxu0 0.0
        %3388 = vmatprep.subr.mxu0 0.0
        %3389 = vmatpush1.msra.mxu0 0.0
        %3390 = vmatprep.subr.mxu0 0.0
        %3391 = vmatpush1.msra.mxu0 0.0
        %3392 = vmatprep.subr.mxu0 0.0
        %3393 = vmatpush1.msra.mxu0 0.0
        %3394 = vmatprep.subr.mxu0 0.0
        %3395 = vmatpush1.msra.mxu0 0.0
        %3396 = vmatprep.subr.mxu0 0.0
        %3397 = vmatpush1.msra.mxu0 0.0
        %3398 = vmatprep.subr.mxu0 0.0
        %3399 = vmatpush1.msra.mxu0 0.0
        %3400 = vmatprep.subr.mxu0 0.0
        %3401 = vmatpush1.msra.mxu0 %v2715
        %3402 = vmatprep.subr.mxu0 0.0
        %3403 = vmatpush1.msra.mxu0 %v2714
        %3404 = vmatprep.subr.mxu0 0.0
        %3405 = vmatpush1.msra.mxu0 %v2713
        %3406 = vmatprep.subr.mxu0 0.0
        %3407 = vmatpush1.msra.mxu0 %v2712
        %3408 = vmatprep.subr.mxu0 0.0
        %3409 = vmatpush2.msra.mxu0 0.0
        %3410 = vmatprep.subr.mxu0 0.0
        %3411 = vmatpush2.msra.mxu0 0.0
        %3412 = vmatprep.subr.mxu0 0.0
        %3413 = vmatpush2.msra.mxu0 0.0
        %3414 = vmatprep.subr.mxu0 0.0
        %3415 = vmatpush2.msra.mxu0 0.0
        %3416 = vmatprep.subr.mxu0 0.0
        %3417 = vmatpush2.msra.mxu0 0.0
        %3418 = vmatprep.subr.mxu0 0.0
        %3419 = vmatpush2.msra.mxu0 0.0
        %3420 = vmatprep.subr.mxu0 0.0
        %3421 = vmatpush2.msra.mxu0 0.0
        %3422 = vmatprep.subr.mxu0 0.0
        %3423 = vmatpush2.msra.mxu0 0.0
        %3424 = vmatprep.subr.mxu0 0.0
        %3425 = vmatpush2.msra.mxu0 0.0
        %3426 = vmatprep.subr.mxu0 0.0
        %3427 = vmatpush2.msra.mxu0 0.0
        %3428 = vmatprep.subr.mxu0 0.0
        %3429 = vmatpush2.msra.mxu0 0.0
        %3430 = vmatprep.subr.mxu0 0.0
        %3431 = vmatpush2.msra.mxu0 0.0
        %3432 = vmatprep.subr.mxu0 0.0
        %3433 = vmatpush2.msra.mxu0 0.0
        %3434 = vmatprep.subr.mxu0 0.0
        %3435 = vmatpush2.msra.mxu0 0.0
        %3436 = vmatprep.subr.mxu0 0.0
        %3437 = vmatpush2.msra.mxu0 0.0
        %3438 = vmatprep.subr.mxu0 0.0
        %3439 = vmatpush2.msra.mxu0 0.0
        %3440 = vmatprep.mubr.f32.mxu0 0.0
        %3441 = vmatmul.mubr.f32.gmra.mxu0 %v2814
        %v3442 = vpop.f32.mrf.mxu0
        %v3443 = vadd.f32 %v2788, %v3442
        %v3444 = vpop.f32.mrf.mxu0
        %3445 = vdwg.mxu0
        %3446 = vmatprep.subr.mxu0 0.0
        %3447 = vmatpush1.msra.mxu0 0.0
        %3448 = vmatprep.subr.mxu0 0.0
        %3449 = vmatpush1.msra.mxu0 0.0
        %3450 = vmatprep.subr.mxu0 0.0
        %3451 = vmatpush1.msra.mxu0 0.0
        %3452 = vmatprep.subr.mxu0 0.0
        %3453 = vmatpush1.msra.mxu0 0.0
        %3454 = vmatprep.subr.mxu0 0.0
        %3455 = vmatpush1.msra.mxu0 0.0
        %3456 = vmatprep.subr.mxu0 0.0
        %3457 = vmatpush1.msra.mxu0 0.0
        %3458 = vmatprep.subr.mxu0 0.0
        %3459 = vmatpush1.msra.mxu0 0.0
        %3460 = vmatprep.subr.mxu0 0.0
        %3461 = vmatpush1.msra.mxu0 0.0
        %3462 = vmatprep.subr.mxu0 0.0
        %3463 = vmatpush1.msra.mxu0 0.0
        %3464 = vmatprep.subr.mxu0 0.0
        %3465 = vmatpush1.msra.mxu0 0.0
        %3466 = vmatprep.subr.mxu0 0.0
        %3467 = vmatpush1.msra.mxu0 0.0
        %3468 = vmatprep.subr.mxu0 0.0
        %3469 = vmatpush1.msra.mxu0 0.0
        %3470 = vmatprep.subr.mxu0 0.0
        %3471 = vmatpush1.msra.mxu0 %v2719
        %3472 = vmatprep.subr.mxu0 0.0
        %3473 = vmatpush1.msra.mxu0 %v2718
        %3474 = vmatprep.subr.mxu0 0.0
        %3475 = vmatpush1.msra.mxu0 %v2717
        %3476 = vmatprep.subr.mxu0 0.0
        %3477 = vmatpush1.msra.mxu0 %v2716
        %3478 = vmatprep.subr.mxu0 0.0
        %3479 = vmatpush2.msra.mxu0 0.0
        %3480 = vmatprep.subr.mxu0 0.0
        %3481 = vmatpush2.msra.mxu0 0.0
        %3482 = vmatprep.subr.mxu0 0.0
        %3483 = vmatpush2.msra.mxu0 0.0
        %3484 = vmatprep.subr.mxu0 0.0
        %3485 = vmatpush2.msra.mxu0 0.0
        %3486 = vmatprep.subr.mxu0 0.0
        %3487 = vmatpush2.msra.mxu0 0.0
        %3488 = vmatprep.subr.mxu0 0.0
        %3489 = vmatpush2.msra.mxu0 0.0
        %3490 = vmatprep.subr.mxu0 0.0
        %3491 = vmatpush2.msra.mxu0 0.0
        %3492 = vmatprep.subr.mxu0 0.0
        %3493 = vmatpush2.msra.mxu0 0.0
        %3494 = vmatprep.subr.mxu0 0.0
        %3495 = vmatpush2.msra.mxu0 0.0
        %3496 = vmatprep.subr.mxu0 0.0
        %3497 = vmatpush2.msra.mxu0 0.0
        %3498 = vmatprep.subr.mxu0 0.0
        %3499 = vmatpush2.msra.mxu0 0.0
        %3500 = vmatprep.subr.mxu0 0.0
        %3501 = vmatpush2.msra.mxu0 0.0
        %3502 = vmatprep.subr.mxu0 0.0
        %3503 = vmatpush2.msra.mxu0 0.0
        %3504 = vmatprep.subr.mxu0 0.0
        %3505 = vmatpush2.msra.mxu0 0.0
        %3506 = vmatprep.subr.mxu0 0.0
        %3507 = vmatpush2.msra.mxu0 0.0
        %3508 = vmatprep.subr.mxu0 0.0
        %3509 = vmatpush2.msra.mxu0 0.0
        %3510 = vmatprep.mubr.f32.mxu0 0.0
        %3511 = vmatmul.mubr.f32.gmra.mxu0 %v2814
        %v3512 = vpop.f32.mrf.mxu0
        %v3513 = vadd.f32 %v2792, %v3512
        %v3514 = vpop.f32.mrf.mxu0
        %3515 = vdwg.mxu0
        %3516 = vmatprep.subr.mxu0 0.0
        %3517 = vmatpush1.msra.mxu0 0.0
        %3518 = vmatprep.subr.mxu0 0.0
        %3519 = vmatpush1.msra.mxu0 0.0
        %3520 = vmatprep.subr.mxu0 0.0
        %3521 = vmatpush1.msra.mxu0 0.0
        %3522 = vmatprep.subr.mxu0 0.0
        %3523 = vmatpush1.msra.mxu0 0.0
        %3524 = vmatprep.subr.mxu0 0.0
        %3525 = vmatpush1.msra.mxu0 0.0
        %3526 = vmatprep.subr.mxu0 0.0
        %3527 = vmatpush1.msra.mxu0 0.0
        %3528 = vmatprep.subr.mxu0 0.0
        %3529 = vmatpush1.msra.mxu0 0.0
        %3530 = vmatprep.subr.mxu0 0.0
        %3531 = vmatpush1.msra.mxu0 0.0
        %3532 = vmatprep.subr.mxu0 0.0
        %3533 = vmatpush1.msra.mxu0 0.0
        %3534 = vmatprep.subr.mxu0 0.0
        %3535 = vmatpush1.msra.mxu0 0.0
        %3536 = vmatprep.subr.mxu0 0.0
        %3537 = vmatpush1.msra.mxu0 0.0
        %3538 = vmatprep.subr.mxu0 0.0
        %3539 = vmatpush1.msra.mxu0 0.0
        %3540 = vmatprep.subr.mxu0 0.0
        %3541 = vmatpush1.msra.mxu0 %v2723
        %3542 = vmatprep.subr.mxu0 0.0
        %3543 = vmatpush1.msra.mxu0 %v2722
        %3544 = vmatprep.subr.mxu0 0.0
        %3545 = vmatpush1.msra.mxu0 %v2721
        %3546 = vmatprep.subr.mxu0 0.0
        %3547 = vmatpush1.msra.mxu0 %v2720
        %3548 = vmatprep.subr.mxu0 0.0
        %3549 = vmatpush2.msra.mxu0 0.0
        %3550 = vmatprep.subr.mxu0 0.0
        %3551 = vmatpush2.msra.mxu0 0.0
        %3552 = vmatprep.subr.mxu0 0.0
        %3553 = vmatpush2.msra.mxu0 0.0
        %3554 = vmatprep.subr.mxu0 0.0
        %3555 = vmatpush2.msra.mxu0 0.0
        %3556 = vmatprep.subr.mxu0 0.0
        %3557 = vmatpush2.msra.mxu0 0.0
        %3558 = vmatprep.subr.mxu0 0.0
        %3559 = vmatpush2.msra.mxu0 0.0
        %3560 = vmatprep.subr.mxu0 0.0
        %3561 = vmatpush2.msra.mxu0 0.0
        %3562 = vmatprep.subr.mxu0 0.0
        %3563 = vmatpush2.msra.mxu0 0.0
        %3564 = vmatprep.subr.mxu0 0.0
        %3565 = vmatpush2.msra.mxu0 0.0
        %3566 = vmatprep.subr.mxu0 0.0
        %3567 = vmatpush2.msra.mxu0 0.0
        %3568 = vmatprep.subr.mxu0 0.0
        %3569 = vmatpush2.msra.mxu0 0.0
        %3570 = vmatprep.subr.mxu0 0.0
        %3571 = vmatpush2.msra.mxu0 0.0
        %3572 = vmatprep.subr.mxu0 0.0
        %3573 = vmatpush2.msra.mxu0 0.0
        %3574 = vmatprep.subr.mxu0 0.0
        %3575 = vmatpush2.msra.mxu0 0.0
        %3576 = vmatprep.subr.mxu0 0.0
        %3577 = vmatpush2.msra.mxu0 0.0
        %3578 = vmatprep.subr.mxu0 0.0
        %3579 = vmatpush2.msra.mxu0 0.0
        %3580 = vmatprep.mubr.f32.mxu0 0.0
        %3581 = vmatmul.mubr.f32.gmra.mxu0 %v2814
        %v3582 = vpop.f32.mrf.mxu0
        %v3583 = vadd.f32 %v2796, %v3582
        %v3584 = vpop.f32.mrf.mxu0
        %3585 = vdwg.mxu0
        %3586 = vmatprep.subr.mxu0 0.0
        %3587 = vmatpush1.msra.mxu0 0.0
        %3588 = vmatprep.subr.mxu0 0.0
        %3589 = vmatpush1.msra.mxu0 0.0
        %3590 = vmatprep.subr.mxu0 0.0
        %3591 = vmatpush1.msra.mxu0 0.0
        %3592 = vmatprep.subr.mxu0 0.0
        %3593 = vmatpush1.msra.mxu0 0.0
        %3594 = vmatprep.subr.mxu0 0.0
        %3595 = vmatpush1.msra.mxu0 0.0
        %3596 = vmatprep.subr.mxu0 0.0
        %3597 = vmatpush1.msra.mxu0 0.0
        %3598 = vmatprep.subr.mxu0 0.0
        %3599 = vmatpush1.msra.mxu0 0.0
        %3600 = vmatprep.subr.mxu0 0.0
        %3601 = vmatpush1.msra.mxu0 0.0
        %3602 = vmatprep.subr.mxu0 0.0
        %3603 = vmatpush1.msra.mxu0 0.0
        %3604 = vmatprep.subr.mxu0 0.0
        %3605 = vmatpush1.msra.mxu0 0.0
        %3606 = vmatprep.subr.mxu0 0.0
        %3607 = vmatpush1.msra.mxu0 0.0
        %3608 = vmatprep.subr.mxu0 0.0
        %3609 = vmatpush1.msra.mxu0 0.0
        %3610 = vmatprep.subr.mxu0 0.0
        %3611 = vmatpush1.msra.mxu0 %v2727
        %3612 = vmatprep.subr.mxu0 0.0
        %3613 = vmatpush1.msra.mxu0 %v2726
        %3614 = vmatprep.subr.mxu0 0.0
        %3615 = vmatpush1.msra.mxu0 %v2725
        %3616 = vmatprep.subr.mxu0 0.0
        %3617 = vmatpush1.msra.mxu0 %v2724
        %3618 = vmatprep.subr.mxu0 0.0
        %3619 = vmatpush2.msra.mxu0 0.0
        %3620 = vmatprep.subr.mxu0 0.0
        %3621 = vmatpush2.msra.mxu0 0.0
        %3622 = vmatprep.subr.mxu0 0.0
        %3623 = vmatpush2.msra.mxu0 0.0
        %3624 = vmatprep.subr.mxu0 0.0
        %3625 = vmatpush2.msra.mxu0 0.0
        %3626 = vmatprep.subr.mxu0 0.0
        %3627 = vmatpush2.msra.mxu0 0.0
        %3628 = vmatprep.subr.mxu0 0.0
        %3629 = vmatpush2.msra.mxu0 0.0
        %3630 = vmatprep.subr.mxu0 0.0
        %3631 = vmatpush2.msra.mxu0 0.0
        %3632 = vmatprep.subr.mxu0 0.0
        %3633 = vmatpush2.msra.mxu0 0.0
        %3634 = vmatprep.subr.mxu0 0.0
        %3635 = vmatpush2.msra.mxu0 0.0
        %3636 = vmatprep.subr.mxu0 0.0
        %3637 = vmatpush2.msra.mxu0 0.0
        %3638 = vmatprep.subr.mxu0 0.0
        %3639 = vmatpush2.msra.mxu0 0.0
        %3640 = vmatprep.subr.mxu0 0.0
        %3641 = vmatpush2.msra.mxu0 0.0
        %3642 = vmatprep.subr.mxu0 0.0
        %3643 = vmatpush2.msra.mxu0 0.0
        %3644 = vmatprep.subr.mxu0 0.0
        %3645 = vmatpush2.msra.mxu0 0.0
        %3646 = vmatprep.subr.mxu0 0.0
        %3647 = vmatpush2.msra.mxu0 0.0
        %3648 = vmatprep.subr.mxu0 0.0
        %3649 = vmatpush2.msra.mxu0 0.0
        %3650 = vmatprep.mubr.f32.mxu0 0.0
        %3651 = vmatmul.mubr.f32.gmra.mxu0 %v2814
        %v3652 = vpop.f32.mrf.mxu0
        %v3653 = vadd.f32 %v2800, %v3652
        %v3654 = vpop.f32.mrf.mxu0
        %3655 = vdwg.mxu0
        %v3657 = vsel %vm1501, %v2883, 0
        %v3660 = vsel %vm1501, %v3163, 0
        %3662 = vmatprep.subr.mxu0 0.0
        %3663 = vmatpush1.xpose.msra.mxu0 0.0
        %3664 = vmatprep.subr.mxu0 0.0
        %3665 = vmatpush1.xpose.msra.mxu0 0.0
        %3666 = vmatprep.subr.mxu0 0.0
        %3667 = vmatpush1.xpose.msra.mxu0 0.0
        %3668 = vmatprep.subr.mxu0 0.0
        %3669 = vmatpush1.xpose.msra.mxu0 0.0
        %3670 = vmatprep.subr.mxu0 0.0
        %3671 = vmatpush1.xpose.msra.mxu0 0.0
        %3672 = vmatprep.subr.mxu0 0.0
        %3673 = vmatpush1.xpose.msra.mxu0 0.0
        %3674 = vmatprep.subr.mxu0 0.0
        %3675 = vmatpush1.xpose.msra.mxu0 0.0
        %3676 = vmatprep.subr.mxu0 0.0
        %3677 = vmatpush1.xpose.msra.mxu0 0.0
        %3678 = vmatprep.subr.mxu0 0.0
        %3679 = vmatpush1.xpose.msra.mxu0 0.0
        %3680 = vmatprep.subr.mxu0 0.0
        %3681 = vmatpush1.xpose.msra.mxu0 0.0
        %3682 = vmatprep.subr.mxu0 0.0
        %3683 = vmatpush1.xpose.msra.mxu0 0.0
        %3684 = vmatprep.subr.mxu0 0.0
        %3685 = vmatpush1.xpose.msra.mxu0 0.0
        %3686 = vmatprep.subr.mxu0 0.0
        %3687 = vmatpush1.xpose.msra.mxu0 0.0
        %3688 = vmatprep.subr.mxu0 0.0
        %3689 = vmatpush1.xpose.msra.mxu0 0.0
        %3690 = vmatprep.subr.mxu0 0.0
        %3691 = vmatpush1.xpose.msra.mxu0 0.0
        %3692 = vmatprep.subr.mxu0 0.0
        %3693 = vmatpush1.xpose.msra.mxu0 %v3660
        %3694 = vmatprep.subr.mxu0 0.0
        %3695 = vmatpush2.xpose.msra.mxu0 0.0
        %3696 = vmatprep.subr.mxu0 0.0
        %3697 = vmatpush2.xpose.msra.mxu0 0.0
        %3698 = vmatprep.subr.mxu0 0.0
        %3699 = vmatpush2.xpose.msra.mxu0 0.0
        %3700 = vmatprep.subr.mxu0 0.0
        %3701 = vmatpush2.xpose.msra.mxu0 0.0
        %3702 = vmatprep.subr.mxu0 0.0
        %3703 = vmatpush2.xpose.msra.mxu0 0.0
        %3704 = vmatprep.subr.mxu0 0.0
        %3705 = vmatpush2.xpose.msra.mxu0 0.0
        %3706 = vmatprep.subr.mxu0 0.0
        %3707 = vmatpush2.xpose.msra.mxu0 0.0
        %3708 = vmatprep.subr.mxu0 0.0
        %3709 = vmatpush2.xpose.msra.mxu0 0.0
        %3710 = vmatprep.subr.mxu0 0.0
        %3711 = vmatpush2.xpose.msra.mxu0 0.0
        %3712 = vmatprep.subr.mxu0 0.0
        %3713 = vmatpush2.xpose.msra.mxu0 0.0
        %3714 = vmatprep.subr.mxu0 0.0
        %3715 = vmatpush2.xpose.msra.mxu0 0.0
        %3716 = vmatprep.subr.mxu0 0.0
        %3717 = vmatpush2.xpose.msra.mxu0 0.0
        %3718 = vmatprep.subr.mxu0 0.0
        %3719 = vmatpush2.xpose.msra.mxu0 0.0
        %3720 = vmatprep.subr.mxu0 0.0
        %3721 = vmatpush2.xpose.msra.mxu0 0.0
        %3722 = vmatprep.subr.mxu0 0.0
        %3723 = vmatpush2.xpose.msra.mxu0 0.0
        %3724 = vmatprep.subr.mxu0 0.0
        %3725 = vmatpush2.xpose.msra.mxu0 0.0
        %3726 = vmatprep.mubr.f32.mxu0 0.0
        %3727 = vmatmul.mubr.f32.gmra.mxu0 %v3657
        %v3728 = vpop.f32.mrf.mxu0
        %v3729 = vadd.f32 %v518, %v3728
        %v3730 = vpop.f32.mrf.mxu0
        %3731 = vdwg.mxu0
        %v3733 = vsel %vm1501, %v2953, 0
        %v3736 = vsel %vm1501, %v3233, 0
        %3738 = vmatprep.subr.mxu0 0.0
        %3739 = vmatpush1.xpose.msra.mxu0 0.0
        %3740 = vmatprep.subr.mxu0 0.0
        %3741 = vmatpush1.xpose.msra.mxu0 0.0
        %3742 = vmatprep.subr.mxu0 0.0
        %3743 = vmatpush1.xpose.msra.mxu0 0.0
        %3744 = vmatprep.subr.mxu0 0.0
        %3745 = vmatpush1.xpose.msra.mxu0 0.0
        %3746 = vmatprep.subr.mxu0 0.0
        %3747 = vmatpush1.xpose.msra.mxu0 0.0
        %3748 = vmatprep.subr.mxu0 0.0
        %3749 = vmatpush1.xpose.msra.mxu0 0.0
        %3750 = vmatprep.subr.mxu0 0.0
        %3751 = vmatpush1.xpose.msra.mxu0 0.0
        %3752 = vmatprep.subr.mxu0 0.0
        %3753 = vmatpush1.xpose.msra.mxu0 0.0
        %3754 = vmatprep.subr.mxu0 0.0
        %3755 = vmatpush1.xpose.msra.mxu0 0.0
        %3756 = vmatprep.subr.mxu0 0.0
        %3757 = vmatpush1.xpose.msra.mxu0 0.0
        %3758 = vmatprep.subr.mxu0 0.0
        %3759 = vmatpush1.xpose.msra.mxu0 0.0
        %3760 = vmatprep.subr.mxu0 0.0
        %3761 = vmatpush1.xpose.msra.mxu0 0.0
        %3762 = vmatprep.subr.mxu0 0.0
        %3763 = vmatpush1.xpose.msra.mxu0 0.0
        %3764 = vmatprep.subr.mxu0 0.0
        %3765 = vmatpush1.xpose.msra.mxu0 0.0
        %3766 = vmatprep.subr.mxu0 0.0
        %3767 = vmatpush1.xpose.msra.mxu0 0.0
        %3768 = vmatprep.subr.mxu0 0.0
        %3769 = vmatpush1.xpose.msra.mxu0 %v3736
        %3770 = vmatprep.subr.mxu0 0.0
        %3771 = vmatpush2.xpose.msra.mxu0 0.0
        %3772 = vmatprep.subr.mxu0 0.0
        %3773 = vmatpush2.xpose.msra.mxu0 0.0
        %3774 = vmatprep.subr.mxu0 0.0
        %3775 = vmatpush2.xpose.msra.mxu0 0.0
        %3776 = vmatprep.subr.mxu0 0.0
        %3777 = vmatpush2.xpose.msra.mxu0 0.0
        %3778 = vmatprep.subr.mxu0 0.0
        %3779 = vmatpush2.xpose.msra.mxu0 0.0
        %3780 = vmatprep.subr.mxu0 0.0
        %3781 = vmatpush2.xpose.msra.mxu0 0.0
        %3782 = vmatprep.subr.mxu0 0.0
        %3783 = vmatpush2.xpose.msra.mxu0 0.0
        %3784 = vmatprep.subr.mxu0 0.0
        %3785 = vmatpush2.xpose.msra.mxu0 0.0
        %3786 = vmatprep.subr.mxu0 0.0
        %3787 = vmatpush2.xpose.msra.mxu0 0.0
        %3788 = vmatprep.subr.mxu0 0.0
        %3789 = vmatpush2.xpose.msra.mxu0 0.0
        %3790 = vmatprep.subr.mxu0 0.0
        %3791 = vmatpush2.xpose.msra.mxu0 0.0
        %3792 = vmatprep.subr.mxu0 0.0
        %3793 = vmatpush2.xpose.msra.mxu0 0.0
        %3794 = vmatprep.subr.mxu0 0.0
        %3795 = vmatpush2.xpose.msra.mxu0 0.0
        %3796 = vmatprep.subr.mxu0 0.0
        %3797 = vmatpush2.xpose.msra.mxu0 0.0
        %3798 = vmatprep.subr.mxu0 0.0
        %3799 = vmatpush2.xpose.msra.mxu0 0.0
        %3800 = vmatprep.subr.mxu0 0.0
        %3801 = vmatpush2.xpose.msra.mxu0 0.0
        %3802 = vmatprep.mubr.f32.mxu0 0.0
        %3803 = vmatmul.mubr.f32.gmra.mxu0 %v3733
        %v3804 = vpop.f32.mrf.mxu0
        %v3805 = vadd.f32 %v518, %v3804
        %v3806 = vpop.f32.mrf.mxu0
        %3807 = vdwg.mxu0
        %v3809 = vsel %vm1501, %v3023, 0
        %v3812 = vsel %vm1501, %v3303, 0
        %3814 = vmatprep.subr.mxu0 0.0
        %3815 = vmatpush1.xpose.msra.mxu0 0.0
        %3816 = vmatprep.subr.mxu0 0.0
        %3817 = vmatpush1.xpose.msra.mxu0 0.0
        %3818 = vmatprep.subr.mxu0 0.0
        %3819 = vmatpush1.xpose.msra.mxu0 0.0
        %3820 = vmatprep.subr.mxu0 0.0
        %3821 = vmatpush1.xpose.msra.mxu0 0.0
        %3822 = vmatprep.subr.mxu0 0.0
        %3823 = vmatpush1.xpose.msra.mxu0 0.0
        %3824 = vmatprep.subr.mxu0 0.0
        %3825 = vmatpush1.xpose.msra.mxu0 0.0
        %3826 = vmatprep.subr.mxu0 0.0
        %3827 = vmatpush1.xpose.msra.mxu0 0.0
        %3828 = vmatprep.subr.mxu0 0.0
        %3829 = vmatpush1.xpose.msra.mxu0 0.0
        %3830 = vmatprep.subr.mxu0 0.0
        %3831 = vmatpush1.xpose.msra.mxu0 0.0
        %3832 = vmatprep.subr.mxu0 0.0
        %3833 = vmatpush1.xpose.msra.mxu0 0.0
        %3834 = vmatprep.subr.mxu0 0.0
        %3835 = vmatpush1.xpose.msra.mxu0 0.0
        %3836 = vmatprep.subr.mxu0 0.0
        %3837 = vmatpush1.xpose.msra.mxu0 0.0
        %3838 = vmatprep.subr.mxu0 0.0
        %3839 = vmatpush1.xpose.msra.mxu0 0.0
        %3840 = vmatprep.subr.mxu0 0.0
        %3841 = vmatpush1.xpose.msra.mxu0 0.0
        %3842 = vmatprep.subr.mxu0 0.0
        %3843 = vmatpush1.xpose.msra.mxu0 0.0
        %3844 = vmatprep.subr.mxu0 0.0
        %3845 = vmatpush1.xpose.msra.mxu0 %v3812
        %3846 = vmatprep.subr.mxu0 0.0
        %3847 = vmatpush2.xpose.msra.mxu0 0.0
        %3848 = vmatprep.subr.mxu0 0.0
        %3849 = vmatpush2.xpose.msra.mxu0 0.0
        %3850 = vmatprep.subr.mxu0 0.0
        %3851 = vmatpush2.xpose.msra.mxu0 0.0
        %3852 = vmatprep.subr.mxu0 0.0
        %3853 = vmatpush2.xpose.msra.mxu0 0.0
        %3854 = vmatprep.subr.mxu0 0.0
        %3855 = vmatpush2.xpose.msra.mxu0 0.0
        %3856 = vmatprep.subr.mxu0 0.0
        %3857 = vmatpush2.xpose.msra.mxu0 0.0
        %3858 = vmatprep.subr.mxu0 0.0
        %3859 = vmatpush2.xpose.msra.mxu0 0.0
        %3860 = vmatprep.subr.mxu0 0.0
        %3861 = vmatpush2.xpose.msra.mxu0 0.0
        %3862 = vmatprep.subr.mxu0 0.0
        %3863 = vmatpush2.xpose.msra.mxu0 0.0
        %3864 = vmatprep.subr.mxu0 0.0
        %3865 = vmatpush2.xpose.msra.mxu0 0.0
        %3866 = vmatprep.subr.mxu0 0.0
        %3867 = vmatpush2.xpose.msra.mxu0 0.0
        %3868 = vmatprep.subr.mxu0 0.0
        %3869 = vmatpush2.xpose.msra.mxu0 0.0
        %3870 = vmatprep.subr.mxu0 0.0
        %3871 = vmatpush2.xpose.msra.mxu0 0.0
        %3872 = vmatprep.subr.mxu0 0.0
        %3873 = vmatpush2.xpose.msra.mxu0 0.0
        %3874 = vmatprep.subr.mxu0 0.0
        %3875 = vmatpush2.xpose.msra.mxu0 0.0
        %3876 = vmatprep.subr.mxu0 0.0
        %3877 = vmatpush2.xpose.msra.mxu0 0.0
        %3878 = vmatprep.mubr.f32.mxu0 0.0
        %3879 = vmatmul.mubr.f32.gmra.mxu0 %v3809
        %v3880 = vpop.f32.mrf.mxu0
        %v3881 = vadd.f32 %v518, %v3880
        %v3882 = vpop.f32.mrf.mxu0
        %3883 = vdwg.mxu0
        %v3885 = vsel %vm1501, %v3093, 0
        %v3888 = vsel %vm1501, %v3373, 0
        %3890 = vmatprep.subr.mxu0 0.0
        %3891 = vmatpush1.xpose.msra.mxu0 0.0
        %3892 = vmatprep.subr.mxu0 0.0
        %3893 = vmatpush1.xpose.msra.mxu0 0.0
        %3894 = vmatprep.subr.mxu0 0.0
        %3895 = vmatpush1.xpose.msra.mxu0 0.0
        %3896 = vmatprep.subr.mxu0 0.0
        %3897 = vmatpush1.xpose.msra.mxu0 0.0
        %3898 = vmatprep.subr.mxu0 0.0
        %3899 = vmatpush1.xpose.msra.mxu0 0.0
        %3900 = vmatprep.subr.mxu0 0.0
        %3901 = vmatpush1.xpose.msra.mxu0 0.0
        %3902 = vmatprep.subr.mxu0 0.0
        %3903 = vmatpush1.xpose.msra.mxu0 0.0
        %3904 = vmatprep.subr.mxu0 0.0
        %3905 = vmatpush1.xpose.msra.mxu0 0.0
        %3906 = vmatprep.subr.mxu0 0.0
        %3907 = vmatpush1.xpose.msra.mxu0 0.0
        %3908 = vmatprep.subr.mxu0 0.0
        %3909 = vmatpush1.xpose.msra.mxu0 0.0
        %3910 = vmatprep.subr.mxu0 0.0
        %3911 = vmatpush1.xpose.msra.mxu0 0.0
        %3912 = vmatprep.subr.mxu0 0.0
        %3913 = vmatpush1.xpose.msra.mxu0 0.0
        %3914 = vmatprep.subr.mxu0 0.0
        %3915 = vmatpush1.xpose.msra.mxu0 0.0
        %3916 = vmatprep.subr.mxu0 0.0
        %3917 = vmatpush1.xpose.msra.mxu0 0.0
        %3918 = vmatprep.subr.mxu0 0.0
        %3919 = vmatpush1.xpose.msra.mxu0 0.0
        %3920 = vmatprep.subr.mxu0 0.0
        %3921 = vmatpush1.xpose.msra.mxu0 %v3888
        %3922 = vmatprep.subr.mxu0 0.0
        %3923 = vmatpush2.xpose.msra.mxu0 0.0
        %3924 = vmatprep.subr.mxu0 0.0
        %3925 = vmatpush2.xpose.msra.mxu0 0.0
        %3926 = vmatprep.subr.mxu0 0.0
        %3927 = vmatpush2.xpose.msra.mxu0 0.0
        %3928 = vmatprep.subr.mxu0 0.0
        %3929 = vmatpush2.xpose.msra.mxu0 0.0
        %3930 = vmatprep.subr.mxu0 0.0
        %3931 = vmatpush2.xpose.msra.mxu0 0.0
        %3932 = vmatprep.subr.mxu0 0.0
        %3933 = vmatpush2.xpose.msra.mxu0 0.0
        %3934 = vmatprep.subr.mxu0 0.0
        %3935 = vmatpush2.xpose.msra.mxu0 0.0
        %3936 = vmatprep.subr.mxu0 0.0
        %3937 = vmatpush2.xpose.msra.mxu0 0.0
        %3938 = vmatprep.subr.mxu0 0.0
        %3939 = vmatpush2.xpose.msra.mxu0 0.0
        %3940 = vmatprep.subr.mxu0 0.0
        %3941 = vmatpush2.xpose.msra.mxu0 0.0
        %3942 = vmatprep.subr.mxu0 0.0
        %3943 = vmatpush2.xpose.msra.mxu0 0.0
        %3944 = vmatprep.subr.mxu0 0.0
        %3945 = vmatpush2.xpose.msra.mxu0 0.0
        %3946 = vmatprep.subr.mxu0 0.0
        %3947 = vmatpush2.xpose.msra.mxu0 0.0
        %3948 = vmatprep.subr.mxu0 0.0
        %3949 = vmatpush2.xpose.msra.mxu0 0.0
        %3950 = vmatprep.subr.mxu0 0.0
        %3951 = vmatpush2.xpose.msra.mxu0 0.0
        %3952 = vmatprep.subr.mxu0 0.0
        %3953 = vmatpush2.xpose.msra.mxu0 0.0
        %3954 = vmatprep.mubr.f32.mxu0 0.0
        %3955 = vmatmul.mubr.f32.gmra.mxu0 %v3885
        %v3956 = vpop.f32.mrf.mxu0
        %v3957 = vadd.f32 %v518, %v3956
        %v3958 = vpop.f32.mrf.mxu0
        %3959 = vdwg.mxu0
        %vm3960 = vcmask 57344
        %v3961 = vsel %vm3960, %v3729, -inf
        %3962 = vmax.xlane.f32.xlu0 %v3961
        %v3963 = vpop.xlane.xlu0 %3962
        %v3964 = vsel %vm3960, %v3805, -inf
        %3965 = vmax.xlane.f32.xlu0 %v3964
        %v3966 = vpop.xlane.xlu0 %3965
        %v3967 = vsel %vm3960, %v3881, -inf
        %3968 = vmax.xlane.f32.xlu0 %v3967
        %v3969 = vpop.xlane.xlu0 %3968
        %v3970 = vsel %vm3960, %v3957, -inf
        %3971 = vmax.xlane.f32.xlu0 %v3970
        %v3972 = vpop.xlane.xlu0 %3971
        %v3973 = vsub.f32 %v3729, %v3963
        %v3974 = vsub.f32 %v3805, %v3966
        %v3975 = vsub.f32 %v3881, %v3969
        %v3976 = vsub.f32 %v3957, %v3972
        %v3977 = vmul.f32 %v3973, 1.442695
        %v3978 = vpow.pop %v3977
        %v3979 = vmul.f32 %v3974, 1.442695
        %v3980 = vpow.pop %v3979
        %v3981 = vmul.f32 %v3975, 1.442695
        %v3982 = vpow.pop %v3981
        %v3983 = vmul.f32 %v3976, 1.442695
        %v3984 = vpow.pop %v3983
        %v3985 = vsel %vm3960, %v3978, 0.0
        %3986 = vadd.xlane.f32.xlu0 %v3985
        %v3987 = vpop.xlane.xlu0 %3986
        %v3988 = vsel %vm3960, %v3980, 0.0
        %3989 = vadd.xlane.f32.xlu0 %v3988
        %v3990 = vpop.xlane.xlu0 %3989
        %v3991 = vsel %vm3960, %v3982, 0.0
        %3992 = vadd.xlane.f32.xlu0 %v3991
        %v3993 = vpop.xlane.xlu0 %3992
        %v3994 = vsel %vm3960, %v3984, 0.0
        %3995 = vadd.xlane.f32.xlu0 %v3994
        %v3996 = vpop.xlane.xlu0 %3995
        %v3997 = vrcp.pop %v3987
        %v3998 = vrcp.pop %v3990
        %v3999 = vrcp.pop %v3993
        %v4000 = vrcp.pop %v3996
        %v4001 = vmul.f32 %v3978, %v3997
        %v4002 = vmul.f32 %v3980, %v3998
        %v4003 = vmul.f32 %v3982, %v3999
        %v4004 = vmul.f32 %v3984, %v4000
        %v4006 = vsel %vm1501, %v4001, 0
        %4008 = vmatprep.subr.mxu0 0.0
        %4009 = vmatpush1.msra.mxu0 0.0
        %4010 = vmatprep.subr.mxu0 0.0
        %4011 = vmatpush1.msra.mxu0 0.0
        %4012 = vmatprep.subr.mxu0 0.0
        %4013 = vmatpush1.msra.mxu0 0.0
        %4014 = vmatprep.subr.mxu0 0.0
        %4015 = vmatpush1.msra.mxu0 0.0
        %4016 = vmatprep.subr.mxu0 0.0
        %4017 = vmatpush1.msra.mxu0 0.0
        %4018 = vmatprep.subr.mxu0 0.0
        %4019 = vmatpush1.msra.mxu0 0.0
        %4020 = vmatprep.subr.mxu0 0.0
        %4021 = vmatpush1.msra.mxu0 0.0
        %4022 = vmatprep.subr.mxu0 0.0
        %4023 = vmatpush1.msra.mxu0 0.0
        %4024 = vmatprep.subr.mxu0 0.0
        %4025 = vmatpush1.msra.mxu0 0.0
        %4026 = vmatprep.subr.mxu0 0.0
        %4027 = vmatpush1.msra.mxu0 0.0
        %4028 = vmatprep.subr.mxu0 0.0
        %4029 = vmatpush1.msra.mxu0 0.0
        %4030 = vmatprep.subr.mxu0 0.0
        %4031 = vmatpush1.msra.mxu0 0.0
        %4032 = vmatprep.subr.mxu0 0.0
        %4033 = vmatpush1.msra.mxu0 0.0
        %4034 = vmatprep.subr.mxu0 0.0
        %4035 = vmatpush1.msra.mxu0 0.0
        %4036 = vmatprep.subr.mxu0 0.0
        %4037 = vmatpush1.msra.mxu0 0.0
        %4038 = vmatprep.subr.mxu0 0.0
        %4039 = vmatpush1.msra.mxu0 %v3443
        %4040 = vmatprep.subr.mxu0 0.0
        %4041 = vmatpush2.msra.mxu0 0.0
        %4042 = vmatprep.subr.mxu0 0.0
        %4043 = vmatpush2.msra.mxu0 0.0
        %4044 = vmatprep.subr.mxu0 0.0
        %4045 = vmatpush2.msra.mxu0 0.0
        %4046 = vmatprep.subr.mxu0 0.0
        %4047 = vmatpush2.msra.mxu0 0.0
        %4048 = vmatprep.subr.mxu0 0.0
        %4049 = vmatpush2.msra.mxu0 0.0
        %4050 = vmatprep.subr.mxu0 0.0
        %4051 = vmatpush2.msra.mxu0 0.0
        %4052 = vmatprep.subr.mxu0 0.0
        %4053 = vmatpush2.msra.mxu0 0.0
        %4054 = vmatprep.subr.mxu0 0.0
        %4055 = vmatpush2.msra.mxu0 0.0
        %4056 = vmatprep.subr.mxu0 0.0
        %4057 = vmatpush2.msra.mxu0 0.0
        %4058 = vmatprep.subr.mxu0 0.0
        %4059 = vmatpush2.msra.mxu0 0.0
        %4060 = vmatprep.subr.mxu0 0.0
        %4061 = vmatpush2.msra.mxu0 0.0
        %4062 = vmatprep.subr.mxu0 0.0
        %4063 = vmatpush2.msra.mxu0 0.0
        %4064 = vmatprep.subr.mxu0 0.0
        %4065 = vmatpush2.msra.mxu0 0.0
        %4066 = vmatprep.subr.mxu0 0.0
        %4067 = vmatpush2.msra.mxu0 0.0
        %4068 = vmatprep.subr.mxu0 0.0
        %4069 = vmatpush2.msra.mxu0 0.0
        %4070 = vmatprep.subr.mxu0 0.0
        %4071 = vmatpush2.msra.mxu0 0.0
        %4072 = vmatprep.mubr.f32.mxu0 0.0
        %4073 = vmatmul.mubr.f32.gmra.mxu0 %v4006
        %v4074 = vpop.f32.mrf.mxu0
        %v4075 = vadd.f32 0.0, %v4074
        %v4076 = vpop.f32.mrf.mxu0
        %4077 = vdwg.mxu0
        %v4079 = vsel %vm1501, %v4002, 0
        %4081 = vmatprep.subr.mxu0 0.0
        %4082 = vmatpush1.msra.mxu0 0.0
        %4083 = vmatprep.subr.mxu0 0.0
        %4084 = vmatpush1.msra.mxu0 0.0
        %4085 = vmatprep.subr.mxu0 0.0
        %4086 = vmatpush1.msra.mxu0 0.0
        %4087 = vmatprep.subr.mxu0 0.0
        %4088 = vmatpush1.msra.mxu0 0.0
        %4089 = vmatprep.subr.mxu0 0.0
        %4090 = vmatpush1.msra.mxu0 0.0
        %4091 = vmatprep.subr.mxu0 0.0
        %4092 = vmatpush1.msra.mxu0 0.0
        %4093 = vmatprep.subr.mxu0 0.0
        %4094 = vmatpush1.msra.mxu0 0.0
        %4095 = vmatprep.subr.mxu0 0.0
        %4096 = vmatpush1.msra.mxu0 0.0
        %4097 = vmatprep.subr.mxu0 0.0
        %4098 = vmatpush1.msra.mxu0 0.0
        %4099 = vmatprep.subr.mxu0 0.0
        %4100 = vmatpush1.msra.mxu0 0.0
        %4101 = vmatprep.subr.mxu0 0.0
        %4102 = vmatpush1.msra.mxu0 0.0
        %4103 = vmatprep.subr.mxu0 0.0
        %4104 = vmatpush1.msra.mxu0 0.0
        %4105 = vmatprep.subr.mxu0 0.0
        %4106 = vmatpush1.msra.mxu0 0.0
        %4107 = vmatprep.subr.mxu0 0.0
        %4108 = vmatpush1.msra.mxu0 0.0
        %4109 = vmatprep.subr.mxu0 0.0
        %4110 = vmatpush1.msra.mxu0 0.0
        %4111 = vmatprep.subr.mxu0 0.0
        %4112 = vmatpush1.msra.mxu0 %v3513
        %4113 = vmatprep.subr.mxu0 0.0
        %4114 = vmatpush2.msra.mxu0 0.0
        %4115 = vmatprep.subr.mxu0 0.0
        %4116 = vmatpush2.msra.mxu0 0.0
        %4117 = vmatprep.subr.mxu0 0.0
        %4118 = vmatpush2.msra.mxu0 0.0
        %4119 = vmatprep.subr.mxu0 0.0
        %4120 = vmatpush2.msra.mxu0 0.0
        %4121 = vmatprep.subr.mxu0 0.0
        %4122 = vmatpush2.msra.mxu0 0.0
        %4123 = vmatprep.subr.mxu0 0.0
        %4124 = vmatpush2.msra.mxu0 0.0
        %4125 = vmatprep.subr.mxu0 0.0
        %4126 = vmatpush2.msra.mxu0 0.0
        %4127 = vmatprep.subr.mxu0 0.0
        %4128 = vmatpush2.msra.mxu0 0.0
        %4129 = vmatprep.subr.mxu0 0.0
        %4130 = vmatpush2.msra.mxu0 0.0
        %4131 = vmatprep.subr.mxu0 0.0
        %4132 = vmatpush2.msra.mxu0 0.0
        %4133 = vmatprep.subr.mxu0 0.0
        %4134 = vmatpush2.msra.mxu0 0.0
        %4135 = vmatprep.subr.mxu0 0.0
        %4136 = vmatpush2.msra.mxu0 0.0
        %4137 = vmatprep.subr.mxu0 0.0
        %4138 = vmatpush2.msra.mxu0 0.0
        %4139 = vmatprep.subr.mxu0 0.0
        %4140 = vmatpush2.msra.mxu0 0.0
        %4141 = vmatprep.subr.mxu0 0.0
        %4142 = vmatpush2.msra.mxu0 0.0
        %4143 = vmatprep.subr.mxu0 0.0
        %4144 = vmatpush2.msra.mxu0 0.0
        %4145 = vmatprep.mubr.f32.mxu0 0.0
        %4146 = vmatmul.mubr.f32.gmra.mxu0 %v4079
        %v4147 = vpop.f32.mrf.mxu0
        %v4148 = vadd.f32 0.0, %v4147
        %v4149 = vpop.f32.mrf.mxu0
        %4150 = vdwg.mxu0
        %v4152 = vsel %vm1501, %v4003, 0
        %4154 = vmatprep.subr.mxu0 0.0
        %4155 = vmatpush1.msra.mxu0 0.0
        %4156 = vmatprep.subr.mxu0 0.0
        %4157 = vmatpush1.msra.mxu0 0.0
        %4158 = vmatprep.subr.mxu0 0.0
        %4159 = vmatpush1.msra.mxu0 0.0
        %4160 = vmatprep.subr.mxu0 0.0
        %4161 = vmatpush1.msra.mxu0 0.0
        %4162 = vmatprep.subr.mxu0 0.0
        %4163 = vmatpush1.msra.mxu0 0.0
        %4164 = vmatprep.subr.mxu0 0.0
        %4165 = vmatpush1.msra.mxu0 0.0
        %4166 = vmatprep.subr.mxu0 0.0
        %4167 = vmatpush1.msra.mxu0 0.0
        %4168 = vmatprep.subr.mxu0 0.0
        %4169 = vmatpush1.msra.mxu0 0.0
        %4170 = vmatprep.subr.mxu0 0.0
        %4171 = vmatpush1.msra.mxu0 0.0
        %4172 = vmatprep.subr.mxu0 0.0
        %4173 = vmatpush1.msra.mxu0 0.0
        %4174 = vmatprep.subr.mxu0 0.0
        %4175 = vmatpush1.msra.mxu0 0.0
        %4176 = vmatprep.subr.mxu0 0.0
        %4177 = vmatpush1.msra.mxu0 0.0
        %4178 = vmatprep.subr.mxu0 0.0
        %4179 = vmatpush1.msra.mxu0 0.0
        %4180 = vmatprep.subr.mxu0 0.0
        %4181 = vmatpush1.msra.mxu0 0.0
        %4182 = vmatprep.subr.mxu0 0.0
        %4183 = vmatpush1.msra.mxu0 0.0
        %4184 = vmatprep.subr.mxu0 0.0
        %4185 = vmatpush1.msra.mxu0 %v3583
        %4186 = vmatprep.subr.mxu0 0.0
        %4187 = vmatpush2.msra.mxu0 0.0
        %4188 = vmatprep.subr.mxu0 0.0
        %4189 = vmatpush2.msra.mxu0 0.0
        %4190 = vmatprep.subr.mxu0 0.0
        %4191 = vmatpush2.msra.mxu0 0.0
        %4192 = vmatprep.subr.mxu0 0.0
        %4193 = vmatpush2.msra.mxu0 0.0
        %4194 = vmatprep.subr.mxu0 0.0
        %4195 = vmatpush2.msra.mxu0 0.0
        %4196 = vmatprep.subr.mxu0 0.0
        %4197 = vmatpush2.msra.mxu0 0.0
        %4198 = vmatprep.subr.mxu0 0.0
        %4199 = vmatpush2.msra.mxu0 0.0
        %4200 = vmatprep.subr.mxu0 0.0
        %4201 = vmatpush2.msra.mxu0 0.0
        %4202 = vmatprep.subr.mxu0 0.0
        %4203 = vmatpush2.msra.mxu0 0.0
        %4204 = vmatprep.subr.mxu0 0.0
        %4205 = vmatpush2.msra.mxu0 0.0
        %4206 = vmatprep.subr.mxu0 0.0
        %4207 = vmatpush2.msra.mxu0 0.0
        %4208 = vmatprep.subr.mxu0 0.0
        %4209 = vmatpush2.msra.mxu0 0.0
        %4210 = vmatprep.subr.mxu0 0.0
        %4211 = vmatpush2.msra.mxu0 0.0
        %4212 = vmatprep.subr.mxu0 0.0
        %4213 = vmatpush2.msra.mxu0 0.0
        %4214 = vmatprep.subr.mxu0 0.0
        %4215 = vmatpush2.msra.mxu0 0.0
        %4216 = vmatprep.subr.mxu0 0.0
        %4217 = vmatpush2.msra.mxu0 0.0
        %4218 = vmatprep.mubr.f32.mxu0 0.0
        %4219 = vmatmul.mubr.f32.gmra.mxu0 %v4152
        %v4220 = vpop.f32.mrf.mxu0
        %v4221 = vadd.f32 0.0, %v4220
        %v4222 = vpop.f32.mrf.mxu0
        %4223 = vdwg.mxu0
        %v4225 = vsel %vm1501, %v4004, 0
        %4227 = vmatprep.subr.mxu0 0.0
        %4228 = vmatpush1.msra.mxu0 0.0
        %4229 = vmatprep.subr.mxu0 0.0
        %4230 = vmatpush1.msra.mxu0 0.0
        %4231 = vmatprep.subr.mxu0 0.0
        %4232 = vmatpush1.msra.mxu0 0.0
        %4233 = vmatprep.subr.mxu0 0.0
        %4234 = vmatpush1.msra.mxu0 0.0
        %4235 = vmatprep.subr.mxu0 0.0
        %4236 = vmatpush1.msra.mxu0 0.0
        %4237 = vmatprep.subr.mxu0 0.0
        %4238 = vmatpush1.msra.mxu0 0.0
        %4239 = vmatprep.subr.mxu0 0.0
        %4240 = vmatpush1.msra.mxu0 0.0
        %4241 = vmatprep.subr.mxu0 0.0
        %4242 = vmatpush1.msra.mxu0 0.0
        %4243 = vmatprep.subr.mxu0 0.0
        %4244 = vmatpush1.msra.mxu0 0.0
        %4245 = vmatprep.subr.mxu0 0.0
        %4246 = vmatpush1.msra.mxu0 0.0
        %4247 = vmatprep.subr.mxu0 0.0
        %4248 = vmatpush1.msra.mxu0 0.0
        %4249 = vmatprep.subr.mxu0 0.0
        %4250 = vmatpush1.msra.mxu0 0.0
        %4251 = vmatprep.subr.mxu0 0.0
        %4252 = vmatpush1.msra.mxu0 0.0
        %4253 = vmatprep.subr.mxu0 0.0
        %4254 = vmatpush1.msra.mxu0 0.0
        %4255 = vmatprep.subr.mxu0 0.0
        %4256 = vmatpush1.msra.mxu0 0.0
        %4257 = vmatprep.subr.mxu0 0.0
        %4258 = vmatpush1.msra.mxu0 %v3653
        %4259 = vmatprep.subr.mxu0 0.0
        %4260 = vmatpush2.msra.mxu0 0.0
        %4261 = vmatprep.subr.mxu0 0.0
        %4262 = vmatpush2.msra.mxu0 0.0
        %4263 = vmatprep.subr.mxu0 0.0
        %4264 = vmatpush2.msra.mxu0 0.0
        %4265 = vmatprep.subr.mxu0 0.0
        %4266 = vmatpush2.msra.mxu0 0.0
        %4267 = vmatprep.subr.mxu0 0.0
        %4268 = vmatpush2.msra.mxu0 0.0
        %4269 = vmatprep.subr.mxu0 0.0
        %4270 = vmatpush2.msra.mxu0 0.0
        %4271 = vmatprep.subr.mxu0 0.0
        %4272 = vmatpush2.msra.mxu0 0.0
        %4273 = vmatprep.subr.mxu0 0.0
        %4274 = vmatpush2.msra.mxu0 0.0
        %4275 = vmatprep.subr.mxu0 0.0
        %4276 = vmatpush2.msra.mxu0 0.0
        %4277 = vmatprep.subr.mxu0 0.0
        %4278 = vmatpush2.msra.mxu0 0.0
        %4279 = vmatprep.subr.mxu0 0.0
        %4280 = vmatpush2.msra.mxu0 0.0
        %4281 = vmatprep.subr.mxu0 0.0
        %4282 = vmatpush2.msra.mxu0 0.0
        %4283 = vmatprep.subr.mxu0 0.0
        %4284 = vmatpush2.msra.mxu0 0.0
        %4285 = vmatprep.subr.mxu0 0.0
        %4286 = vmatpush2.msra.mxu0 0.0
        %4287 = vmatprep.subr.mxu0 0.0
        %4288 = vmatpush2.msra.mxu0 0.0
        %4289 = vmatprep.subr.mxu0 0.0
        %4290 = vmatpush2.msra.mxu0 0.0
        %4291 = vmatprep.mubr.f32.mxu0 0.0
        %4292 = vmatmul.mubr.f32.gmra.mxu0 %v4225
        %v4293 = vpop.f32.mrf.mxu0
        %v4294 = vadd.f32 0.0, %v4293
        %v4295 = vpop.f32.mrf.mxu0
        %4296 = vdwg.mxu0
        %s4297 = scalar_lea.vmem %s6, 32
        %v4298 = vld [vmem:[%s4297] sm:$0xff]
        %v4299 = vld [vmem:[%s4297 + $0x8] sm:$0xff]
        %v4300 = vld [vmem:[%s4297 + $0x10] sm:$0xff]
        %v4301 = vld [vmem:[%s4297 + $0x18] sm:$0xff]
        %v4303 = vsel %vm1501, %v4075, 0
        %4305 = vmatprep.subr.mxu0 0.0
        %4306 = vmatpush1.msra.mxu0 0.0
        %4307 = vmatprep.subr.mxu0 0.0
        %4308 = vmatpush1.msra.mxu0 0.0
        %4309 = vmatprep.subr.mxu0 0.0
        %4310 = vmatpush1.msra.mxu0 0.0
        %4311 = vmatprep.subr.mxu0 0.0
        %4312 = vmatpush1.msra.mxu0 0.0
        %4313 = vmatprep.subr.mxu0 0.0
        %4314 = vmatpush1.msra.mxu0 0.0
        %4315 = vmatprep.subr.mxu0 0.0
        %4316 = vmatpush1.msra.mxu0 0.0
        %4317 = vmatprep.subr.mxu0 0.0
        %4318 = vmatpush1.msra.mxu0 0.0
        %4319 = vmatprep.subr.mxu0 0.0
        %4320 = vmatpush1.msra.mxu0 0.0
        %4321 = vmatprep.subr.mxu0 0.0
        %4322 = vmatpush1.msra.mxu0 0.0
        %4323 = vmatprep.subr.mxu0 0.0
        %4324 = vmatpush1.msra.mxu0 0.0
        %4325 = vmatprep.subr.mxu0 0.0
        %4326 = vmatpush1.msra.mxu0 0.0
        %4327 = vmatprep.subr.mxu0 0.0
        %4328 = vmatpush1.msra.mxu0 0.0
        %4329 = vmatprep.subr.mxu0 0.0
        %4330 = vmatpush1.msra.mxu0 0.0
        %4331 = vmatprep.subr.mxu0 0.0
        %4332 = vmatpush1.msra.mxu0 0.0
        %4333 = vmatprep.subr.mxu0 0.0
        %4334 = vmatpush1.msra.mxu0 0.0
        %4335 = vmatprep.subr.mxu0 0.0
        %4336 = vmatpush1.msra.mxu0 %v4298
        %4337 = vmatprep.subr.mxu0 0.0
        %4338 = vmatpush2.msra.mxu0 0.0
        %4339 = vmatprep.subr.mxu0 0.0
        %4340 = vmatpush2.msra.mxu0 0.0
        %4341 = vmatprep.subr.mxu0 0.0
        %4342 = vmatpush2.msra.mxu0 0.0
        %4343 = vmatprep.subr.mxu0 0.0
        %4344 = vmatpush2.msra.mxu0 0.0
        %4345 = vmatprep.subr.mxu0 0.0
        %4346 = vmatpush2.msra.mxu0 0.0
        %4347 = vmatprep.subr.mxu0 0.0
        %4348 = vmatpush2.msra.mxu0 0.0
        %4349 = vmatprep.subr.mxu0 0.0
        %4350 = vmatpush2.msra.mxu0 0.0
        %4351 = vmatprep.subr.mxu0 0.0
        %4352 = vmatpush2.msra.mxu0 0.0
        %4353 = vmatprep.subr.mxu0 0.0
        %4354 = vmatpush2.msra.mxu0 0.0
        %4355 = vmatprep.subr.mxu0 0.0
        %4356 = vmatpush2.msra.mxu0 0.0
        %4357 = vmatprep.subr.mxu0 0.0
        %4358 = vmatpush2.msra.mxu0 0.0
        %4359 = vmatprep.subr.mxu0 0.0
        %4360 = vmatpush2.msra.mxu0 0.0
        %4361 = vmatprep.subr.mxu0 0.0
        %4362 = vmatpush2.msra.mxu0 0.0
        %4363 = vmatprep.subr.mxu0 0.0
        %4364 = vmatpush2.msra.mxu0 0.0
        %4365 = vmatprep.subr.mxu0 0.0
        %4366 = vmatpush2.msra.mxu0 0.0
        %4367 = vmatprep.subr.mxu0 0.0
        %4368 = vmatpush2.msra.mxu0 0.0
        %4369 = vmatprep.mubr.f32.mxu0 0.0
        %4370 = vmatmul.mubr.f32.gmra.mxu0 %v4303
        %v4371 = vpop.f32.mrf.mxu0
        %v4372 = vadd.f32 0.0, %v4371
        %v4373 = vpop.f32.mrf.mxu0
        %4374 = vdwg.mxu0
        %v4376 = vsel %vm1501, %v4148, 0
        %4378 = vmatprep.subr.mxu0 0.0
        %4379 = vmatpush1.msra.mxu0 0.0
        %4380 = vmatprep.subr.mxu0 0.0
        %4381 = vmatpush1.msra.mxu0 0.0
        %4382 = vmatprep.subr.mxu0 0.0
        %4383 = vmatpush1.msra.mxu0 0.0
        %4384 = vmatprep.subr.mxu0 0.0
        %4385 = vmatpush1.msra.mxu0 0.0
        %4386 = vmatprep.subr.mxu0 0.0
        %4387 = vmatpush1.msra.mxu0 0.0
        %4388 = vmatprep.subr.mxu0 0.0
        %4389 = vmatpush1.msra.mxu0 0.0
        %4390 = vmatprep.subr.mxu0 0.0
        %4391 = vmatpush1.msra.mxu0 0.0
        %4392 = vmatprep.subr.mxu0 0.0
        %4393 = vmatpush1.msra.mxu0 0.0
        %4394 = vmatprep.subr.mxu0 0.0
        %4395 = vmatpush1.msra.mxu0 0.0
        %4396 = vmatprep.subr.mxu0 0.0
        %4397 = vmatpush1.msra.mxu0 0.0
        %4398 = vmatprep.subr.mxu0 0.0
        %4399 = vmatpush1.msra.mxu0 0.0
        %4400 = vmatprep.subr.mxu0 0.0
        %4401 = vmatpush1.msra.mxu0 0.0
        %4402 = vmatprep.subr.mxu0 0.0
        %4403 = vmatpush1.msra.mxu0 0.0
        %4404 = vmatprep.subr.mxu0 0.0
        %4405 = vmatpush1.msra.mxu0 0.0
        %4406 = vmatprep.subr.mxu0 0.0
        %4407 = vmatpush1.msra.mxu0 0.0
        %4408 = vmatprep.subr.mxu0 0.0
        %4409 = vmatpush1.msra.mxu0 %v4299
        %4410 = vmatprep.subr.mxu0 0.0
        %4411 = vmatpush2.msra.mxu0 0.0
        %4412 = vmatprep.subr.mxu0 0.0
        %4413 = vmatpush2.msra.mxu0 0.0
        %4414 = vmatprep.subr.mxu0 0.0
        %4415 = vmatpush2.msra.mxu0 0.0
        %4416 = vmatprep.subr.mxu0 0.0
        %4417 = vmatpush2.msra.mxu0 0.0
        %4418 = vmatprep.subr.mxu0 0.0
        %4419 = vmatpush2.msra.mxu0 0.0
        %4420 = vmatprep.subr.mxu0 0.0
        %4421 = vmatpush2.msra.mxu0 0.0
        %4422 = vmatprep.subr.mxu0 0.0
        %4423 = vmatpush2.msra.mxu0 0.0
        %4424 = vmatprep.subr.mxu0 0.0
        %4425 = vmatpush2.msra.mxu0 0.0
        %4426 = vmatprep.subr.mxu0 0.0
        %4427 = vmatpush2.msra.mxu0 0.0
        %4428 = vmatprep.subr.mxu0 0.0
        %4429 = vmatpush2.msra.mxu0 0.0
        %4430 = vmatprep.subr.mxu0 0.0
        %4431 = vmatpush2.msra.mxu0 0.0
        %4432 = vmatprep.subr.mxu0 0.0
        %4433 = vmatpush2.msra.mxu0 0.0
        %4434 = vmatprep.subr.mxu0 0.0
        %4435 = vmatpush2.msra.mxu0 0.0
        %4436 = vmatprep.subr.mxu0 0.0
        %4437 = vmatpush2.msra.mxu0 0.0
        %4438 = vmatprep.subr.mxu0 0.0
        %4439 = vmatpush2.msra.mxu0 0.0
        %4440 = vmatprep.subr.mxu0 0.0
        %4441 = vmatpush2.msra.mxu0 0.0
        %4442 = vmatprep.mubr.f32.mxu0 0.0
        %4443 = vmatmul.mubr.f32.gmra.mxu0 %v4376
        %v4444 = vpop.f32.mrf.mxu0
        %v4445 = vadd.f32 0.0, %v4444
        %v4446 = vpop.f32.mrf.mxu0
        %4447 = vdwg.mxu0
        %v4449 = vsel %vm1501, %v4221, 0
        %4451 = vmatprep.subr.mxu0 0.0
        %4452 = vmatpush1.msra.mxu0 0.0
        %4453 = vmatprep.subr.mxu0 0.0
        %4454 = vmatpush1.msra.mxu0 0.0
        %4455 = vmatprep.subr.mxu0 0.0
        %4456 = vmatpush1.msra.mxu0 0.0
        %4457 = vmatprep.subr.mxu0 0.0
        %4458 = vmatpush1.msra.mxu0 0.0
        %4459 = vmatprep.subr.mxu0 0.0
        %4460 = vmatpush1.msra.mxu0 0.0
        %4461 = vmatprep.subr.mxu0 0.0
        %4462 = vmatpush1.msra.mxu0 0.0
        %4463 = vmatprep.subr.mxu0 0.0
        %4464 = vmatpush1.msra.mxu0 0.0
        %4465 = vmatprep.subr.mxu0 0.0
        %4466 = vmatpush1.msra.mxu0 0.0
        %4467 = vmatprep.subr.mxu0 0.0
        %4468 = vmatpush1.msra.mxu0 0.0
        %4469 = vmatprep.subr.mxu0 0.0
        %4470 = vmatpush1.msra.mxu0 0.0
        %4471 = vmatprep.subr.mxu0 0.0
        %4472 = vmatpush1.msra.mxu0 0.0
        %4473 = vmatprep.subr.mxu0 0.0
        %4474 = vmatpush1.msra.mxu0 0.0
        %4475 = vmatprep.subr.mxu0 0.0
        %4476 = vmatpush1.msra.mxu0 0.0
        %4477 = vmatprep.subr.mxu0 0.0
        %4478 = vmatpush1.msra.mxu0 0.0
        %4479 = vmatprep.subr.mxu0 0.0
        %4480 = vmatpush1.msra.mxu0 0.0
        %4481 = vmatprep.subr.mxu0 0.0
        %4482 = vmatpush1.msra.mxu0 %v4300
        %4483 = vmatprep.subr.mxu0 0.0
        %4484 = vmatpush2.msra.mxu0 0.0
        %4485 = vmatprep.subr.mxu0 0.0
        %4486 = vmatpush2.msra.mxu0 0.0
        %4487 = vmatprep.subr.mxu0 0.0
        %4488 = vmatpush2.msra.mxu0 0.0
        %4489 = vmatprep.subr.mxu0 0.0
        %4490 = vmatpush2.msra.mxu0 0.0
        %4491 = vmatprep.subr.mxu0 0.0
        %4492 = vmatpush2.msra.mxu0 0.0
        %4493 = vmatprep.subr.mxu0 0.0
        %4494 = vmatpush2.msra.mxu0 0.0
        %4495 = vmatprep.subr.mxu0 0.0
        %4496 = vmatpush2.msra.mxu0 0.0
        %4497 = vmatprep.subr.mxu0 0.0
        %4498 = vmatpush2.msra.mxu0 0.0
        %4499 = vmatprep.subr.mxu0 0.0
        %4500 = vmatpush2.msra.mxu0 0.0
        %4501 = vmatprep.subr.mxu0 0.0
        %4502 = vmatpush2.msra.mxu0 0.0
        %4503 = vmatprep.subr.mxu0 0.0
        %4504 = vmatpush2.msra.mxu0 0.0
        %4505 = vmatprep.subr.mxu0 0.0
        %4506 = vmatpush2.msra.mxu0 0.0
        %4507 = vmatprep.subr.mxu0 0.0
        %4508 = vmatpush2.msra.mxu0 0.0
        %4509 = vmatprep.subr.mxu0 0.0
        %4510 = vmatpush2.msra.mxu0 0.0
        %4511 = vmatprep.subr.mxu0 0.0
        %4512 = vmatpush2.msra.mxu0 0.0
        %4513 = vmatprep.subr.mxu0 0.0
        %4514 = vmatpush2.msra.mxu0 0.0
        %4515 = vmatprep.mubr.f32.mxu0 0.0
        %4516 = vmatmul.mubr.f32.gmra.mxu0 %v4449
        %v4517 = vpop.f32.mrf.mxu0
        %v4518 = vadd.f32 0.0, %v4517
        %v4519 = vpop.f32.mrf.mxu0
        %4520 = vdwg.mxu0
        %v4522 = vsel %vm1501, %v4294, 0
        %4524 = vmatprep.subr.mxu0 0.0
        %4525 = vmatpush1.msra.mxu0 0.0
        %4526 = vmatprep.subr.mxu0 0.0
        %4527 = vmatpush1.msra.mxu0 0.0
        %4528 = vmatprep.subr.mxu0 0.0
        %4529 = vmatpush1.msra.mxu0 0.0
        %4530 = vmatprep.subr.mxu0 0.0
        %4531 = vmatpush1.msra.mxu0 0.0
        %4532 = vmatprep.subr.mxu0 0.0
        %4533 = vmatpush1.msra.mxu0 0.0
        %4534 = vmatprep.subr.mxu0 0.0
        %4535 = vmatpush1.msra.mxu0 0.0
        %4536 = vmatprep.subr.mxu0 0.0
        %4537 = vmatpush1.msra.mxu0 0.0
        %4538 = vmatprep.subr.mxu0 0.0
        %4539 = vmatpush1.msra.mxu0 0.0
        %4540 = vmatprep.subr.mxu0 0.0
        %4541 = vmatpush1.msra.mxu0 0.0
        %4542 = vmatprep.subr.mxu0 0.0
        %4543 = vmatpush1.msra.mxu0 0.0
        %4544 = vmatprep.subr.mxu0 0.0
        %4545 = vmatpush1.msra.mxu0 0.0
        %4546 = vmatprep.subr.mxu0 0.0
        %4547 = vmatpush1.msra.mxu0 0.0
        %4548 = vmatprep.subr.mxu0 0.0
        %4549 = vmatpush1.msra.mxu0 0.0
        %4550 = vmatprep.subr.mxu0 0.0
        %4551 = vmatpush1.msra.mxu0 0.0
        %4552 = vmatprep.subr.mxu0 0.0
        %4553 = vmatpush1.msra.mxu0 0.0
        %4554 = vmatprep.subr.mxu0 0.0
        %4555 = vmatpush1.msra.mxu0 %v4301
        %4556 = vmatprep.subr.mxu0 0.0
        %4557 = vmatpush2.msra.mxu0 0.0
        %4558 = vmatprep.subr.mxu0 0.0
        %4559 = vmatpush2.msra.mxu0 0.0
        %4560 = vmatprep.subr.mxu0 0.0
        %4561 = vmatpush2.msra.mxu0 0.0
        %4562 = vmatprep.subr.mxu0 0.0
        %4563 = vmatpush2.msra.mxu0 0.0
        %4564 = vmatprep.subr.mxu0 0.0
        %4565 = vmatpush2.msra.mxu0 0.0
        %4566 = vmatprep.subr.mxu0 0.0
        %4567 = vmatpush2.msra.mxu0 0.0
        %4568 = vmatprep.subr.mxu0 0.0
        %4569 = vmatpush2.msra.mxu0 0.0
        %4570 = vmatprep.subr.mxu0 0.0
        %4571 = vmatpush2.msra.mxu0 0.0
        %4572 = vmatprep.subr.mxu0 0.0
        %4573 = vmatpush2.msra.mxu0 0.0
        %4574 = vmatprep.subr.mxu0 0.0
        %4575 = vmatpush2.msra.mxu0 0.0
        %4576 = vmatprep.subr.mxu0 0.0
        %4577 = vmatpush2.msra.mxu0 0.0
        %4578 = vmatprep.subr.mxu0 0.0
        %4579 = vmatpush2.msra.mxu0 0.0
        %4580 = vmatprep.subr.mxu0 0.0
        %4581 = vmatpush2.msra.mxu0 0.0
        %4582 = vmatprep.subr.mxu0 0.0
        %4583 = vmatpush2.msra.mxu0 0.0
        %4584 = vmatprep.subr.mxu0 0.0
        %4585 = vmatpush2.msra.mxu0 0.0
        %4586 = vmatprep.subr.mxu0 0.0
        %4587 = vmatpush2.msra.mxu0 0.0
        %4588 = vmatprep.mubr.f32.mxu0 0.0
        %4589 = vmatmul.mubr.f32.gmra.mxu0 %v4522
        %v4590 = vpop.f32.mrf.mxu0
        %v4591 = vadd.f32 0.0, %v4590
        %v4592 = vpop.f32.mrf.mxu0
        %4593 = vdwg.mxu0
        %vm4594 = vcmask 253952
        %v4595 = vsel %vm4594, %v4372, 0.0
        %v4596 = vsel %vm4594, %v4445, 0.0
        %v4597 = vadd.f32 %v4595, %v4596
        %v4598 = vsel %vm4594, %v4518, 0.0
        %v4599 = vadd.f32 %v4597, %v4598
        %v4600 = vsel %vm4594, %v4591, 0.0
        %v4601 = vadd.f32 %v4599, %v4600
        %v4602 = vadd.f32 %v4601, %v2678
        %v4603 = vadd.f32 %v2676, %v4602
        %v4604 = vsel %vm4594, %v4603, 0.0
        %4605 = vadd.xlane.f32.xlu0 %v4604
        %v4606 = vpop.xlane.xlu0 %4605
        %v4607 = vmul.f32 %v4606, %v497
        %v4608 = vsub.f32 %v4603, %v4607
        %v4609 = vmul.f32 %v4608, %v4608
        %v4610 = vsel %vm4594, %v4609, 0.0
        %4611 = vadd.xlane.f32.xlu0 %v4610
        %v4612 = vpop.xlane.xlu0 %4611
        %v4613 = vmul.f32 %v4612, %v497
        %v4614 = vadd.f32 %v4613, 1e-12
        %v4615 = vrsqrt.pop %v4614
        %v4616 = vmul.f32 %v4608, %v4615
        %v4618 = vrot.slane %v2678, 1
        %v4620 = vmul.f32 %v4616, %v4618
        %v4621 = vrot.slane %v2678, 2
        %v4623 = vadd.f32 %v4620, %v4621
        %s4624 = scalar_lea.vmem %s7, 32
        %v4625 = vld [vmem:[%s4624] sm:$0xff]
        %v4626 = vld [vmem:[%s4624 + $0x8] sm:$0xff]
        %v4627 = vld [vmem:[%s4624 + $0x10] sm:$0xff]
        %v4628 = vld [vmem:[%s4624 + $0x18] sm:$0xff]
        %s4629 = scalar_lea.vmem %s8, 1
        %v4630 = vld [vmem:[%s4629] sm:$0x1]
        %v4632 = vsel %vm493, %v4623, 0
        %4634 = vmatprep.subr.mxu0 0.0
        %4635 = vmatpush1.msra.mxu0 0.0
        %4636 = vmatprep.subr.mxu0 0.0
        %4637 = vmatpush1.msra.mxu0 0.0
        %4638 = vmatprep.subr.mxu0 0.0
        %4639 = vmatpush1.msra.mxu0 0.0
        %4640 = vmatprep.subr.mxu0 0.0
        %4641 = vmatpush1.msra.mxu0 0.0
        %4642 = vmatprep.subr.mxu0 0.0
        %4643 = vmatpush1.msra.mxu0 0.0
        %4644 = vmatprep.subr.mxu0 0.0
        %4645 = vmatpush1.msra.mxu0 0.0
        %4646 = vmatprep.subr.mxu0 0.0
        %4647 = vmatpush1.msra.mxu0 0.0
        %4648 = vmatprep.subr.mxu0 0.0
        %4649 = vmatpush1.msra.mxu0 0.0
        %4650 = vmatprep.subr.mxu0 0.0
        %4651 = vmatpush1.msra.mxu0 0.0
        %4652 = vmatprep.subr.mxu0 0.0
        %4653 = vmatpush1.msra.mxu0 0.0
        %4654 = vmatprep.subr.mxu0 0.0
        %4655 = vmatpush1.msra.mxu0 0.0
        %4656 = vmatprep.subr.mxu0 0.0
        %4657 = vmatpush1.msra.mxu0 0.0
        %4658 = vmatprep.subr.mxu0 0.0
        %4659 = vmatpush1.msra.mxu0 %v4628
        %4660 = vmatprep.subr.mxu0 0.0
        %4661 = vmatpush1.msra.mxu0 %v4627
        %4662 = vmatprep.subr.mxu0 0.0
        %4663 = vmatpush1.msra.mxu0 %v4626
        %4664 = vmatprep.subr.mxu0 0.0
        %4665 = vmatpush1.msra.mxu0 %v4625
        %4666 = vmatprep.subr.mxu0 0.0
        %4667 = vmatpush2.msra.mxu0 0.0
        %4668 = vmatprep.subr.mxu0 0.0
        %4669 = vmatpush2.msra.mxu0 0.0
        %4670 = vmatprep.subr.mxu0 0.0
        %4671 = vmatpush2.msra.mxu0 0.0
        %4672 = vmatprep.subr.mxu0 0.0
        %4673 = vmatpush2.msra.mxu0 0.0
        %4674 = vmatprep.subr.mxu0 0.0
        %4675 = vmatpush2.msra.mxu0 0.0
        %4676 = vmatprep.subr.mxu0 0.0
        %4677 = vmatpush2.msra.mxu0 0.0
        %4678 = vmatprep.subr.mxu0 0.0
        %4679 = vmatpush2.msra.mxu0 0.0
        %4680 = vmatprep.subr.mxu0 0.0
        %4681 = vmatpush2.msra.mxu0 0.0
        %4682 = vmatprep.subr.mxu0 0.0
        %4683 = vmatpush2.msra.mxu0 0.0
        %4684 = vmatprep.subr.mxu0 0.0
        %4685 = vmatpush2.msra.mxu0 0.0
        %4686 = vmatprep.subr.mxu0 0.0
        %4687 = vmatpush2.msra.mxu0 0.0
        %4688 = vmatprep.subr.mxu0 0.0
        %4689 = vmatpush2.msra.mxu0 0.0
        %4690 = vmatprep.subr.mxu0 0.0
        %4691 = vmatpush2.msra.mxu0 0.0
        %4692 = vmatprep.subr.mxu0 0.0
        %4693 = vmatpush2.msra.mxu0 0.0
        %4694 = vmatprep.subr.mxu0 0.0
        %4695 = vmatpush2.msra.mxu0 0.0
        %4696 = vmatprep.subr.mxu0 0.0
        %4697 = vmatpush2.msra.mxu0 0.0
        %4698 = vmatprep.mubr.f32.mxu0 0.0
        %4699 = vmatmul.mubr.f32.gmra.mxu0 %v4632
        %v4700 = vpop.f32.mrf.mxu0
        %v4701 = vadd.f32 %v4630, %v4700
        %v4702 = vpop.f32.mrf.mxu0
        %4703 = vdwg.mxu0
        %v4704 = vmul.f32 %v4701, %v4701
        %v4705 = vmul.f32 %v4701, %v4704
        %v4706 = vmul.f32 %v4705, 0.044715
        %v4707 = vadd.f32 %v4701, %v4706
        %v4708 = vmul.f32 %v4707, 0.7978846
        %v4709 = vtanh.pop %v4708
        %v4710 = vadd.f32 %v4709, 1.0
        %v4711 = vmul.f32 %v4710, 0.5
        %v4712 = vmul.f32 %v4701, %v4711
        %s4713 = scalar_lea.vmem %s9, 64
        %v4714 = vld [vmem:[%s4713] sm:$0xff]
        %v4715 = vld [vmem:[%s4713 + $0x8] sm:$0xff]
        %v4716 = vld [vmem:[%s4713 + $0x10] sm:$0xff]
        %v4717 = vld [vmem:[%s4713 + $0x18] sm:$0xff]
        %v4718 = vld [vmem:[%s4713 + $0x20] sm:$0xff]
        %v4719 = vld [vmem:[%s4713 + $0x28] sm:$0xff]
        %v4720 = vld [vmem:[%s4713 + $0x30] sm:$0xff]
        %v4721 = vld [vmem:[%s4713 + $0x38] sm:$0xff]
        %v4722 = vrot.slane %v2678, 3
        %v4725 = vsel %vm2579, %v4712, 0
        %4727 = vmatprep.subr.mxu0 0.0
        %4728 = vmatpush1.msra.mxu0 0.0
        %4729 = vmatprep.subr.mxu0 0.0
        %4730 = vmatpush1.msra.mxu0 0.0
        %4731 = vmatprep.subr.mxu0 0.0
        %4732 = vmatpush1.msra.mxu0 0.0
        %4733 = vmatprep.subr.mxu0 0.0
        %4734 = vmatpush1.msra.mxu0 0.0
        %4735 = vmatprep.subr.mxu0 0.0
        %4736 = vmatpush1.msra.mxu0 0.0
        %4737 = vmatprep.subr.mxu0 0.0
        %4738 = vmatpush1.msra.mxu0 0.0
        %4739 = vmatprep.subr.mxu0 0.0
        %4740 = vmatpush1.msra.mxu0 0.0
        %4741 = vmatprep.subr.mxu0 0.0
        %4742 = vmatpush1.msra.mxu0 0.0
        %4743 = vmatprep.subr.mxu0 0.0
        %4744 = vmatpush1.msra.mxu0 %v4721
        %4745 = vmatprep.subr.mxu0 0.0
        %4746 = vmatpush1.msra.mxu0 %v4720
        %4747 = vmatprep.subr.mxu0 0.0
        %4748 = vmatpush1.msra.mxu0 %v4719
        %4749 = vmatprep.subr.mxu0 0.0
        %4750 = vmatpush1.msra.mxu0 %v4718
        %4751 = vmatprep.subr.mxu0 0.0
        %4752 = vmatpush1.msra.mxu0 %v4717
        %4753 = vmatprep.subr.mxu0 0.0
        %4754 = vmatpush1.msra.mxu0 %v4716
        %4755 = vmatprep.subr.mxu0 0.0
        %4756 = vmatpush1.msra.mxu0 %v4715
        %4757 = vmatprep.subr.mxu0 0.0
        %4758 = vmatpush1.msra.mxu0 %v4714
        %4759 = vmatprep.subr.mxu0 0.0
        %4760 = vmatpush2.msra.mxu0 0.0
        %4761 = vmatprep.subr.mxu0 0.0
        %4762 = vmatpush2.msra.mxu0 0.0
        %4763 = vmatprep.subr.mxu0 0.0
        %4764 = vmatpush2.msra.mxu0 0.0
        %4765 = vmatprep.subr.mxu0 0.0
        %4766 = vmatpush2.msra.mxu0 0.0
        %4767 = vmatprep.subr.mxu0 0.0
        %4768 = vmatpush2.msra.mxu0 0.0
        %4769 = vmatprep.subr.mxu0 0.0
        %4770 = vmatpush2.msra.mxu0 0.0
        %4771 = vmatprep.subr.mxu0 0.0
        %4772 = vmatpush2.msra.mxu0 0.0
        %4773 = vmatprep.subr.mxu0 0.0
        %4774 = vmatpush2.msra.mxu0 0.0
        %4775 = vmatprep.subr.mxu0 0.0
        %4776 = vmatpush2.msra.mxu0 0.0
        %4777 = vmatprep.subr.mxu0 0.0
        %4778 = vmatpush2.msra.mxu0 0.0
        %4779 = vmatprep.subr.mxu0 0.0
        %4780 = vmatpush2.msra.mxu0 0.0
        %4781 = vmatprep.subr.mxu0 0.0
        %4782 = vmatpush2.msra.mxu0 0.0
        %4783 = vmatprep.subr.mxu0 0.0
        %4784 = vmatpush2.msra.mxu0 0.0
        %4785 = vmatprep.subr.mxu0 0.0
        %4786 = vmatpush2.msra.mxu0 0.0
        %4787 = vmatprep.subr.mxu0 0.0
        %4788 = vmatpush2.msra.mxu0 0.0
        %4789 = vmatprep.subr.mxu0 0.0
        %4790 = vmatpush2.msra.mxu0 0.0
        %4791 = vmatprep.mubr.f32.mxu0 0.0
        %4792 = vmatmul.mubr.f32.gmra.mxu0 %v4725
        %v4793 = vpop.f32.mrf.mxu0
        %v4794 = vadd.f32 %v4722, %v4793
        %v4795 = vpop.f32.mrf.mxu0
        %4796 = vdwg.mxu0
        %v4797 = vadd.f32 %v4623, %v4794
        %v4798 = vsel %vm4594, %v4797, 0.0
        %4799 = vadd.xlane.f32.xlu0 %v4798
        %v4800 = vpop.xlane.xlu0 %4799
        %v4801 = vmul.f32 %v4800, %v497
        %v4802 = vsub.f32 %v4797, %v4801
        %v4803 = vmul.f32 %v4802, %v4802
        %v4804 = vsel %vm4594, %v4803, 0.0
        %4805 = vadd.xlane.f32.xlu0 %v4804
        %v4806 = vpop.xlane.xlu0 %4805
        %v4807 = vmul.f32 %v4806, %v497
        %v4808 = vadd.f32 %v4807, 1e-12
        %v4809 = vrsqrt.pop %v4808
        %v4810 = vmul.f32 %v4802, %v4809
        %v4811 = vrot.slane %v2678, 4
        %v4813 = vmul.f32 %v4810, %v4811
        %v4814 = vrot.slane %v2678, 5
        %v4816 = vadd.f32 %v4813, %v4814
        %4817 = vst.msk [vmem:[%s387] sm:$0x1] %vm4594, %v4816
        %s4818 = sand.u32 %s274, 1
        %s4819 = scalar_lea.sflag [#allocation3], %s4818
        %s4820 = sand.u32 %s274, 1
        %s4821 = scalar_lea.vmem [#allocation2], %s4820
        // Predicated region
        $region65: #{tpu_custom_call.1} parent=63 // pred_check
          %p4822 = pneg %p284
        $region66: #{tpu_custom_call.1} parent=63 // pred_check_branch
          %4824 = sbr.rel (%p4822) target = $region68
        $region67: #{tpu_custom_call.1} parent=63 // pred_region
          %s4826 = ssub.s32 16, 16
          %4827 = vsyncadd %s4819, %s4826
          %s4828 = smul.addr %s25, 16
          %s4829 = scalar_lea.hbm %s11, %s4828
          %s4831 = sshll.u32 %s4821, 4
          %s4832 = int_to_ptr.vmem [resolvable:$true] %s4831
          %4834 = dma.vmem_to_hbm [thread:$0]  %s4832, 16, %s4829, %s4819
        $region68: #{tpu_custom_call.1} parent=63 // pred_fallthru
          _
      $region64: #{tpu_custom_call.1} parent=5 // pred_fallthru
        _
      %p4835 = scmp.le.s32.totalorder 2, %s20
      // Predicated region
      $region69: #{tpu_custom_call.1} parent=5 // pred_check
        %p4836 = pneg %p4835
      $region70: #{tpu_custom_call.1} parent=5 // pred_check_branch
        %4838 = sbr.rel (%p4836) target = $region72
      $region71: #{tpu_custom_call.1} parent=5 // pred_region
        %s4839 = ssub.s32 %s20, 2
        // Predicated region
        $region73: #{tpu_custom_call.1} parent=71 // pred_check
          %p4840 = pneg %p290
        $region74: #{tpu_custom_call.1} parent=71 // pred_check_branch
          %4842 = sbr.rel (%p4840) target = $region76
        $region75: #{tpu_custom_call.1} parent=71 // pred_region
          %s4843 = sand.u32 %s275, 1
          %s4844 = scalar_lea.sflag [#allocation3], %s4843
          %s4845 = sand.u32 %s275, 1
          %s4846 = scalar_lea.vmem [#allocation2], %s4845
          %4847 = dma.done %s4844, 16
        $region76: #{tpu_custom_call.1} parent=71 // pred_fallthru
          _
      $region72: #{tpu_custom_call.1} parent=5 // pred_fallthru
        _
    $region6: #{tpu_custom_call.1} parent=1 // loop_footer
      %s24 = sadd.s32 1, %s20
    $region7: #{tpu_custom_call.1} parent=1 // loop_footer_branch
      %19 = sbr.rel target = $region3
    $region8: #{tpu_custom_call.1} parent=1 // loop_exit
      _
    %4848 = vsyncpa [#allocation3], 1
    %s4849 = scalar_lea.sflag [#allocation3], 1
    %4850 = vsyncpa %s4849, 1

</llo_original>
